<compile_context>
chip_gen: v5e
topology: v5e:2x2
jax: 0.10.0
libtpu: 0.0.40
codegen_flags: <defaults>
</compile_context>

<pallas_src>
import functools
import math

import jax
import jax.numpy as jnp
from jax import lax
from jax.experimental import pallas as pl
from jax.experimental.pallas import tpu as pltpu


VMEM_LIMIT = 32 * 1024 * 1024  # safe on v5e/v6e (<=128 MiB) and v7x (64 MiB phys)


def _round_up(x, m):
    return ((x + m - 1) // m) * m


def _softplus(x):
    # numerically-stable softplus usable inside Pallas (f32 — v5e has no bf16 EUP)
    return jnp.maximum(x, 0.0) + jnp.log1p(jnp.exp(-jnp.abs(x)))


# --------------------------- Pallas: NT matmul ------------------------------
# out[i, j] = sum_k A[i, k] * B[j, k] + bias[i]   (optional ReLU)
# Output is (I, J) with the large J axis lane-dense and grid-tiled.

def _matmul_nt_kernel(a_ref, b_ref, bias_ref, o_ref, *, relu):
    y = lax.dot_general(
        a_ref[...], b_ref[...],
        dimension_numbers=(((1,), (1,)), ((), ())),
        preferred_element_type=jnp.float32)
    y = y + bias_ref[...]                       # (I, 1) broadcast over lanes
    if relu:
        y = jnp.maximum(y, 0.0)
    o_ref[...] = y.astype(o_ref.dtype)


def matmul_nt_bias(a, b, bias, relu, *, max_tile_j=512):
    """A:(I,K), B:(J,K), bias:(I,) -> (I,J).  bf16 MXU inputs, f32 accumulate."""
    I, K = a.shape
    J, K2 = b.shape
    assert K == K2
    if J <= max_tile_j:
        tj, J_pad = J, J                        # single full block
    else:
        tj = max_tile_j
        J_pad = _round_up(J, tj)
    if J_pad != J:
        b = jnp.pad(b, ((0, J_pad - J), (0, 0)))
    a_bf = a.astype(jnp.bfloat16)
    b_bf = b.astype(jnp.bfloat16)
    bias_col = bias.reshape(I, 1).astype(jnp.float32)

    out = pl.pallas_call(
        functools.partial(_matmul_nt_kernel, relu=relu),
        out_shape=jax.ShapeDtypeStruct((I, J_pad), jnp.float32),
        grid=(J_pad // tj,),
        in_specs=[
            pl.BlockSpec((I, K), lambda j: (0, 0)),
            pl.BlockSpec((tj, K), lambda j: (j, 0)),
            pl.BlockSpec((I, 1), lambda j: (0, 0)),
        ],
        out_specs=pl.BlockSpec((I, tj), lambda j: (0, j)),
        compiler_params=pltpu.CompilerParams(
            dimension_semantics=("parallel",),
            vmem_limit_bytes=VMEM_LIMIT),
    )(a_bf, b_bf, bias_col)
    return out[:, :J] if J_pad != J else out


# --------------------------- Pallas: OT cost matrix -------------------------
# C^T[s, b] = sum_p softplus(L[s, p]) - x[b, p] * L[s, p]

def _cost_kernel(x_ref, l_ref, o_ref, acc_ref, sp_ref):
    k = pl.program_id(1)

    @pl.when(k == 0)
    def _():
        acc_ref[...] = jnp.zeros_like(acc_ref)
        sp_ref[...] = jnp.zeros_like(sp_ref)

    l = l_ref[...]                                         # (S, tk) bf16
    x = x_ref[...]                                         # (tb, tk) bf16
    # MXU: accumulate L . x^T (contract last dims -> no in-kernel transpose)
    acc_ref[...] += lax.dot_general(
        l, x, dimension_numbers=(((1,), (1,)), ((), ())),
        preferred_element_type=jnp.float32)
    # VPU/EUP/XLU: per-sample softplus sum in f32, natural (S, 1) layout.
    # NOTE: recomputed per B-tile so the B axis can stay 'parallel'; hoist to
    # its own pass if the number of B-tiles grows large (EUP-bound risk).
    sp_ref[...] += jnp.sum(_softplus(l.astype(jnp.float32)), axis=1,
                           keepdims=True)

    @pl.when(k == pl.num_programs(1) - 1)
    def _():
        o_ref[...] = sp_ref[...] - acc_ref[...]            # (S,1) bcast lanes


def cost_matrix(x_flat, l_flat, *, max_tile_k=2048, max_tile_b=256):
    """C[b,s] = -sum_p Bernoulli(logits=L[s]).log_prob(x[b]); returns (B, S)."""
    B, P = x_flat.shape
    S, P2 = l_flat.shape
    assert P == P2
    # K tile: single step when the whole pixel axis fits, else 2048-wide tiles.
    tk = _round_up(P, 128) if P <= max_tile_k else max_tile_k
    P_pad = _round_up(P, tk)
    # Sublane-pad B to 8 and tile it ('parallel' axis).
    B_pad = _round_up(B, 8)
    tb = min(B_pad, max_tile_b)
    B_pad = _round_up(B_pad, tb)
    # Padding contributes exactly 0: x padded with 0, L padded with a very
    # negative logit so softplus(pad)=0 and x*L(pad)=0.
    x_p = jnp.pad(x_flat, ((0, B_pad - B), (0, P_pad - P)))
    l_p = jnp.pad(l_flat, ((0, 0), (0, P_pad - P)), constant_values=-1e4)

    ct = pl.pallas_call(
        _cost_kernel,
        out_shape=jax.ShapeDtypeStruct((S, B_pad), jnp.float32),
        grid=(B_pad // tb, P_pad // tk),
        in_specs=[
            pl.BlockSpec((tb, tk), lambda b, k: (b, k)),
            pl.BlockSpec((S, tk), lambda b, k: (0, k)),
        ],
        out_specs=pl.BlockSpec((S, tb), lambda b, k: (0, b)),
        scratch_shapes=[
            pltpu.VMEM((S, tb), jnp.float32),
            pltpu.VMEM((S, 1), jnp.float32),
        ],
        compiler_params=pltpu.CompilerParams(
            dimension_semantics=("parallel", "arbitrary"),
            vmem_limit_bytes=VMEM_LIMIT),
    )(x_p.astype(jnp.bfloat16), l_p.astype(jnp.bfloat16))
    return ct[:, :B].T                                     # tiny XLA transpose


# --------------------------- Pallas: paired NLL ------------------------------
# TODO(synk): could be fused into the final conv2d matmul epilogue to save one
# HBM pass over logits2; kept separate (f32 for output fidelity).

def _paired_nll_kernel(x_ref, l_ref, o_ref):
    l = l_ref[...]
    nll = _softplus(l) - x_ref[...] * l
    o_ref[...] = jnp.sum(nll, axis=1, keepdims=True)


def paired_nll(x_flat, l_flat):
    """C[b] = -sum_p Bernoulli(logits=L[b]).log_prob(x[b])."""
    B, P = x_flat.shape
    B_pad = _round_up(B, 8)
    P_pad = _round_up(P, 128)
    x_p = jnp.pad(x_flat, ((0, B_pad - B), (0, P_pad - P)))
    l_p = jnp.pad(l_flat, ((0, B_pad - B), (0, P_pad - P)),
                  constant_values=-1e4)   # padding contributes exactly 0
    out = pl.pallas_call(
        _paired_nll_kernel,
        out_shape=jax.ShapeDtypeStruct((B_pad, 1), jnp.float32),
        grid=(1,),
        in_specs=[pl.BlockSpec((B_pad, P_pad), lambda i: (0, 0)),
                  pl.BlockSpec((B_pad, P_pad), lambda i: (0, 0))],
        out_specs=pl.BlockSpec((B_pad, 1), lambda i: (0, 0)),
        compiler_params=pltpu.CompilerParams(vmem_limit_bytes=VMEM_LIMIT),
    )(x_p.astype(jnp.float32), l_p.astype(jnp.float32))
    return out[:B, 0]


# --------------------------- Pallas: fused Sinkhorn --------------------------
# TODO(synk): solver.solve_semi_dual_entropic is a stochastic ASGD semi-dual
# solver; replaced by deterministic log-domain Sinkhorn (same entropic OT plan),
# fused into ONE kernel with C resident in VMEM.

def _sinkhorn_kernel(c_ref, p_ref, *, eps, n_iter, logpx, logpz):
    C = c_ref[...]                                         # (B, S) f32
    B, S = C.shape
    inv_eps = 1.0 / eps

    def body(_, fg):
        f, g = fg
        t = (f - C) * inv_eps                              # (B, S)
        m = jnp.max(t, axis=0, keepdims=True)              # (1, S)
        lse = m + jnp.log(jnp.sum(jnp.exp(t - m), axis=0, keepdims=True))
        g = eps * (logpz - lse)                            # (1, S)
        t = (g - C) * inv_eps
        m = jnp.max(t, axis=1, keepdims=True)              # (B, 1)
        lse = m + jnp.log(jnp.sum(jnp.exp(t - m), axis=1, keepdims=True))
        f = eps * (logpx - lse)                            # (B, 1)
        return (f, g)

    f0 = jnp.zeros((B, 1), jnp.float32)
    g0 = jnp.zeros((1, S), jnp.float32)
    f, g = lax.fori_loop(0, n_iter, body, (f0, g0))
    p_ref[...] = jnp.exp((f + g - C) * inv_eps)


def sinkhorn_log(C, eps, n_iter):
    B, S = C.shape
    return pl.pallas_call(
        functools.partial(_sinkhorn_kernel, eps=float(eps), n_iter=int(n_iter),
                          logpx=float(-math.log(B)), logpz=float(-math.log(S))),
        out_shape=jax.ShapeDtypeStruct((B, S), jnp.float32),
        grid=(1,),
        in_specs=[pl.BlockSpec((B, S), lambda i: (0, 0))],
        out_specs=pl.BlockSpec((B, S), lambda i: (0, 0)),
        compiler_params=pltpu.CompilerParams(vmem_limit_bytes=VMEM_LIMIT),
    )(C.astype(jnp.float32))


# ------------------------ conv layers via im2col + Pallas --------------------
# TODO(synk): im2col / NCHW<->NHWC shuffles remain XLA glue between pallas_calls;
# folding the patch gather into the matmul BlockSpec would remove extra HBM
# round-trips at production sizes.

def _im2col(xpad, kh, kw):
    N, C, Hp, Wp = xpad.shape
    Hout, Wout = Hp - kh + 1, Wp - kw + 1
    cols = []
    for di in range(kh):
        for dj in range(kw):
            cols.append(xpad[:, :, di:di + Hout, dj:dj + Wout])
    patches = jnp.stack(cols, axis=2)                      # (N, C, kh*kw, Ho, Wo)
    patches = patches.transpose(0, 3, 4, 1, 2).reshape(N * Hout * Wout, C * kh * kw)
    return patches, Hout, Wout


def conv2d(x, w, b, *, padding=1, relu):
    """PyTorch Conv2d, stride 1.  w: (Cout, Cin, kh, kw)."""
    Cout, Cin, kh, kw = w.shape
    N = x.shape[0]
    xpad = jnp.pad(x, ((0, 0), (0, 0), (padding, padding), (padding, padding)))
    patches, Hout, Wout = _im2col(xpad, kh, kw)            # (N*Ho*Wo, Cin*kh*kw)
    wmat = w.reshape(Cout, Cin * kh * kw)                  # (Cout, K) -- no .T
    y_t = matmul_nt_bias(wmat, patches, b, relu)           # (Cout, N*Ho*Wo) lane-dense
    return y_t.reshape(Cout, N, Hout, Wout).transpose(1, 0, 2, 3)


def conv_transpose2d(x, w_t, b, *, stride=2, padding=1, output_padding=1, relu):
    """PyTorch ConvTranspose2d.  w_t: (Cin, Cout, kh, kw)."""
    N, Cin, H, W = x.shape
    Cin2, Cout, kh, kw = w_t.shape
    assert Cin == Cin2
    Hd, Wd = (H - 1) * stride + 1, (W - 1) * stride + 1
    xd = jnp.zeros((N, Cin, Hd, Wd), x.dtype).at[:, :, ::stride, ::stride].set(x)
    plo = kh - 1 - padding
    phi = kh - 1 - padding + output_padding
    xpad = jnp.pad(xd, ((0, 0), (0, 0), (plo, phi), (plo, phi)))
    # equivalent ordinary conv: flipped kernel, channels transposed
    w_conv = jnp.flip(w_t, axis=(2, 3)).transpose(1, 0, 2, 3)   # (Cout, Cin, kh, kw)
    patches, Hout, Wout = _im2col(xpad, kh, kw)
    wmat = w_conv.reshape(Cout, Cin * kh * kw)
    y_t = matmul_nt_bias(wmat, patches, b, relu)
    return y_t.reshape(Cout, N, Hout, Wout).transpose(1, 0, 2, 3)


# ------------------------------- Decoder -------------------------------------

def init_params(key, cfg):
    nc = cfg["n_channels"]
    flw = math.ceil(cfg["img_size"] / 2 ** len(nc))
    fls = flw * flw
    ks = jax.random.split(key, 5)

    def w_init(k, shape, fan_in):
        return (jax.random.normal(k, shape, jnp.float32) / jnp.sqrt(fan_in)).astype(jnp.float32)

    params = {
        # PyTorch nn.Linear layout: (out_features, in_features)
        "fc_w": w_init(ks[0], (nc[0] * fls, cfg["latent_dim"]), cfg["latent_dim"]),
        "fc_b": jnp.zeros((nc[0] * fls,), jnp.float32),
        "ct1_w": w_init(ks[1], (nc[0], nc[1], 3, 3), nc[0] * 9),
        "ct1_b": jnp.zeros((nc[1],), jnp.float32),
        "ct2_w": w_init(ks[2], (nc[1], nc[2], 3, 3), nc[1] * 9),
        "ct2_b": jnp.zeros((nc[2],), jnp.float32),
        "ct3_w": w_init(ks[3], (nc[2], nc[2], 3, 3), nc[2] * 9),
        "ct3_b": jnp.zeros((nc[2],), jnp.float32),
        "cv_w": w_init(ks[4], (cfg["in_channels"], nc[2], 3, 3), nc[2] * 9),
        "cv_b": jnp.zeros((cfg["in_channels"],), jnp.float32),
    }
    return params


def decoder_forward(z, p, cfg):
    """Decoder.forward -> Bernoulli logits, shape (N, in_channels, H, W)."""
    nc = cfg["n_channels"]
    flw = math.ceil(cfg["img_size"] / 2 ** len(nc))
    N = z.shape[0]
    # fc_block: Linear + ReLU, computed transposed (F, N) for a lane-dense store
    h_t = matmul_nt_bias(p["fc_w"], z, p["fc_b"], relu=True)     # (nc0*flw*flw, N)
    h = h_t.reshape(nc[0], flw, flw, N).transpose(3, 0, 1, 2)    # (N, nc0, flw, flw)
    # decoder: two convt_blocks (k=3, s=2, p=1, op=1) + activation
    h = conv_transpose2d(h, p["ct1_w"], p["ct1_b"], relu=True)
    h = conv_transpose2d(h, p["ct2_w"], p["ct2_b"], relu=True)
    # final_layer: ConvTranspose2d + activation + Conv2d(k=3, p=1)
    h = conv_transpose2d(h, p["ct3_w"], p["ct3_b"], relu=True)
    logits = conv2d(h, p["cv_w"], p["cv_b"], relu=False)
    return logits


# ------------------------ CoopCommSemiDual forward ----------------------------

def coop_comm_forward(x, key, params, cfg):
    B = x.shape[0]
    S = cfg["n_sample"]
    eps = cfg["epsilon"]

    k_z, k_cat = jax.random.split(key)
    # z_sample: standard normal latents
    z = jax.random.normal(k_z, (S, cfg["latent_dim"]), jnp.float32)

    # cost matrix C[b, s] = -log_prob(x_b | decoder(z_s)) summed over pixels
    logits = decoder_forward(z, params, cfg)                 # (S, 1, H, W)
    x_flat = x.reshape(B, -1)
    l_flat = logits.reshape(S, -1)
    C = cost_matrix(x_flat, l_flat)                          # (B, S)

    # entropic OT plan (fused in-VMEM log-domain Sinkhorn)
    P = sinkhorn_log(C, eps, cfg["maxiter"])                 # (B, S)

    pz = jnp.full((S,), 1.0 / S, jnp.float32)
    P_con = P * B
    kl = jnp.nan_to_num(P_con * (jnp.log(P_con) - jnp.log(pz)[None, :]))
    kl = kl.sum(axis=1).mean()

    # Categorical(P_con) sample -> re-decode matched latents
    s = jax.random.categorical(k_cat, jnp.log(P_con), axis=1)   # (B,)
    z_s = z[s]
    logits2 = decoder_forward(z_s, params, cfg)              # (B, 1, H, W)
    C_out = paired_nll(x_flat, logits2.reshape(B, -1))       # (B,)

    return P, C_out, kl, z


# ---------------------------------- main --------------------------------------

if __name__ == "__main__":
    cfg = dict(
        num_data=2,
        n_sample=8,
        n_chunk=2,          # chunking of the cost computation is a no-op here
        epsilon=1.0,
        in_channels=1,
        latent_dim=32,
        img_size=16,
        maxiter=50,
        n_channels=(16, 8, 8),
        method="sample",
    )

    key = jax.random.PRNGKey(0)
    kx, kfwd = jax.random.split(key)
    B = 2
    x = (jax.random.uniform(kx, (B, cfg["in_channels"], cfg["img_size"],
                                 cfg["img_size"])) > 0.5).astype(jnp.float32)

    params = init_params(jax.random.PRNGKey(42), cfg)

    fwd = jax.jit(lambda xx, kk: coop_comm_forward(xx, kk, params, cfg))
    P, C, kl, z = fwd(x, kfwd)
    jax.block_until_ready((P, C, kl, z))

    assert P.shape == (B, cfg["n_sample"])
    assert C.shape == (B,)
    assert kl.shape == ()
    assert z.shape == (cfg["n_sample"], cfg["latent_dim"])
    assert bool(jnp.all(jnp.isfinite(P))) and bool(jnp.all(jnp.isfinite(C)))
    print("KERNEL_OK")
</pallas_src>

<mosaic_0001>
module attributes {stable_mosaic.version = 11 : i64} {
  func.func @_matmul_nt_kernel(%arg0: i32, %arg1: memref<64x32xbf16, #tpu.memory_space<vmem>>, %arg2: memref<8x32xbf16, #tpu.memory_space<vmem>>, %arg3: memref<64x1xf32, #tpu.memory_space<vmem>>, %arg4: memref<64x8xf32, #tpu.memory_space<vmem>>) attributes {dimension_semantics = [#tpu.dimension_semantics<parallel>], iteration_bounds = array<i64: 1>, scalar_prefetch = 0 : i64, scratch_operands = 0 : i64, tpu.core_type = #tpu.core_type<tc>, window_params = [{pipeline_mode = #tpu.pipeline_mode<synchronous>, transform_indices = @transform_0, window_bounds = array<i64: 64, 32>}, {transform_indices = @transform_1, window_bounds = array<i64: 8, 32>}, {pipeline_mode = #tpu.pipeline_mode<synchronous>, transform_indices = @transform_2, window_bounds = array<i64: 64, 1>}, {transform_indices = @transform_3, window_bounds = array<i64: 64, 8>}]} {
    %c0 = arith.constant 0 : index
    %c0_0 = arith.constant 0 : index
    %0 = vector.load %arg1[%c0, %c0_0] : memref<64x32xbf16, #tpu.memory_space<vmem>>, vector<64x32xbf16>
    %c0_1 = arith.constant 0 : index
    %c0_2 = arith.constant 0 : index
    %1 = vector.load %arg2[%c0_1, %c0_2] : memref<8x32xbf16, #tpu.memory_space<vmem>>, vector<8x32xbf16>
    %cst = arith.constant dense<0.000000e+00> : vector<64x8xf32>
    %2 = tpu.matmul %0, %1, %cst {dimension_numbers = #tpu.dot_dimension_numbers<[1], [1], [0], [0], [0, 0, 1, 0], [], []>} : vector<64x32xbf16>, vector<8x32xbf16>, vector<64x8xf32> -> vector<64x8xf32>
    %c0_3 = arith.constant 0 : index
    %c0_4 = arith.constant 0 : index
    %3 = vector.load %arg3[%c0_3, %c0_4] : memref<64x1xf32, #tpu.memory_space<vmem>>, vector<64x1xf32>
    %4 = vector.broadcast %3 : vector<64x1xf32> to vector<64x8xf32>
    %5 = arith.addf %2, %4 : vector<64x8xf32>
    %cst_5 = arith.constant 0.000000e+00 : f32
    %6 = vector.broadcast %cst_5 : f32 to vector<64x8xf32>
    %7 = arith.maximumf %5, %6 : vector<64x8xf32>
    %c0_6 = arith.constant 0 : index
    %c0_7 = arith.constant 0 : index
    %8 = vector.load %arg4[%c0_6, %c0_7] : memref<64x8xf32, #tpu.memory_space<vmem>>, vector<64x8xf32>
    tpu.vector_store %arg4[%c0_6, %c0_7], %7 {strides = array<i32>} : memref<64x8xf32, #tpu.memory_space<vmem>>, vector<64x8xf32>,
    return
  }
  func.func @transform_0(%arg0: i32) -> (i32, i32) {
    %c0_i32 = arith.constant 0 : i32
    %c0_i32_0 = arith.constant 0 : i32
    %c0_i32_1 = arith.constant 0 : i32
    return %c0_i32, %c0_i32_0 : i32, i32
  }
  func.func @transform_1(%arg0: i32) -> (i32, i32) {
    %c0_i32 = arith.constant 0 : i32
    %c0_i32_0 = arith.constant 0 : i32
    return %arg0, %c0_i32 : i32, i32
  }
  func.func @transform_2(%arg0: i32) -> (i32, i32) {
    %c0_i32 = arith.constant 0 : i32
    %c0_i32_0 = arith.constant 0 : i32
    %c0_i32_1 = arith.constant 0 : i32
    return %c0_i32, %c0_i32_0 : i32, i32
  }
  func.func @transform_3(%arg0: i32) -> (i32, i32) {
    %c0_i32 = arith.constant 0 : i32
    %c0_i32_0 = arith.constant 0 : i32
    return %c0_i32, %arg0 : i32, i32
  }
}

module attributes {stable_mosaic.version = 11 : i64} {
  func.func @_matmul_nt_kernel(%arg0: i32, %arg1: memref<8x144xbf16, #tpu.memory_space<vmem>>, %arg2: memref<128x144xbf16, #tpu.memory_space<vmem>>, %arg3: memref<8x1xf32, #tpu.memory_space<vmem>>, %arg4: memref<8x128xf32, #tpu.memory_space<vmem>>) attributes {dimension_semantics = [#tpu.dimension_semantics<parallel>], iteration_bounds = array<i64: 1>, scalar_prefetch = 0 : i64, scratch_operands = 0 : i64, tpu.core_type = #tpu.core_type<tc>, window_params = [{pipeline_mode = #tpu.pipeline_mode<synchronous>, transform_indices = @transform_0, window_bounds = array<i64: 8, 144>}, {transform_indices = @transform_1, window_bounds = array<i64: 128, 144>}, {pipeline_mode = #tpu.pipeline_mode<synchronous>, transform_indices = @transform_2, window_bounds = array<i64: 8, 1>}, {transform_indices = @transform_3, window_bounds = array<i64: 8, 128>}]} {
    %c0 = arith.constant 0 : index
    %c0_0 = arith.constant 0 : index
    %0 = vector.load %arg1[%c0, %c0_0] : memref<8x144xbf16, #tpu.memory_space<vmem>>, vector<8x144xbf16>
    %c0_1 = arith.constant 0 : index
    %c0_2 = arith.constant 0 : index
    %1 = vector.load %arg2[%c0_1, %c0_2] : memref<128x144xbf16, #tpu.memory_space<vmem>>, vector<128x144xbf16>
    %cst = arith.constant dense<0.000000e+00> : vector<8x128xf32>
    %2 = tpu.matmul %0, %1, %cst {dimension_numbers = #tpu.dot_dimension_numbers<[1], [1], [0], [0], [0, 0, 1, 0], [], []>} : vector<8x144xbf16>, vector<128x144xbf16>, vector<8x128xf32> -> vector<8x128xf32>
    %c0_3 = arith.constant 0 : index
    %c0_4 = arith.constant 0 : index
    %3 = vector.load %arg3[%c0_3, %c0_4] : memref<8x1xf32, #tpu.memory_space<vmem>>, vector<8x1xf32>
    %4 = vector.broadcast %3 : vector<8x1xf32> to vector<8x128xf32>
    %5 = arith.addf %2, %4 : vector<8x128xf32>
    %cst_5 = arith.constant 0.000000e+00 : f32
    %6 = vector.broadcast %cst_5 : f32 to vector<8x128xf32>
    %7 = arith.maximumf %5, %6 : vector<8x128xf32>
    %c0_6 = arith.constant 0 : index
    %c0_7 = arith.constant 0 : index
    %8 = vector.load %arg4[%c0_6, %c0_7] : memref<8x128xf32, #tpu.memory_space<vmem>>, vector<8x128xf32>
    tpu.vector_store %arg4[%c0_6, %c0_7], %7 {strides = array<i32>} : memref<8x128xf32, #tpu.memory_space<vmem>>, vector<8x128xf32>,
    return
  }
  func.func @transform_0(%arg0: i32) -> (i32, i32) {
    %c0_i32 = arith.constant 0 : i32
    %c0_i32_0 = arith.constant 0 : i32
    %c0_i32_1 = arith.constant 0 : i32
    return %c0_i32, %c0_i32_0 : i32, i32
  }
  func.func @transform_1(%arg0: i32) -> (i32, i32) {
    %c0_i32 = arith.constant 0 : i32
    %c0_i32_0 = arith.constant 0 : i32
    return %arg0, %c0_i32 : i32, i32
  }
  func.func @transform_2(%arg0: i32) -> (i32, i32) {
    %c0_i32 = arith.constant 0 : i32
    %c0_i32_0 = arith.constant 0 : i32
    %c0_i32_1 = arith.constant 0 : i32
    return %c0_i32, %c0_i32_0 : i32, i32
  }
  func.func @transform_3(%arg0: i32) -> (i32, i32) {
    %c0_i32 = arith.constant 0 : i32
    %c0_i32_0 = arith.constant 0 : i32
    return %c0_i32, %arg0 : i32, i32
  }
}

module attributes {stable_mosaic.version = 11 : i64} {
  func.func @_matmul_nt_kernel(%arg0: i32, %arg1: memref<8x72xbf16, #tpu.memory_space<vmem>>, %arg2: memref<512x72xbf16, #tpu.memory_space<vmem>>, %arg3: memref<8x1xf32, #tpu.memory_space<vmem>>, %arg4: memref<8x512xf32, #tpu.memory_space<vmem>>) attributes {dimension_semantics = [#tpu.dimension_semantics<parallel>], iteration_bounds = array<i64: 1>, scalar_prefetch = 0 : i64, scratch_operands = 0 : i64, tpu.core_type = #tpu.core_type<tc>, window_params = [{pipeline_mode = #tpu.pipeline_mode<synchronous>, transform_indices = @transform_0, window_bounds = array<i64: 8, 72>}, {transform_indices = @transform_1, window_bounds = array<i64: 512, 72>}, {pipeline_mode = #tpu.pipeline_mode<synchronous>, transform_indices = @transform_2, window_bounds = array<i64: 8, 1>}, {transform_indices = @transform_3, window_bounds = array<i64: 8, 512>}]} {
    %c0 = arith.constant 0 : index
    %c0_0 = arith.constant 0 : index
    %0 = vector.load %arg1[%c0, %c0_0] : memref<8x72xbf16, #tpu.memory_space<vmem>>, vector<8x72xbf16>
    %c0_1 = arith.constant 0 : index
    %c0_2 = arith.constant 0 : index
    %1 = vector.load %arg2[%c0_1, %c0_2] : memref<512x72xbf16, #tpu.memory_space<vmem>>, vector<512x72xbf16>
    %cst = arith.constant dense<0.000000e+00> : vector<8x512xf32>
    %2 = tpu.matmul %0, %1, %cst {dimension_numbers = #tpu.dot_dimension_numbers<[1], [1], [0], [0], [0, 0, 1, 0], [], []>} : vector<8x72xbf16>, vector<512x72xbf16>, vector<8x512xf32> -> vector<8x512xf32>
    %c0_3 = arith.constant 0 : index
    %c0_4 = arith.constant 0 : index
    %3 = vector.load %arg3[%c0_3, %c0_4] : memref<8x1xf32, #tpu.memory_space<vmem>>, vector<8x1xf32>
    %4 = vector.broadcast %3 : vector<8x1xf32> to vector<8x512xf32>
    %5 = arith.addf %2, %4 : vector<8x512xf32>
    %cst_5 = arith.constant 0.000000e+00 : f32
    %6 = vector.broadcast %cst_5 : f32 to vector<8x512xf32>
    %7 = arith.maximumf %5, %6 : vector<8x512xf32>
    %c0_6 = arith.constant 0 : index
    %c0_7 = arith.constant 0 : index
    %8 = vector.load %arg4[%c0_6, %c0_7] : memref<8x512xf32, #tpu.memory_space<vmem>>, vector<8x512xf32>
    tpu.vector_store %arg4[%c0_6, %c0_7], %7 {strides = array<i32>} : memref<8x512xf32, #tpu.memory_space<vmem>>, vector<8x512xf32>,
    return
  }
  func.func @transform_0(%arg0: i32) -> (i32, i32) {
    %c0_i32 = arith.constant 0 : i32
    %c0_i32_0 = arith.constant 0 : i32
    %c0_i32_1 = arith.constant 0 : i32
    return %c0_i32, %c0_i32_0 : i32, i32
  }
  func.func @transform_1(%arg0: i32) -> (i32, i32) {
    %c0_i32 = arith.constant 0 : i32
    %c0_i32_0 = arith.constant 0 : i32
    return %arg0, %c0_i32 : i32, i32
  }
  func.func @transform_2(%arg0: i32) -> (i32, i32) {
    %c0_i32 = arith.constant 0 : i32
    %c0_i32_0 = arith.constant 0 : i32
    %c0_i32_1 = arith.constant 0 : i32
    return %c0_i32, %c0_i32_0 : i32, i32
  }
  func.func @transform_3(%arg0: i32) -> (i32, i32) {
    %c0_i32 = arith.constant 0 : i32
    %c0_i32_0 = arith.constant 0 : i32
    return %c0_i32, %arg0 : i32, i32
  }
}

module attributes {stable_mosaic.version = 11 : i64} {
  func.func @_matmul_nt_kernel(%arg0: i32, %arg1: memref<8x72xbf16, #tpu.memory_space<vmem>>, %arg2: memref<512x72xbf16, #tpu.memory_space<vmem>>, %arg3: memref<8x1xf32, #tpu.memory_space<vmem>>, %arg4: memref<8x512xf32, #tpu.memory_space<vmem>>) attributes {dimension_semantics = [#tpu.dimension_semantics<parallel>], iteration_bounds = array<i64: 4>, scalar_prefetch = 0 : i64, scratch_operands = 0 : i64, tpu.core_type = #tpu.core_type<tc>, window_params = [{pipeline_mode = #tpu.pipeline_mode<synchronous>, transform_indices = @transform_0, window_bounds = array<i64: 8, 72>}, {transform_indices = @transform_1, window_bounds = array<i64: 512, 72>}, {pipeline_mode = #tpu.pipeline_mode<synchronous>, transform_indices = @transform_2, window_bounds = array<i64: 8, 1>}, {transform_indices = @transform_3, window_bounds = array<i64: 8, 512>}]} {
    %c0 = arith.constant 0 : index
    %c0_0 = arith.constant 0 : index
    %0 = vector.load %arg1[%c0, %c0_0] : memref<8x72xbf16, #tpu.memory_space<vmem>>, vector<8x72xbf16>
    %c0_1 = arith.constant 0 : index
    %c0_2 = arith.constant 0 : index
    %1 = vector.load %arg2[%c0_1, %c0_2] : memref<512x72xbf16, #tpu.memory_space<vmem>>, vector<512x72xbf16>
    %cst = arith.constant dense<0.000000e+00> : vector<8x512xf32>
    %2 = tpu.matmul %0, %1, %cst {dimension_numbers = #tpu.dot_dimension_numbers<[1], [1], [0], [0], [0, 0, 1, 0], [], []>} : vector<8x72xbf16>, vector<512x72xbf16>, vector<8x512xf32> -> vector<8x512xf32>
    %c0_3 = arith.constant 0 : index
    %c0_4 = arith.constant 0 : index
    %3 = vector.load %arg3[%c0_3, %c0_4] : memref<8x1xf32, #tpu.memory_space<vmem>>, vector<8x1xf32>
    %4 = vector.broadcast %3 : vector<8x1xf32> to vector<8x512xf32>
    %5 = arith.addf %2, %4 : vector<8x512xf32>
    %cst_5 = arith.constant 0.000000e+00 : f32
    %6 = vector.broadcast %cst_5 : f32 to vector<8x512xf32>
    %7 = arith.maximumf %5, %6 : vector<8x512xf32>
    %c0_6 = arith.constant 0 : index
    %c0_7 = arith.constant 0 : index
    %8 = vector.load %arg4[%c0_6, %c0_7] : memref<8x512xf32, #tpu.memory_space<vmem>>, vector<8x512xf32>
    tpu.vector_store %arg4[%c0_6, %c0_7], %7 {strides = array<i32>} : memref<8x512xf32, #tpu.memory_space<vmem>>, vector<8x512xf32>,
    return
  }
  func.func @transform_0(%arg0: i32) -> (i32, i32) {
    %c0_i32 = arith.constant 0 : i32
    %c0_i32_0 = arith.constant 0 : i32
    %c0_i32_1 = arith.constant 0 : i32
    return %c0_i32, %c0_i32_0 : i32, i32
  }
  func.func @transform_1(%arg0: i32) -> (i32, i32) {
    %c0_i32 = arith.constant 0 : i32
    %c0_i32_0 = arith.constant 0 : i32
    return %arg0, %c0_i32 : i32, i32
  }
  func.func @transform_2(%arg0: i32) -> (i32, i32) {
    %c0_i32 = arith.constant 0 : i32
    %c0_i32_0 = arith.constant 0 : i32
    %c0_i32_1 = arith.constant 0 : i32
    return %c0_i32, %c0_i32_0 : i32, i32
  }
  func.func @transform_3(%arg0: i32) -> (i32, i32) {
    %c0_i32 = arith.constant 0 : i32
    %c0_i32_0 = arith.constant 0 : i32
    return %c0_i32, %arg0 : i32, i32
  }
}

module attributes {stable_mosaic.version = 11 : i64} {
  func.func @_matmul_nt_kernel(%arg0: i32, %arg1: memref<1x72xbf16, #tpu.memory_space<vmem>>, %arg2: memref<512x72xbf16, #tpu.memory_space<vmem>>, %arg3: memref<1x1xf32, #tpu.memory_space<vmem>>, %arg4: memref<1x512xf32, #tpu.memory_space<vmem>>) attributes {dimension_semantics = [#tpu.dimension_semantics<parallel>], iteration_bounds = array<i64: 4>, scalar_prefetch = 0 : i64, scratch_operands = 0 : i64, tpu.core_type = #tpu.core_type<tc>, window_params = [{pipeline_mode = #tpu.pipeline_mode<synchronous>, transform_indices = @transform_0, window_bounds = array<i64: 1, 72>}, {transform_indices = @transform_1, window_bounds = array<i64: 512, 72>}, {pipeline_mode = #tpu.pipeline_mode<synchronous>, transform_indices = @transform_2, window_bounds = array<i64: 1, 1>}, {transform_indices = @transform_3, window_bounds = array<i64: 1, 512>}]} {
    %c0 = arith.constant 0 : index
    %c0_0 = arith.constant 0 : index
    %0 = vector.load %arg1[%c0, %c0_0] : memref<1x72xbf16, #tpu.memory_space<vmem>>, vector<1x72xbf16>
    %c0_1 = arith.constant 0 : index
    %c0_2 = arith.constant 0 : index
    %1 = vector.load %arg2[%c0_1, %c0_2] : memref<512x72xbf16, #tpu.memory_space<vmem>>, vector<512x72xbf16>
    %cst = arith.constant dense<0.000000e+00> : vector<1x512xf32>
    %2 = tpu.matmul %0, %1, %cst {dimension_numbers = #tpu.dot_dimension_numbers<[1], [1], [0], [0], [0, 0, 1, 0], [], []>} : vector<1x72xbf16>, vector<512x72xbf16>, vector<1x512xf32> -> vector<1x512xf32>
    %c0_3 = arith.constant 0 : index
    %c0_4 = arith.constant 0 : index
    %3 = vector.load %arg3[%c0_3, %c0_4] : memref<1x1xf32, #tpu.memory_space<vmem>>, vector<1x1xf32>
    %4 = vector.broadcast %3 : vector<1x1xf32> to vector<1x512xf32>
    %5 = arith.addf %2, %4 : vector<1x512xf32>
    %c0_5 = arith.constant 0 : index
    %c0_6 = arith.constant 0 : index
    %6 = vector.load %arg4[%c0_5, %c0_6] : memref<1x512xf32, #tpu.memory_space<vmem>>, vector<1x512xf32>
    tpu.vector_store %arg4[%c0_5, %c0_6], %5 {strides = array<i32>} : memref<1x512xf32, #tpu.memory_space<vmem>>, vector<1x512xf32>,
    return
  }
  func.func @transform_0(%arg0: i32) -> (i32, i32) {
    %c0_i32 = arith.constant 0 : i32
    %c0_i32_0 = arith.constant 0 : i32
    %c0_i32_1 = arith.constant 0 : i32
    return %c0_i32, %c0_i32_0 : i32, i32
  }
  func.func @transform_1(%arg0: i32) -> (i32, i32) {
    %c0_i32 = arith.constant 0 : i32
    %c0_i32_0 = arith.constant 0 : i32
    return %arg0, %c0_i32 : i32, i32
  }
  func.func @transform_2(%arg0: i32) -> (i32, i32) {
    %c0_i32 = arith.constant 0 : i32
    %c0_i32_0 = arith.constant 0 : i32
    %c0_i32_1 = arith.constant 0 : i32
    return %c0_i32, %c0_i32_0 : i32, i32
  }
  func.func @transform_3(%arg0: i32) -> (i32, i32) {
    %c0_i32 = arith.constant 0 : i32
    %c0_i32_0 = arith.constant 0 : i32
    return %c0_i32, %arg0 : i32, i32
  }
}

module attributes {stable_mosaic.version = 11 : i64} {
  func.func @_cost_kernel(%arg0: i32, %arg1: i32, %arg2: memref<8x256xbf16, #tpu.memory_space<vmem>>, %arg3: memref<8x256xbf16, #tpu.memory_space<vmem>>, %arg4: memref<8x8xf32, #tpu.memory_space<vmem>>, %arg5: memref<8x8xf32, #tpu.memory_space<vmem>>, %arg6: memref<8x1xf32, #tpu.memory_space<vmem>>) attributes {dimension_semantics = [#tpu.dimension_semantics<parallel>, #tpu.dimension_semantics<arbitrary>], iteration_bounds = array<i64: 1, 1>, scalar_prefetch = 0 : i64, scratch_operands = 2 : i64, tpu.core_type = #tpu.core_type<tc>, window_params = [{transform_indices = @transform_0, window_bounds = array<i64: 8, 256>}, {transform_indices = @transform_1, window_bounds = array<i64: 8, 256>}, {transform_indices = @transform_2, window_bounds = array<i64: 8, 8>}]} {
    %c0_i32 = arith.constant 0 : i32
    %0 = arith.cmpi eq, %arg1, %c0_i32 : i32
    %1 = arith.extui %0 : i1 to i32
    %c0_i32_0 = arith.constant 0 : i32
    %2 = arith.cmpi ne, %1, %c0_i32_0 : i32
    scf.if %2 {
      %cst_17 = arith.constant 0.000000e+00 : f32
      %26 = vector.broadcast %cst_17 : f32 to vector<8x8xf32>
      %c0_18 = arith.constant 0 : index
      %c0_19 = arith.constant 0 : index
      %27 = vector.load %arg5[%c0_18, %c0_19] : memref<8x8xf32, #tpu.memory_space<vmem>>, vector<8x8xf32>
      tpu.vector_store %arg5[%c0_18, %c0_19], %26 {strides = array<i32>} : memref<8x8xf32, #tpu.memory_space<vmem>>, vector<8x8xf32>,
      %cst_20 = arith.constant 0.000000e+00 : f32
      %28 = vector.broadcast %cst_20 : f32 to vector<8x1xf32>
      %c0_21 = arith.constant 0 : index
      %c0_22 = arith.constant 0 : index
      %29 = vector.load %arg6[%c0_21, %c0_22] : memref<8x1xf32, #tpu.memory_space<vmem>>, vector<8x1xf32>
      tpu.vector_store %arg6[%c0_21, %c0_22], %28 {strides = array<i32>} : memref<8x1xf32, #tpu.memory_space<vmem>>, vector<8x1xf32>,
    } else {
    }
    %c0 = arith.constant 0 : index
    %c0_1 = arith.constant 0 : index
    %3 = vector.load %arg3[%c0, %c0_1] : memref<8x256xbf16, #tpu.memory_space<vmem>>, vector<8x256xbf16>
    %c0_2 = arith.constant 0 : index
    %c0_3 = arith.constant 0 : index
    %4 = vector.load %arg2[%c0_2, %c0_3] : memref<8x256xbf16, #tpu.memory_space<vmem>>, vector<8x256xbf16>
    %c0_4 = arith.constant 0 : index
    %c0_5 = arith.constant 0 : index
    %5 = vector.load %arg5[%c0_4, %c0_5] : memref<8x8xf32, #tpu.memory_space<vmem>>, vector<8x8xf32>
    %cst = arith.constant dense<0.000000e+00> : vector<8x8xf32>
    %6 = tpu.matmul %3, %4, %cst {dimension_numbers = #tpu.dot_dimension_numbers<[1], [1], [0], [0], [0, 0, 1, 0], [], []>} : vector<8x256xbf16>, vector<8x256xbf16>, vector<8x8xf32> -> vector<8x8xf32>
    %7 = arith.addf %5, %6 : vector<8x8xf32>
    %c0_6 = arith.constant 0 : index
    %c0_7 = arith.constant 0 : index
    %8 = vector.load %arg5[%c0_6, %c0_7] : memref<8x8xf32, #tpu.memory_space<vmem>>, vector<8x8xf32>
    tpu.vector_store %arg5[%c0_6, %c0_7], %7 {strides = array<i32>} : memref<8x8xf32, #tpu.memory_space<vmem>>, vector<8x8xf32>,
    %c0_8 = arith.constant 0 : index
    %c0_9 = arith.constant 0 : index
    %9 = vector.load %arg6[%c0_8, %c0_9] : memref<8x1xf32, #tpu.memory_space<vmem>>, vector<8x1xf32>
    %10 = arith.extf %3 : vector<8x256xbf16> to vector<8x256xf32>
    %cst_10 = arith.constant 0.000000e+00 : f32
    %11 = vector.broadcast %cst_10 : f32 to vector<8x256xf32>
    %12 = arith.maximumf %10, %11 : vector<8x256xf32>
    %13 = math.absf %10 : vector<8x256xf32>
    %cst_11 = arith.constant 0.000000e+00 : f32
    %14 = vector.broadcast %cst_11 : f32 to vector<8x256xf32>
    %15 = arith.subf %14, %13 : vector<8x256xf32>
    %16 = math.exp %15 : vector<8x256xf32>
    %17 = math.log1p %16 : vector<8x256xf32>
    %18 = arith.addf %12, %17 : vector<8x256xf32>
    %cst_12 = arith.constant dense<0.000000e+00> : vector<8xf32>
    %19 = vector.multi_reduction <add>, %18, %cst_12 [1] : vector<8x256xf32> to vector<8xf32>
    %20 = vector.shape_cast %19 : vector<8xf32> to vector<8x1xf32>
    %21 = arith.addf %9, %20 : vector<8x1xf32>
    %c0_13 = arith.constant 0 : index
    %c0_14 = arith.constant 0 : index
    %22 = vector.load %arg6[%c0_13, %c0_14] : memref<8x1xf32, #tpu.memory_space<vmem>>, vector<8x1xf32>
    tpu.vector_store %arg6[%c0_13, %c0_14], %21 {strides = array<i32>} : memref<8x1xf32, #tpu.memory_space<vmem>>, vector<8x1xf32>,
    %c0_i32_15 = arith.constant 0 : i32
    %23 = arith.cmpi eq, %arg1, %c0_i32_15 : i32
    %24 = arith.extui %23 : i1 to i32
    %c0_i32_16 = arith.constant 0 : i32
    %25 = arith.cmpi ne, %24, %c0_i32_16 : i32
    scf.if %25 {
      %c0_17 = arith.constant 0 : index
      %c0_18 = arith.constant 0 : index
      %26 = vector.load %arg6[%c0_17, %c0_18] : memref<8x1xf32, #tpu.memory_space<vmem>>, vector<8x1xf32>
      %c0_19 = arith.constant 0 : index
      %c0_20 = arith.constant 0 : index
      %27 = vector.load %arg5[%c0_19, %c0_20] : memref<8x8xf32, #tpu.memory_space<vmem>>, vector<8x8xf32>
      %28 = vector.broadcast %26 : vector<8x1xf32> to vector<8x8xf32>
      %29 = arith.subf %28, %27 : vector<8x8xf32>
      %c0_21 = arith.constant 0 : index
      %c0_22 = arith.constant 0 : index
      %30 = vector.load %arg4[%c0_21, %c0_22] : memref<8x8xf32, #tpu.memory_space<vmem>>, vector<8x8xf32>
      tpu.vector_store %arg4[%c0_21, %c0_22], %29 {strides = array<i32>} : memref<8x8xf32, #tpu.memory_space<vmem>>, vector<8x8xf32>,
    } else {
    }
    return
  }
  func.func @transform_0(%arg0: i32, %arg1: i32) -> (i32, i32) {
    %c0_i32 = arith.constant 0 : i32
    return %arg0, %arg1 : i32, i32
  }
  func.func @transform_1(%arg0: i32, %arg1: i32) -> (i32, i32) {
    %c0_i32 = arith.constant 0 : i32
    %c0_i32_0 = arith.constant 0 : i32
    return %c0_i32, %arg1 : i32, i32
  }
  func.func @transform_2(%arg0: i32, %arg1: i32) -> (i32, i32) {
    %c0_i32 = arith.constant 0 : i32
    %c0_i32_0 = arith.constant 0 : i32
    return %c0_i32, %arg0 : i32, i32
  }
}

module attributes {stable_mosaic.version = 11 : i64} {
  func.func @_sinkhorn_kernel(%arg0: i32, %arg1: memref<2x8xf32, #tpu.memory_space<vmem>>, %arg2: memref<2x8xf32, #tpu.memory_space<vmem>>) attributes {dimension_semantics = [#tpu.dimension_semantics<arbitrary>], iteration_bounds = array<i64: 1>, scalar_prefetch = 0 : i64, scratch_operands = 0 : i64, tpu.core_type = #tpu.core_type<tc>, window_params = [{pipeline_mode = #tpu.pipeline_mode<synchronous>, transform_indices = @transform_0, window_bounds = array<i64: 2, 8>}, {pipeline_mode = #tpu.pipeline_mode<synchronous>, transform_indices = @transform_1, window_bounds = array<i64: 2, 8>}]} {
    %c0 = arith.constant 0 : index
    %c0_0 = arith.constant 0 : index
    %0 = vector.load %arg1[%c0, %c0_0] : memref<2x8xf32, #tpu.memory_space<vmem>>, vector<2x8xf32>
    %cst = arith.constant 0.000000e+00 : f32
    %1 = vector.broadcast %cst : f32 to vector<2x1xf32>
    %cst_1 = arith.constant 0.000000e+00 : f32
    %2 = vector.broadcast %cst_1 : f32 to vector<1x8xf32>
    %c0_i32 = arith.constant 0 : i32
    %c50_i32 = arith.constant 50 : i32
    %3 = arith.addi %c0_i32, %c50_i32 : i32
    %c1_i32 = arith.constant 1 : i32
    %4:2 = scf.for %arg3 = %c0_i32 to %3 step %c1_i32 iter_args(%arg4 = %1, %arg5 = %2) -> (vector<2x1xf32>, vector<1x8xf32>)  : i32 {
      %13 = vector.broadcast %arg4 : vector<2x1xf32> to vector<2x8xf32>
      %14 = arith.subf %13, %0 : vector<2x8xf32>
      %cst_5 = arith.constant 1.000000e+00 : f32
      %15 = vector.broadcast %cst_5 : f32 to vector<2x8xf32>
      %16 = arith.mulf %14, %15 : vector<2x8xf32>
      %cst_6 = arith.constant dense<0xFF800000> : vector<8xf32>
      %17 = vector.multi_reduction <maximumf>, %16, %cst_6 [0] : vector<2x8xf32> to vector<8xf32>
      %18 = vector.shape_cast %17 : vector<8xf32> to vector<1x8xf32>
      %19 = vector.broadcast %18 : vector<1x8xf32> to vector<2x8xf32>
      %20 = arith.subf %16, %19 : vector<2x8xf32>
      %21 = math.exp %20 : vector<2x8xf32>
      %cst_7 = arith.constant dense<0.000000e+00> : vector<8xf32>
      %22 = vector.multi_reduction <add>, %21, %cst_7 [0] : vector<2x8xf32> to vector<8xf32>
      %23 = vector.shape_cast %22 : vector<8xf32> to vector<1x8xf32>
      %24 = math.log %23 : vector<1x8xf32>
      %25 = arith.addf %18, %24 : vector<1x8xf32>
      %cst_8 = arith.constant -2.07944155 : f32
      %26 = vector.broadcast %cst_8 : f32 to vector<1x8xf32>
      %27 = arith.subf %26, %25 : vector<1x8xf32>
      %cst_9 = arith.constant 1.000000e+00 : f32
      %28 = vector.broadcast %cst_9 : f32 to vector<1x8xf32>
      %29 = arith.mulf %28, %27 : vector<1x8xf32>
      %30 = vector.broadcast %29 : vector<1x8xf32> to vector<2x8xf32>
      %31 = arith.subf %30, %0 : vector<2x8xf32>
      %cst_10 = arith.constant 1.000000e+00 : f32
      %32 = vector.broadcast %cst_10 : f32 to vector<2x8xf32>
      %33 = arith.mulf %31, %32 : vector<2x8xf32>
      %cst_11 = arith.constant dense<0xFF800000> : vector<2xf32>
      %34 = vector.multi_reduction <maximumf>, %33, %cst_11 [1] : vector<2x8xf32> to vector<2xf32>
      %35 = vector.shape_cast %34 : vector<2xf32> to vector<2x1xf32>
      %36 = vector.broadcast %35 : vector<2x1xf32> to vector<2x8xf32>
      %37 = arith.subf %33, %36 : vector<2x8xf32>
      %38 = math.exp %37 : vector<2x8xf32>
      %cst_12 = arith.constant dense<0.000000e+00> : vector<2xf32>
      %39 = vector.multi_reduction <add>, %38, %cst_12 [1] : vector<2x8xf32> to vector<2xf32>
      %40 = vector.shape_cast %39 : vector<2xf32> to vector<2x1xf32>
      %41 = math.log %40 : vector<2x1xf32>
      %42 = arith.addf %35, %41 : vector<2x1xf32>
      %cst_13 = arith.constant -0.693147182 : f32
      %43 = vector.broadcast %cst_13 : f32 to vector<2x1xf32>
      %44 = arith.subf %43, %42 : vector<2x1xf32>
      %cst_14 = arith.constant 1.000000e+00 : f32
      %45 = vector.broadcast %cst_14 : f32 to vector<2x1xf32>
      %46 = arith.mulf %45, %44 : vector<2x1xf32>
      scf.yield %46, %29 : vector<2x1xf32>, vector<1x8xf32>
    }
    %5 = vector.broadcast %4#0 : vector<2x1xf32> to vector<2x8xf32>
    %6 = vector.broadcast %4#1 : vector<1x8xf32> to vector<2x8xf32>
    %7 = arith.addf %5, %6 : vector<2x8xf32>
    %8 = arith.subf %7, %0 : vector<2x8xf32>
    %cst_2 = arith.constant 1.000000e+00 : f32
    %9 = vector.broadcast %cst_2 : f32 to vector<2x8xf32>
    %10 = arith.mulf %8, %9 : vector<2x8xf32>
    %11 = math.exp %10 : vector<2x8xf32>
    %c0_3 = arith.constant 0 : index
    %c0_4 = arith.constant 0 : index
    %12 = vector.load %arg2[%c0_3, %c0_4] : memref<2x8xf32, #tpu.memory_space<vmem>>, vector<2x8xf32>
    tpu.vector_store %arg2[%c0_3, %c0_4], %11 {strides = array<i32>} : memref<2x8xf32, #tpu.memory_space<vmem>>, vector<2x8xf32>,
    return
  }
  func.func @transform_0(%arg0: i32) -> (i32, i32) {
    %c0_i32 = arith.constant 0 : i32
    %c0_i32_0 = arith.constant 0 : i32
    %c0_i32_1 = arith.constant 0 : i32
    return %c0_i32, %c0_i32_0 : i32, i32
  }
  func.func @transform_1(%arg0: i32) -> (i32, i32) {
    %c0_i32 = arith.constant 0 : i32
    %c0_i32_0 = arith.constant 0 : i32
    %c0_i32_1 = arith.constant 0 : i32
    return %c0_i32, %c0_i32_0 : i32, i32
  }
}

module attributes {stable_mosaic.version = 11 : i64} {
  func.func @_matmul_nt_kernel(%arg0: i32, %arg1: memref<64x32xbf16, #tpu.memory_space<vmem>>, %arg2: memref<2x32xbf16, #tpu.memory_space<vmem>>, %arg3: memref<64x1xf32, #tpu.memory_space<vmem>>, %arg4: memref<64x2xf32, #tpu.memory_space<vmem>>) attributes {dimension_semantics = [#tpu.dimension_semantics<parallel>], iteration_bounds = array<i64: 1>, scalar_prefetch = 0 : i64, scratch_operands = 0 : i64, tpu.core_type = #tpu.core_type<tc>, window_params = [{pipeline_mode = #tpu.pipeline_mode<synchronous>, transform_indices = @transform_0, window_bounds = array<i64: 64, 32>}, {transform_indices = @transform_1, window_bounds = array<i64: 2, 32>}, {pipeline_mode = #tpu.pipeline_mode<synchronous>, transform_indices = @transform_2, window_bounds = array<i64: 64, 1>}, {transform_indices = @transform_3, window_bounds = array<i64: 64, 2>}]} {
    %c0 = arith.constant 0 : index
    %c0_0 = arith.constant 0 : index
    %0 = vector.load %arg1[%c0, %c0_0] : memref<64x32xbf16, #tpu.memory_space<vmem>>, vector<64x32xbf16>
    %c0_1 = arith.constant 0 : index
    %c0_2 = arith.constant 0 : index
    %1 = vector.load %arg2[%c0_1, %c0_2] : memref<2x32xbf16, #tpu.memory_space<vmem>>, vector<2x32xbf16>
    %cst = arith.constant dense<0.000000e+00> : vector<64x2xf32>
    %2 = tpu.matmul %0, %1, %cst {dimension_numbers = #tpu.dot_dimension_numbers<[1], [1], [0], [0], [0, 0, 1, 0], [], []>} : vector<64x32xbf16>, vector<2x32xbf16>, vector<64x2xf32> -> vector<64x2xf32>
    %c0_3 = arith.constant 0 : index
    %c0_4 = arith.constant 0 : index
    %3 = vector.load %arg3[%c0_3, %c0_4] : memref<64x1xf32, #tpu.memory_space<vmem>>, vector<64x1xf32>
    %4 = vector.broadcast %3 : vector<64x1xf32> to vector<64x2xf32>
    %5 = arith.addf %2, %4 : vector<64x2xf32>
    %cst_5 = arith.constant 0.000000e+00 : f32
    %6 = vector.broadcast %cst_5 : f32 to vector<64x2xf32>
    %7 = arith.maximumf %5, %6 : vector<64x2xf32>
    %c0_6 = arith.constant 0 : index
    %c0_7 = arith.constant 0 : index
    %8 = vector.load %arg4[%c0_6, %c0_7] : memref<64x2xf32, #tpu.memory_space<vmem>>, vector<64x2xf32>
    tpu.vector_store %arg4[%c0_6, %c0_7], %7 {strides = array<i32>} : memref<64x2xf32, #tpu.memory_space<vmem>>, vector<64x2xf32>,
    return
  }
  func.func @transform_0(%arg0: i32) -> (i32, i32) {
    %c0_i32 = arith.constant 0 : i32
    %c0_i32_0 = arith.constant 0 : i32
    %c0_i32_1 = arith.constant 0 : i32
    return %c0_i32, %c0_i32_0 : i32, i32
  }
  func.func @transform_1(%arg0: i32) -> (i32, i32) {
    %c0_i32 = arith.constant 0 : i32
    %c0_i32_0 = arith.constant 0 : i32
    return %arg0, %c0_i32 : i32, i32
  }
  func.func @transform_2(%arg0: i32) -> (i32, i32) {
    %c0_i32 = arith.constant 0 : i32
    %c0_i32_0 = arith.constant 0 : i32
    %c0_i32_1 = arith.constant 0 : i32
    return %c0_i32, %c0_i32_0 : i32, i32
  }
  func.func @transform_3(%arg0: i32) -> (i32, i32) {
    %c0_i32 = arith.constant 0 : i32
    %c0_i32_0 = arith.constant 0 : i32
    return %c0_i32, %arg0 : i32, i32
  }
}

module attributes {stable_mosaic.version = 11 : i64} {
  func.func @_matmul_nt_kernel(%arg0: i32, %arg1: memref<8x144xbf16, #tpu.memory_space<vmem>>, %arg2: memref<32x144xbf16, #tpu.memory_space<vmem>>, %arg3: memref<8x1xf32, #tpu.memory_space<vmem>>, %arg4: memref<8x32xf32, #tpu.memory_space<vmem>>) attributes {dimension_semantics = [#tpu.dimension_semantics<parallel>], iteration_bounds = array<i64: 1>, scalar_prefetch = 0 : i64, scratch_operands = 0 : i64, tpu.core_type = #tpu.core_type<tc>, window_params = [{pipeline_mode = #tpu.pipeline_mode<synchronous>, transform_indices = @transform_0, window_bounds = array<i64: 8, 144>}, {transform_indices = @transform_1, window_bounds = array<i64: 32, 144>}, {pipeline_mode = #tpu.pipeline_mode<synchronous>, transform_indices = @transform_2, window_bounds = array<i64: 8, 1>}, {transform_indices = @transform_3, window_bounds = array<i64: 8, 32>}]} {
    %c0 = arith.constant 0 : index
    %c0_0 = arith.constant 0 : index
    %0 = vector.load %arg1[%c0, %c0_0] : memref<8x144xbf16, #tpu.memory_space<vmem>>, vector<8x144xbf16>
    %c0_1 = arith.constant 0 : index
    %c0_2 = arith.constant 0 : index
    %1 = vector.load %arg2[%c0_1, %c0_2] : memref<32x144xbf16, #tpu.memory_space<vmem>>, vector<32x144xbf16>
    %cst = arith.constant dense<0.000000e+00> : vector<8x32xf32>
    %2 = tpu.matmul %0, %1, %cst {dimension_numbers = #tpu.dot_dimension_numbers<[1], [1], [0], [0], [0, 0, 1, 0], [], []>} : vector<8x144xbf16>, vector<32x144xbf16>, vector<8x32xf32> -> vector<8x32xf32>
    %c0_3 = arith.constant 0 : index
    %c0_4 = arith.constant 0 : index
    %3 = vector.load %arg3[%c0_3, %c0_4] : memref<8x1xf32, #tpu.memory_space<vmem>>, vector<8x1xf32>
    %4 = vector.broadcast %3 : vector<8x1xf32> to vector<8x32xf32>
    %5 = arith.addf %2, %4 : vector<8x32xf32>
    %cst_5 = arith.constant 0.000000e+00 : f32
    %6 = vector.broadcast %cst_5 : f32 to vector<8x32xf32>
    %7 = arith.maximumf %5, %6 : vector<8x32xf32>
    %c0_6 = arith.constant 0 : index
    %c0_7 = arith.constant 0 : index
    %8 = vector.load %arg4[%c0_6, %c0_7] : memref<8x32xf32, #tpu.memory_space<vmem>>, vector<8x32xf32>
    tpu.vector_store %arg4[%c0_6, %c0_7], %7 {strides = array<i32>} : memref<8x32xf32, #tpu.memory_space<vmem>>, vector<8x32xf32>,
    return
  }
  func.func @transform_0(%arg0: i32) -> (i32, i32) {
    %c0_i32 = arith.constant 0 : i32
    %c0_i32_0 = arith.constant 0 : i32
    %c0_i32_1 = arith.constant 0 : i32
    return %c0_i32, %c0_i32_0 : i32, i32
  }
  func.func @transform_1(%arg0: i32) -> (i32, i32) {
    %c0_i32 = arith.constant 0 : i32
    %c0_i32_0 = arith.constant 0 : i32
    return %arg0, %c0_i32 : i32, i32
  }
  func.func @transform_2(%arg0: i32) -> (i32, i32) {
    %c0_i32 = arith.constant 0 : i32
    %c0_i32_0 = arith.constant 0 : i32
    %c0_i32_1 = arith.constant 0 : i32
    return %c0_i32, %c0_i32_0 : i32, i32
  }
  func.func @transform_3(%arg0: i32) -> (i32, i32) {
    %c0_i32 = arith.constant 0 : i32
    %c0_i32_0 = arith.constant 0 : i32
    return %c0_i32, %arg0 : i32, i32
  }
}

module attributes {stable_mosaic.version = 11 : i64} {
  func.func @_matmul_nt_kernel(%arg0: i32, %arg1: memref<8x72xbf16, #tpu.memory_space<vmem>>, %arg2: memref<128x72xbf16, #tpu.memory_space<vmem>>, %arg3: memref<8x1xf32, #tpu.memory_space<vmem>>, %arg4: memref<8x128xf32, #tpu.memory_space<vmem>>) attributes {dimension_semantics = [#tpu.dimension_semantics<parallel>], iteration_bounds = array<i64: 1>, scalar_prefetch = 0 : i64, scratch_operands = 0 : i64, tpu.core_type = #tpu.core_type<tc>, window_params = [{pipeline_mode = #tpu.pipeline_mode<synchronous>, transform_indices = @transform_0, window_bounds = array<i64: 8, 72>}, {transform_indices = @transform_1, window_bounds = array<i64: 128, 72>}, {pipeline_mode = #tpu.pipeline_mode<synchronous>, transform_indices = @transform_2, window_bounds = array<i64: 8, 1>}, {transform_indices = @transform_3, window_bounds = array<i64: 8, 128>}]} {
    %c0 = arith.constant 0 : index
    %c0_0 = arith.constant 0 : index
    %0 = vector.load %arg1[%c0, %c0_0] : memref<8x72xbf16, #tpu.memory_space<vmem>>, vector<8x72xbf16>
    %c0_1 = arith.constant 0 : index
    %c0_2 = arith.constant 0 : index
    %1 = vector.load %arg2[%c0_1, %c0_2] : memref<128x72xbf16, #tpu.memory_space<vmem>>, vector<128x72xbf16>
    %cst = arith.constant dense<0.000000e+00> : vector<8x128xf32>
    %2 = tpu.matmul %0, %1, %cst {dimension_numbers = #tpu.dot_dimension_numbers<[1], [1], [0], [0], [0, 0, 1, 0], [], []>} : vector<8x72xbf16>, vector<128x72xbf16>, vector<8x128xf32> -> vector<8x128xf32>
    %c0_3 = arith.constant 0 : index
    %c0_4 = arith.constant 0 : index
    %3 = vector.load %arg3[%c0_3, %c0_4] : memref<8x1xf32, #tpu.memory_space<vmem>>, vector<8x1xf32>
    %4 = vector.broadcast %3 : vector<8x1xf32> to vector<8x128xf32>
    %5 = arith.addf %2, %4 : vector<8x128xf32>
    %cst_5 = arith.constant 0.000000e+00 : f32
    %6 = vector.broadcast %cst_5 : f32 to vector<8x128xf32>
    %7 = arith.maximumf %5, %6 : vector<8x128xf32>
    %c0_6 = arith.constant 0 : index
    %c0_7 = arith.constant 0 : index
    %8 = vector.load %arg4[%c0_6, %c0_7] : memref<8x128xf32, #tpu.memory_space<vmem>>, vector<8x128xf32>
    tpu.vector_store %arg4[%c0_6, %c0_7], %7 {strides = array<i32>} : memref<8x128xf32, #tpu.memory_space<vmem>>, vector<8x128xf32>,
    return
  }
  func.func @transform_0(%arg0: i32) -> (i32, i32) {
    %c0_i32 = arith.constant 0 : i32
    %c0_i32_0 = arith.constant 0 : i32
    %c0_i32_1 = arith.constant 0 : i32
    return %c0_i32, %c0_i32_0 : i32, i32
  }
  func.func @transform_1(%arg0: i32) -> (i32, i32) {
    %c0_i32 = arith.constant 0 : i32
    %c0_i32_0 = arith.constant 0 : i32
    return %arg0, %c0_i32 : i32, i32
  }
  func.func @transform_2(%arg0: i32) -> (i32, i32) {
    %c0_i32 = arith.constant 0 : i32
    %c0_i32_0 = arith.constant 0 : i32
    %c0_i32_1 = arith.constant 0 : i32
    return %c0_i32, %c0_i32_0 : i32, i32
  }
  func.func @transform_3(%arg0: i32) -> (i32, i32) {
    %c0_i32 = arith.constant 0 : i32
    %c0_i32_0 = arith.constant 0 : i32
    return %c0_i32, %arg0 : i32, i32
  }
}

module attributes {stable_mosaic.version = 11 : i64} {
  func.func @_matmul_nt_kernel(%arg0: i32, %arg1: memref<1x72xbf16, #tpu.memory_space<vmem>>, %arg2: memref<512x72xbf16, #tpu.memory_space<vmem>>, %arg3: memref<1x1xf32, #tpu.memory_space<vmem>>, %arg4: memref<1x512xf32, #tpu.memory_space<vmem>>) attributes {dimension_semantics = [#tpu.dimension_semantics<parallel>], iteration_bounds = array<i64: 1>, scalar_prefetch = 0 : i64, scratch_operands = 0 : i64, tpu.core_type = #tpu.core_type<tc>, window_params = [{pipeline_mode = #tpu.pipeline_mode<synchronous>, transform_indices = @transform_0, window_bounds = array<i64: 1, 72>}, {transform_indices = @transform_1, window_bounds = array<i64: 512, 72>}, {pipeline_mode = #tpu.pipeline_mode<synchronous>, transform_indices = @transform_2, window_bounds = array<i64: 1, 1>}, {transform_indices = @transform_3, window_bounds = array<i64: 1, 512>}]} {
    %c0 = arith.constant 0 : index
    %c0_0 = arith.constant 0 : index
    %0 = vector.load %arg1[%c0, %c0_0] : memref<1x72xbf16, #tpu.memory_space<vmem>>, vector<1x72xbf16>
    %c0_1 = arith.constant 0 : index
    %c0_2 = arith.constant 0 : index
    %1 = vector.load %arg2[%c0_1, %c0_2] : memref<512x72xbf16, #tpu.memory_space<vmem>>, vector<512x72xbf16>
    %cst = arith.constant dense<0.000000e+00> : vector<1x512xf32>
    %2 = tpu.matmul %0, %1, %cst {dimension_numbers = #tpu.dot_dimension_numbers<[1], [1], [0], [0], [0, 0, 1, 0], [], []>} : vector<1x72xbf16>, vector<512x72xbf16>, vector<1x512xf32> -> vector<1x512xf32>
    %c0_3 = arith.constant 0 : index
    %c0_4 = arith.constant 0 : index
    %3 = vector.load %arg3[%c0_3, %c0_4] : memref<1x1xf32, #tpu.memory_space<vmem>>, vector<1x1xf32>
    %4 = vector.broadcast %3 : vector<1x1xf32> to vector<1x512xf32>
    %5 = arith.addf %2, %4 : vector<1x512xf32>
    %c0_5 = arith.constant 0 : index
    %c0_6 = arith.constant 0 : index
    %6 = vector.load %arg4[%c0_5, %c0_6] : memref<1x512xf32, #tpu.memory_space<vmem>>, vector<1x512xf32>
    tpu.vector_store %arg4[%c0_5, %c0_6], %5 {strides = array<i32>} : memref<1x512xf32, #tpu.memory_space<vmem>>, vector<1x512xf32>,
    return
  }
  func.func @transform_0(%arg0: i32) -> (i32, i32) {
    %c0_i32 = arith.constant 0 : i32
    %c0_i32_0 = arith.constant 0 : i32
    %c0_i32_1 = arith.constant 0 : i32
    return %c0_i32, %c0_i32_0 : i32, i32
  }
  func.func @transform_1(%arg0: i32) -> (i32, i32) {
    %c0_i32 = arith.constant 0 : i32
    %c0_i32_0 = arith.constant 0 : i32
    return %arg0, %c0_i32 : i32, i32
  }
  func.func @transform_2(%arg0: i32) -> (i32, i32) {
    %c0_i32 = arith.constant 0 : i32
    %c0_i32_0 = arith.constant 0 : i32
    %c0_i32_1 = arith.constant 0 : i32
    return %c0_i32, %c0_i32_0 : i32, i32
  }
  func.func @transform_3(%arg0: i32) -> (i32, i32) {
    %c0_i32 = arith.constant 0 : i32
    %c0_i32_0 = arith.constant 0 : i32
    return %c0_i32, %arg0 : i32, i32
  }
}

module attributes {stable_mosaic.version = 11 : i64} {
  func.func @_paired_nll_kernel(%arg0: i32, %arg1: memref<8x256xf32, #tpu.memory_space<vmem>>, %arg2: memref<8x256xf32, #tpu.memory_space<vmem>>, %arg3: memref<8x1xf32, #tpu.memory_space<vmem>>) attributes {dimension_semantics = [#tpu.dimension_semantics<arbitrary>], iteration_bounds = array<i64: 1>, scalar_prefetch = 0 : i64, scratch_operands = 0 : i64, tpu.core_type = #tpu.core_type<tc>, window_params = [{pipeline_mode = #tpu.pipeline_mode<synchronous>, transform_indices = @transform_0, window_bounds = array<i64: 8, 256>}, {pipeline_mode = #tpu.pipeline_mode<synchronous>, transform_indices = @transform_1, window_bounds = array<i64: 8, 256>}, {pipeline_mode = #tpu.pipeline_mode<synchronous>, transform_indices = @transform_2, window_bounds = array<i64: 8, 1>}]} {
    %c0 = arith.constant 0 : index
    %c0_0 = arith.constant 0 : index
    %0 = vector.load %arg2[%c0, %c0_0] : memref<8x256xf32, #tpu.memory_space<vmem>>, vector<8x256xf32>
    %cst = arith.constant 0.000000e+00 : f32
    %1 = vector.broadcast %cst : f32 to vector<8x256xf32>
    %2 = arith.maximumf %0, %1 : vector<8x256xf32>
    %3 = math.absf %0 : vector<8x256xf32>
    %cst_1 = arith.constant 0.000000e+00 : f32
    %4 = vector.broadcast %cst_1 : f32 to vector<8x256xf32>
    %5 = arith.subf %4, %3 : vector<8x256xf32>
    %6 = math.exp %5 : vector<8x256xf32>
    %7 = math.log1p %6 : vector<8x256xf32>
    %8 = arith.addf %2, %7 : vector<8x256xf32>
    %c0_2 = arith.constant 0 : index
    %c0_3 = arith.constant 0 : index
    %9 = vector.load %arg1[%c0_2, %c0_3] : memref<8x256xf32, #tpu.memory_space<vmem>>, vector<8x256xf32>
    %10 = arith.mulf %9, %0 : vector<8x256xf32>
    %11 = arith.subf %8, %10 : vector<8x256xf32>
    %cst_4 = arith.constant dense<0.000000e+00> : vector<8xf32>
    %12 = vector.multi_reduction <add>, %11, %cst_4 [1] : vector<8x256xf32> to vector<8xf32>
    %13 = vector.shape_cast %12 : vector<8xf32> to vector<8x1xf32>
    %c0_5 = arith.constant 0 : index
    %c0_6 = arith.constant 0 : index
    %14 = vector.load %arg3[%c0_5, %c0_6] : memref<8x1xf32, #tpu.memory_space<vmem>>, vector<8x1xf32>
    tpu.vector_store %arg3[%c0_5, %c0_6], %13 {strides = array<i32>} : memref<8x1xf32, #tpu.memory_space<vmem>>, vector<8x1xf32>,
    return
  }
  func.func @transform_0(%arg0: i32) -> (i32, i32) {
    %c0_i32 = arith.constant 0 : i32
    %c0_i32_0 = arith.constant 0 : i32
    %c0_i32_1 = arith.constant 0 : i32
    return %c0_i32, %c0_i32_0 : i32, i32
  }
  func.func @transform_1(%arg0: i32) -> (i32, i32) {
    %c0_i32 = arith.constant 0 : i32
    %c0_i32_0 = arith.constant 0 : i32
    %c0_i32_1 = arith.constant 0 : i32
    return %c0_i32, %c0_i32_0 : i32, i32
  }
  func.func @transform_2(%arg0: i32) -> (i32, i32) {
    %c0_i32 = arith.constant 0 : i32
    %c0_i32_0 = arith.constant 0 : i32
    %c0_i32_1 = arith.constant 0 : i32
    return %c0_i32, %c0_i32_0 : i32, i32
  }
}

</mosaic_0001>

<llo_original>
// kernel: _lambda_.13
$region0: #{_lambda_.13}
  #allocation0 [shape = 'u32[]', space=smem, size = 0x4, offset = 0x4, fixed_abs, tag = 'smem constant byte address 0x4 - core index']
  #allocation1 [shape = 'u32[72,128]{1,0:T(1,128)}', space=vmem, size = 0x9000, scoped, tag = 'internal scratch']
  %s0 = inlined_call_operand.hbm [shape: bf16[64,32], index: 0, kind: input, shape index: {}]
  %s1 = inlined_call_operand.vmem [shape: bf16[8,32], index: 1, kind: input, shape index: {}]
  %s2 = inlined_call_operand.vmem [shape: f32[64,1], index: 2, kind: input, shape index: {}]
  %s3 = inlined_call_operand.vmem [shape: f32[64,8], index: 3, kind: output, shape index: {}]
  %s4 = sld [smem:[#allocation0]]
  $region26: #{_lambda_.13} parent=0
    _
  %s6 = ssub.s32 1, %s4
  %s7 = scalar_select 0, %s6, %s4
  $region1: #{_lambda_.13} parent=0
    #allocation2 [shape = 'u8[16384]{0}', space=vmem, size = 0x4000, scoped, tag = 'input window, operand 0, single buffered']
    #allocation3 [shape = 's32[1]{0}', space=sflag, size = 0x4, scoped, tag = 'scoped memory for _lambda_.13']
    %8 = vsyncpa [#allocation3], 0
    // Predicated region
    $region2: #{_lambda_.13} parent=1 // pred_check
      _
    $region3: #{_lambda_.13} parent=1 // pred_check_branch
      %10 = sbr.rel (0) target = $region5
    $region4: #{_lambda_.13} parent=1 // pred_region
      %12 = vsyncadd [#allocation3], 0
      %s13 = sshll.u32 %s0, 4
      %s14 = int_to_ptr.hbm [resolvable:$true] %s13
      %s15 = sshll.u32 [#allocation2], 4
      %s16 = int_to_ptr.vmem [resolvable:$true] %s15
      %21 = dma.hbm_to_vmem [thread:$0]  %s14, 512, %s16, [#allocation3], 64, 64, 4
    $region5: #{_lambda_.13} parent=1 // pred_fallthru
      _
    // Predicated region
    $region6: #{_lambda_.13} parent=1 // pred_check
      _
    $region7: #{_lambda_.13} parent=1 // pred_check_branch
      %23 = sbr.rel (0) target = $region9
    $region8: #{_lambda_.13} parent=1 // pred_region
      _
    $region9: #{_lambda_.13} parent=1 // pred_fallthru
      _
    // Predicated region
    $region10: #{_lambda_.13} parent=1 // pred_check
      _
    $region11: #{_lambda_.13} parent=1 // pred_check_branch
      %25 = sbr.rel (0) target = $region13
    $region12: #{_lambda_.13} parent=1 // pred_region
      _
    $region13: #{_lambda_.13} parent=1 // pred_fallthru
      _
    // Predicated region
    $region14: #{_lambda_.13} parent=1 // pred_check
      _
    $region15: #{_lambda_.13} parent=1 // pred_check_branch
      %27 = sbr.rel (0) target = $region17
    $region16: #{_lambda_.13} parent=1 // pred_region
      %29 = dma.done [#allocation3], 512
    $region17: #{_lambda_.13} parent=1 // pred_fallthru
      _
    %v31 = vld [vmem:[#allocation2] sm:$0xf]
    %v32 = vld [vmem:[#allocation2 + $0x4] sm:$0xf]
    %v33 = vld [vmem:[#allocation2 + $0x8] sm:$0xf]
    %v34 = vld [vmem:[#allocation2 + $0xc] sm:$0xf]
    %v35 = vld [vmem:[#allocation2 + $0x10] sm:$0xf]
    %v36 = vld [vmem:[#allocation2 + $0x14] sm:$0xf]
    %v37 = vld [vmem:[#allocation2 + $0x18] sm:$0xf]
    %v38 = vld [vmem:[#allocation2 + $0x1c] sm:$0xf]
    %v39 = vld [vmem:[%s1] sm:$0xf]
    %v40 = vld [vmem:[%s2] sm:$0xff]
    %v41 = vld [vmem:[%s2 + $0x8] sm:$0xff]
    %v42 = vld [vmem:[%s2 + $0x10] sm:$0xff]
    %v43 = vld [vmem:[%s2 + $0x18] sm:$0xff]
    %v44 = vld [vmem:[%s2 + $0x20] sm:$0xff]
    %v45 = vld [vmem:[%s2 + $0x28] sm:$0xff]
    %v46 = vld [vmem:[%s2 + $0x30] sm:$0xff]
    %v47 = vld [vmem:[%s2 + $0x38] sm:$0xff]
    %49 = vset.pattern.permute.xlu0 0
    %50 = vperm.xlu0 %49, %v40
    %v51 = vpop.permute.xlu0 %50
    %54 = vset.pattern.permute.xlu0 0
    %55 = vperm.xlu0 %54, %v41
    %v56 = vpop.permute.xlu0 %55
    %59 = vset.pattern.permute.xlu0 0
    %60 = vperm.xlu0 %59, %v42
    %v61 = vpop.permute.xlu0 %60
    %64 = vset.pattern.permute.xlu0 0
    %65 = vperm.xlu0 %64, %v43
    %v66 = vpop.permute.xlu0 %65
    %69 = vset.pattern.permute.xlu0 0
    %70 = vperm.xlu0 %69, %v44
    %v71 = vpop.permute.xlu0 %70
    %74 = vset.pattern.permute.xlu0 0
    %75 = vperm.xlu0 %74, %v45
    %v76 = vpop.permute.xlu0 %75
    %79 = vset.pattern.permute.xlu0 0
    %80 = vperm.xlu0 %79, %v46
    %v81 = vpop.permute.xlu0 %80
    %84 = vset.pattern.permute.xlu0 0
    %85 = vperm.xlu0 %84, %v47
    %v86 = vpop.permute.xlu0 %85
    %v96 = vunpack.c.l.b16 %v31
    %v97 = vunpack.c.l.b16 %v32
    %v98 = vunpack.c.l.b16 %v33
    %v99 = vunpack.c.l.b16 %v34
    %v100 = vunpack.c.l.b16 %v35
    %v101 = vunpack.c.l.b16 %v36
    %v102 = vunpack.c.l.b16 %v37
    %v103 = vunpack.c.l.b16 %v38
    %v104 = vpack.c.b16 %v97, %v96
    %v105 = vpack.c.b16 %v99, %v98
    %v106 = vpack.c.b16 %v101, %v100
    %v107 = vpack.c.b16 %v103, %v102
    %vm108 = vcmask 261120
    %v110 = vsel %vm108, %v104, 0
    %v113 = vsel %vm108, %v105, 0
    %v116 = vsel %vm108, %v106, 0
    %v119 = vsel %vm108, %v107, 0
    %v122 = vsel %vm108, %v39, 0
    %124 = vmatpush.bf16.xpose.msra.mxu0 0
    %125 = vmatpush.bf16.xpose.msra.mxu0 0
    %126 = vmatpush.bf16.xpose.msra.mxu0 0
    %127 = vmatpush.bf16.xpose.msra.mxu0 0
    %128 = vmatpush.bf16.xpose.msra.mxu0 0
    %129 = vmatpush.bf16.xpose.msra.mxu0 0
    %130 = vmatpush.bf16.xpose.msra.mxu0 0
    %131 = vmatpush.bf16.xpose.msra.mxu0 %v122
    %132 = vmatmul.bf16.gmra.mxu0 %v110
    %v133 = vpop.f32.mrf.mxu0
    %v134 = vadd.f32 %v51, %v133
    %v135 = vpop.f32.mrf.mxu0
    %v136 = vadd.f32 %v56, %v135
    %137 = vmatmul.bf16.gmra.mxu0 %v113
    %v138 = vpop.f32.mrf.mxu0
    %v139 = vadd.f32 %v61, %v138
    %v140 = vpop.f32.mrf.mxu0
    %v141 = vadd.f32 %v66, %v140
    %142 = vmatmul.bf16.gmra.mxu0 %v116
    %v143 = vpop.f32.mrf.mxu0
    %v144 = vadd.f32 %v71, %v143
    %v145 = vpop.f32.mrf.mxu0
    %v146 = vadd.f32 %v76, %v145
    %147 = vmatmul.bf16.gmra.mxu0 %v119
    %v148 = vpop.f32.mrf.mxu0
    %v149 = vadd.f32 %v81, %v148
    %v150 = vpop.f32.mrf.mxu0
    %v151 = vadd.f32 %v86, %v150
    %152 = vdwg.mxu0
    %v153 = vmax.f32 %v134, 0.0
    %v154 = vmax.f32 %v136, 0.0
    %v155 = vmax.f32 %v139, 0.0
    %v156 = vmax.f32 %v141, 0.0
    %v157 = vmax.f32 %v144, 0.0
    %v158 = vmax.f32 %v146, 0.0
    %v159 = vmax.f32 %v149, 0.0
    %v160 = vmax.f32 %v151, 0.0
    %vm161 = vcmask 64512
    %162 = vst.msk [vmem:[%s3] sm:$0xff] %vm161, %v153
    %163 = vst.msk [vmem:[%s3 + $0x8] sm:$0xff] %vm161, %v154
    %164 = vst.msk [vmem:[%s3 + $0x10] sm:$0xff] %vm161, %v155
    %165 = vst.msk [vmem:[%s3 + $0x18] sm:$0xff] %vm161, %v156
    %166 = vst.msk [vmem:[%s3 + $0x20] sm:$0xff] %vm161, %v157
    %167 = vst.msk [vmem:[%s3 + $0x28] sm:$0xff] %vm161, %v158
    %168 = vst.msk [vmem:[%s3 + $0x30] sm:$0xff] %vm161, %v159
    %169 = vst.msk [vmem:[%s3 + $0x38] sm:$0xff] %vm161, %v160
    // Predicated region
    $region18: #{_lambda_.13} parent=1 // pred_check
      _
    $region19: #{_lambda_.13} parent=1 // pred_check_branch
      %171 = sbr.rel (0) target = $region21
    $region20: #{_lambda_.13} parent=1 // pred_region
      _
    $region21: #{_lambda_.13} parent=1 // pred_fallthru
      _
    // Predicated region
    $region22: #{_lambda_.13} parent=1 // pred_check
      _
    $region23: #{_lambda_.13} parent=1 // pred_check_branch
      %173 = sbr.rel (0) target = $region25
    $region24: #{_lambda_.13} parent=1 // pred_region
      _
    $region25: #{_lambda_.13} parent=1 // pred_fallthru
      _
    %174 = vsyncpa [#allocation3], 1

// kernel: _lambda_.14
$region0: #{_lambda_.14}
  #allocation0 [shape = 'u32[]', space=smem, size = 0x4, offset = 0x4, fixed_abs, tag = 'smem constant byte address 0x4 - core index']
  #allocation1 [shape = 'u32[72,128]{1,0:T(1,128)}', space=vmem, size = 0x9000, scoped, tag = 'internal scratch']
  %s0 = inlined_call_operand.vmem [shape: bf16[8,144], index: 0, kind: input, shape index: {}]
  %s1 = inlined_call_operand.vmem [shape: bf16[128,144], index: 1, kind: input, shape index: {}]
  %s2 = inlined_call_operand.vmem [shape: f32[8,1], index: 2, kind: input, shape index: {}]
  %s3 = inlined_call_operand.vmem [shape: f32[8,128], index: 3, kind: output, shape index: {}]
  %s4 = sld [smem:[#allocation0]]
  $region22: #{_lambda_.14} parent=0
    _
  %s6 = ssub.s32 1, %s4
  %s7 = scalar_select 0, %s6, %s4
  // Predicated region
  $region2: #{_lambda_.14} parent=0 // pred_check
    _
  $region3: #{_lambda_.14} parent=0 // pred_check_branch
    %9 = sbr.rel (0) target = $region5
  $region4: #{_lambda_.14} parent=0 // pred_region
    _
  $region5: #{_lambda_.14} parent=0 // pred_fallthru
    _
  // Predicated region
  $region6: #{_lambda_.14} parent=0 // pred_check
    _
  $region7: #{_lambda_.14} parent=0 // pred_check_branch
    %11 = sbr.rel (0) target = $region9
  $region8: #{_lambda_.14} parent=0 // pred_region
    _
  $region9: #{_lambda_.14} parent=0 // pred_fallthru
    _
  // Predicated region
  $region10: #{_lambda_.14} parent=0 // pred_check
    _
  $region11: #{_lambda_.14} parent=0 // pred_check_branch
    %13 = sbr.rel (0) target = $region13
  $region12: #{_lambda_.14} parent=0 // pred_region
    _
  $region13: #{_lambda_.14} parent=0 // pred_fallthru
    _
  %v14 = vld [vmem:[%s0] sm:$0xff]
  %v15 = vld [vmem:[%s1] sm:$0xff]
  %v16 = vld [vmem:[%s1 + $0x8] sm:$0xff]
  %v17 = vld [vmem:[%s1 + $0x10] sm:$0xff]
  %v18 = vld [vmem:[%s1 + $0x18] sm:$0xff]
  %v19 = vld [vmem:[%s1 + $0x20] sm:$0xff]
  %v20 = vld [vmem:[%s1 + $0x28] sm:$0xff]
  %v21 = vld [vmem:[%s1 + $0x30] sm:$0xff]
  %v22 = vld [vmem:[%s1 + $0x38] sm:$0xff]
  %v23 = vld [vmem:[%s1 + $0x40] sm:$0xff]
  %v24 = vld [vmem:[%s1 + $0x48] sm:$0xff]
  %v25 = vld [vmem:[%s1 + $0x50] sm:$0xff]
  %v26 = vld [vmem:[%s1 + $0x58] sm:$0xff]
  %v27 = vld [vmem:[%s1 + $0x60] sm:$0xff]
  %v28 = vld [vmem:[%s1 + $0x68] sm:$0xff]
  %v29 = vld [vmem:[%s1 + $0x70] sm:$0xff]
  %v30 = vld [vmem:[%s1 + $0x78] sm:$0xff]
  %v31 = vld [vmem:[%s2] sm:$0xff]
  %33 = vset.pattern.permute.xlu0 0
  %34 = vperm.xlu0 %33, %v31
  %v35 = vpop.permute.xlu0 %34
  %v38 = vunpack.c.l.b16 %v14
  %v39 = vunpack.c.h.b16 %v14
  %v40 = vpack.c.b16 %v38, %v38
  %v41 = vpack.c.b16 %v39, %v39
  %v59 = vunpack.c.l.b16 %v15
  %v60 = vunpack.c.h.b16 %v15
  %v61 = vunpack.c.l.b16 %v16
  %v62 = vunpack.c.h.b16 %v16
  %v63 = vunpack.c.l.b16 %v17
  %v64 = vunpack.c.h.b16 %v17
  %v65 = vunpack.c.l.b16 %v18
  %v66 = vunpack.c.h.b16 %v18
  %v67 = vunpack.c.l.b16 %v19
  %v68 = vunpack.c.h.b16 %v19
  %v69 = vunpack.c.l.b16 %v20
  %v70 = vunpack.c.h.b16 %v20
  %v71 = vunpack.c.l.b16 %v21
  %v72 = vunpack.c.h.b16 %v21
  %v73 = vunpack.c.l.b16 %v22
  %v74 = vunpack.c.h.b16 %v22
  %v75 = vunpack.c.l.b16 %v23
  %v76 = vunpack.c.h.b16 %v23
  %v77 = vunpack.c.l.b16 %v24
  %v78 = vunpack.c.h.b16 %v24
  %v79 = vunpack.c.l.b16 %v25
  %v80 = vunpack.c.h.b16 %v25
  %v81 = vunpack.c.l.b16 %v26
  %v82 = vunpack.c.h.b16 %v26
  %v83 = vunpack.c.l.b16 %v27
  %v84 = vunpack.c.h.b16 %v27
  %v85 = vunpack.c.l.b16 %v28
  %v86 = vunpack.c.h.b16 %v28
  %v87 = vunpack.c.l.b16 %v29
  %v88 = vunpack.c.h.b16 %v29
  %v89 = vunpack.c.l.b16 %v30
  %v90 = vunpack.c.h.b16 %v30
  %v91 = vpack.c.b16 %v61, %v59
  %v92 = vpack.c.b16 %v62, %v60
  %v93 = vpack.c.b16 %v65, %v63
  %v94 = vpack.c.b16 %v66, %v64
  %v95 = vpack.c.b16 %v69, %v67
  %v96 = vpack.c.b16 %v70, %v68
  %v97 = vpack.c.b16 %v73, %v71
  %v98 = vpack.c.b16 %v74, %v72
  %v99 = vpack.c.b16 %v77, %v75
  %v100 = vpack.c.b16 %v78, %v76
  %v101 = vpack.c.b16 %v81, %v79
  %v102 = vpack.c.b16 %v82, %v80
  %v103 = vpack.c.b16 %v85, %v83
  %v104 = vpack.c.b16 %v86, %v84
  %v105 = vpack.c.b16 %v89, %v87
  %v106 = vpack.c.b16 %v90, %v88
  %vm115 = vcmask 130048
  %v117 = vsel %vm115, %v41, 0
  %v120 = vsel %vm115, %v92, 0
  %v123 = vsel %vm115, %v94, 0
  %v126 = vsel %vm115, %v96, 0
  %v129 = vsel %vm115, %v98, 0
  %v132 = vsel %vm115, %v100, 0
  %v135 = vsel %vm115, %v102, 0
  %v138 = vsel %vm115, %v104, 0
  %v141 = vsel %vm115, %v106, 0
  %143 = vmatpush.bf16.xpose.msra.mxu0 %v105
  %144 = vmatpush.bf16.xpose.msra.mxu0 %v103
  %145 = vmatpush.bf16.xpose.msra.mxu0 %v101
  %146 = vmatpush.bf16.xpose.msra.mxu0 %v99
  %147 = vmatpush.bf16.xpose.msra.mxu0 %v97
  %148 = vmatpush.bf16.xpose.msra.mxu0 %v95
  %149 = vmatpush.bf16.xpose.msra.mxu0 %v93
  %150 = vmatpush.bf16.xpose.msra.mxu0 %v91
  %151 = vmatmul.bf16.gmra.mxu0 %v40
  %v152 = vpop.f32.mrf.mxu0
  %v153 = vadd.f32 %v35, %v152
  %v154 = vpop.f32.mrf.mxu0
  %155 = vdwg.mxu0
  %156 = vmatpush.bf16.xpose.msra.mxu0 %v141
  %157 = vmatpush.bf16.xpose.msra.mxu0 %v138
  %158 = vmatpush.bf16.xpose.msra.mxu0 %v135
  %159 = vmatpush.bf16.xpose.msra.mxu0 %v132
  %160 = vmatpush.bf16.xpose.msra.mxu0 %v129
  %161 = vmatpush.bf16.xpose.msra.mxu0 %v126
  %162 = vmatpush.bf16.xpose.msra.mxu0 %v123
  %163 = vmatpush.bf16.xpose.msra.mxu0 %v120
  %164 = vmatmul.bf16.gmra.mxu0 %v117
  %v165 = vpop.f32.mrf.mxu0
  %v166 = vadd.f32 %v153, %v165
  %v167 = vpop.f32.mrf.mxu0
  %168 = vdwg.mxu0
  %v169 = vmax.f32 %v166, 0.0
  %170 = vst [vmem:[%s3] sm:$0xff] %v169
  // Predicated region
  $region14: #{_lambda_.14} parent=0 // pred_check
    _
  $region15: #{_lambda_.14} parent=0 // pred_check_branch
    %172 = sbr.rel (0) target = $region17
  $region16: #{_lambda_.14} parent=0 // pred_region
    _
  $region17: #{_lambda_.14} parent=0 // pred_fallthru
    _
  // Predicated region
  $region18: #{_lambda_.14} parent=0 // pred_check
    _
  $region19: #{_lambda_.14} parent=0 // pred_check_branch
    %174 = sbr.rel (0) target = $region21
  $region20: #{_lambda_.14} parent=0 // pred_region
    _
  $region21: #{_lambda_.14} parent=0 // pred_fallthru
    _

// kernel: _lambda_.15
$region0: #{_lambda_.15}
  #allocation0 [shape = 'u32[]', space=smem, size = 0x4, offset = 0x4, fixed_abs, tag = 'smem constant byte address 0x4 - core index']
  #allocation1 [shape = 'u32[72,128]{1,0:T(1,128)}', space=vmem, size = 0x9000, scoped, tag = 'internal scratch']
  %s0 = inlined_call_operand.vmem [shape: bf16[8,72], index: 0, kind: input, shape index: {}]
  %s1 = inlined_call_operand.vmem [shape: bf16[512,72], index: 1, kind: input, shape index: {}]
  %s2 = inlined_call_operand.vmem [shape: f32[8,1], index: 2, kind: input, shape index: {}]
  %s3 = inlined_call_operand.vmem [shape: f32[8,512], index: 3, kind: output, shape index: {}]
  %s4 = sld [smem:[#allocation0]]
  $region22: #{_lambda_.15} parent=0
    _
  %s6 = ssub.s32 1, %s4
  %s7 = scalar_select 0, %s6, %s4
  // Predicated region
  $region2: #{_lambda_.15} parent=0 // pred_check
    _
  $region3: #{_lambda_.15} parent=0 // pred_check_branch
    %9 = sbr.rel (0) target = $region5
  $region4: #{_lambda_.15} parent=0 // pred_region
    _
  $region5: #{_lambda_.15} parent=0 // pred_fallthru
    _
  // Predicated region
  $region6: #{_lambda_.15} parent=0 // pred_check
    _
  $region7: #{_lambda_.15} parent=0 // pred_check_branch
    %11 = sbr.rel (0) target = $region9
  $region8: #{_lambda_.15} parent=0 // pred_region
    _
  $region9: #{_lambda_.15} parent=0 // pred_fallthru
    _
  // Predicated region
  $region10: #{_lambda_.15} parent=0 // pred_check
    _
  $region11: #{_lambda_.15} parent=0 // pred_check_branch
    %13 = sbr.rel (0) target = $region13
  $region12: #{_lambda_.15} parent=0 // pred_region
    _
  $region13: #{_lambda_.15} parent=0 // pred_fallthru
    _
  %v14 = vld [vmem:[%s0] sm:$0xf]
  %v15 = vld [vmem:[%s1] sm:$0xf]
  %v16 = vld [vmem:[%s1 + $0x4] sm:$0xf]
  %v17 = vld [vmem:[%s1 + $0x8] sm:$0xf]
  %v18 = vld [vmem:[%s1 + $0xc] sm:$0xf]
  %v19 = vld [vmem:[%s1 + $0x10] sm:$0xf]
  %v20 = vld [vmem:[%s1 + $0x14] sm:$0xf]
  %v21 = vld [vmem:[%s1 + $0x18] sm:$0xf]
  %v22 = vld [vmem:[%s1 + $0x1c] sm:$0xf]
  %v23 = vld [vmem:[%s1 + $0x20] sm:$0xf]
  %v24 = vld [vmem:[%s1 + $0x24] sm:$0xf]
  %v25 = vld [vmem:[%s1 + $0x28] sm:$0xf]
  %v26 = vld [vmem:[%s1 + $0x2c] sm:$0xf]
  %v27 = vld [vmem:[%s1 + $0x30] sm:$0xf]
  %v28 = vld [vmem:[%s1 + $0x34] sm:$0xf]
  %v29 = vld [vmem:[%s1 + $0x38] sm:$0xf]
  %v30 = vld [vmem:[%s1 + $0x3c] sm:$0xf]
  %v31 = vld [vmem:[%s1 + $0x40] sm:$0xf]
  %v32 = vld [vmem:[%s1 + $0x44] sm:$0xf]
  %v33 = vld [vmem:[%s1 + $0x48] sm:$0xf]
  %v34 = vld [vmem:[%s1 + $0x4c] sm:$0xf]
  %v35 = vld [vmem:[%s1 + $0x50] sm:$0xf]
  %v36 = vld [vmem:[%s1 + $0x54] sm:$0xf]
  %v37 = vld [vmem:[%s1 + $0x58] sm:$0xf]
  %v38 = vld [vmem:[%s1 + $0x5c] sm:$0xf]
  %v39 = vld [vmem:[%s1 + $0x60] sm:$0xf]
  %v40 = vld [vmem:[%s1 + $0x64] sm:$0xf]
  %v41 = vld [vmem:[%s1 + $0x68] sm:$0xf]
  %v42 = vld [vmem:[%s1 + $0x6c] sm:$0xf]
  %v43 = vld [vmem:[%s1 + $0x70] sm:$0xf]
  %v44 = vld [vmem:[%s1 + $0x74] sm:$0xf]
  %v45 = vld [vmem:[%s1 + $0x78] sm:$0xf]
  %v46 = vld [vmem:[%s1 + $0x7c] sm:$0xf]
  %v47 = vld [vmem:[%s1 + $0x80] sm:$0xf]
  %v48 = vld [vmem:[%s1 + $0x84] sm:$0xf]
  %v49 = vld [vmem:[%s1 + $0x88] sm:$0xf]
  %v50 = vld [vmem:[%s1 + $0x8c] sm:$0xf]
  %v51 = vld [vmem:[%s1 + $0x90] sm:$0xf]
  %v52 = vld [vmem:[%s1 + $0x94] sm:$0xf]
  %v53 = vld [vmem:[%s1 + $0x98] sm:$0xf]
  %v54 = vld [vmem:[%s1 + $0x9c] sm:$0xf]
  %v55 = vld [vmem:[%s1 + $0xa0] sm:$0xf]
  %v56 = vld [vmem:[%s1 + $0xa4] sm:$0xf]
  %v57 = vld [vmem:[%s1 + $0xa8] sm:$0xf]
  %v58 = vld [vmem:[%s1 + $0xac] sm:$0xf]
  %v59 = vld [vmem:[%s1 + $0xb0] sm:$0xf]
  %v60 = vld [vmem:[%s1 + $0xb4] sm:$0xf]
  %v61 = vld [vmem:[%s1 + $0xb8] sm:$0xf]
  %v62 = vld [vmem:[%s1 + $0xbc] sm:$0xf]
  %v63 = vld [vmem:[%s1 + $0xc0] sm:$0xf]
  %v64 = vld [vmem:[%s1 + $0xc4] sm:$0xf]
  %v65 = vld [vmem:[%s1 + $0xc8] sm:$0xf]
  %v66 = vld [vmem:[%s1 + $0xcc] sm:$0xf]
  %v67 = vld [vmem:[%s1 + $0xd0] sm:$0xf]
  %v68 = vld [vmem:[%s1 + $0xd4] sm:$0xf]
  %v69 = vld [vmem:[%s1 + $0xd8] sm:$0xf]
  %v70 = vld [vmem:[%s1 + $0xdc] sm:$0xf]
  %v71 = vld [vmem:[%s1 + $0xe0] sm:$0xf]
  %v72 = vld [vmem:[%s1 + $0xe4] sm:$0xf]
  %v73 = vld [vmem:[%s1 + $0xe8] sm:$0xf]
  %v74 = vld [vmem:[%s1 + $0xec] sm:$0xf]
  %v75 = vld [vmem:[%s1 + $0xf0] sm:$0xf]
  %v76 = vld [vmem:[%s1 + $0xf4] sm:$0xf]
  %v77 = vld [vmem:[%s1 + $0xf8] sm:$0xf]
  %v78 = vld [vmem:[%s1 + $0xfc] sm:$0xf]
  %v79 = vld [vmem:[%s2] sm:$0xff]
  %81 = vset.pattern.permute.xlu0 0
  %82 = vperm.xlu0 %81, %v79
  %v83 = vpop.permute.xlu0 %82
  %v149 = vunpack.c.l.b16 %v15
  %v150 = vunpack.c.l.b16 %v16
  %v151 = vunpack.c.l.b16 %v17
  %v152 = vunpack.c.l.b16 %v18
  %v153 = vunpack.c.l.b16 %v19
  %v154 = vunpack.c.l.b16 %v20
  %v155 = vunpack.c.l.b16 %v21
  %v156 = vunpack.c.l.b16 %v22
  %v157 = vunpack.c.l.b16 %v23
  %v158 = vunpack.c.l.b16 %v24
  %v159 = vunpack.c.l.b16 %v25
  %v160 = vunpack.c.l.b16 %v26
  %v161 = vunpack.c.l.b16 %v27
  %v162 = vunpack.c.l.b16 %v28
  %v163 = vunpack.c.l.b16 %v29
  %v164 = vunpack.c.l.b16 %v30
  %v165 = vunpack.c.l.b16 %v31
  %v166 = vunpack.c.l.b16 %v32
  %v167 = vunpack.c.l.b16 %v33
  %v168 = vunpack.c.l.b16 %v34
  %v169 = vunpack.c.l.b16 %v35
  %v170 = vunpack.c.l.b16 %v36
  %v171 = vunpack.c.l.b16 %v37
  %v172 = vunpack.c.l.b16 %v38
  %v173 = vunpack.c.l.b16 %v39
  %v174 = vunpack.c.l.b16 %v40
  %v175 = vunpack.c.l.b16 %v41
  %v176 = vunpack.c.l.b16 %v42
  %v177 = vunpack.c.l.b16 %v43
  %v178 = vunpack.c.l.b16 %v44
  %v179 = vunpack.c.l.b16 %v45
  %v180 = vunpack.c.l.b16 %v46
  %v181 = vunpack.c.l.b16 %v47
  %v182 = vunpack.c.l.b16 %v48
  %v183 = vunpack.c.l.b16 %v49
  %v184 = vunpack.c.l.b16 %v50
  %v185 = vunpack.c.l.b16 %v51
  %v186 = vunpack.c.l.b16 %v52
  %v187 = vunpack.c.l.b16 %v53
  %v188 = vunpack.c.l.b16 %v54
  %v189 = vunpack.c.l.b16 %v55
  %v190 = vunpack.c.l.b16 %v56
  %v191 = vunpack.c.l.b16 %v57
  %v192 = vunpack.c.l.b16 %v58
  %v193 = vunpack.c.l.b16 %v59
  %v194 = vunpack.c.l.b16 %v60
  %v195 = vunpack.c.l.b16 %v61
  %v196 = vunpack.c.l.b16 %v62
  %v197 = vunpack.c.l.b16 %v63
  %v198 = vunpack.c.l.b16 %v64
  %v199 = vunpack.c.l.b16 %v65
  %v200 = vunpack.c.l.b16 %v66
  %v201 = vunpack.c.l.b16 %v67
  %v202 = vunpack.c.l.b16 %v68
  %v203 = vunpack.c.l.b16 %v69
  %v204 = vunpack.c.l.b16 %v70
  %v205 = vunpack.c.l.b16 %v71
  %v206 = vunpack.c.l.b16 %v72
  %v207 = vunpack.c.l.b16 %v73
  %v208 = vunpack.c.l.b16 %v74
  %v209 = vunpack.c.l.b16 %v75
  %v210 = vunpack.c.l.b16 %v76
  %v211 = vunpack.c.l.b16 %v77
  %v212 = vunpack.c.l.b16 %v78
  %v213 = vpack.c.b16 %v150, %v149
  %v214 = vpack.c.b16 %v152, %v151
  %v215 = vpack.c.b16 %v154, %v153
  %v216 = vpack.c.b16 %v156, %v155
  %v217 = vpack.c.b16 %v158, %v157
  %v218 = vpack.c.b16 %v160, %v159
  %v219 = vpack.c.b16 %v162, %v161
  %v220 = vpack.c.b16 %v164, %v163
  %v221 = vpack.c.b16 %v166, %v165
  %v222 = vpack.c.b16 %v168, %v167
  %v223 = vpack.c.b16 %v170, %v169
  %v224 = vpack.c.b16 %v172, %v171
  %v225 = vpack.c.b16 %v174, %v173
  %v226 = vpack.c.b16 %v176, %v175
  %v227 = vpack.c.b16 %v178, %v177
  %v228 = vpack.c.b16 %v180, %v179
  %v229 = vpack.c.b16 %v182, %v181
  %v230 = vpack.c.b16 %v184, %v183
  %v231 = vpack.c.b16 %v186, %v185
  %v232 = vpack.c.b16 %v188, %v187
  %v233 = vpack.c.b16 %v190, %v189
  %v234 = vpack.c.b16 %v192, %v191
  %v235 = vpack.c.b16 %v194, %v193
  %v236 = vpack.c.b16 %v196, %v195
  %v237 = vpack.c.b16 %v198, %v197
  %v238 = vpack.c.b16 %v200, %v199
  %v239 = vpack.c.b16 %v202, %v201
  %v240 = vpack.c.b16 %v204, %v203
  %v241 = vpack.c.b16 %v206, %v205
  %v242 = vpack.c.b16 %v208, %v207
  %v243 = vpack.c.b16 %v210, %v209
  %v244 = vpack.c.b16 %v212, %v211
  %vm245 = vcmask 588800
  %v247 = vsel %vm245, %v14, 0
  %v250 = vsel %vm245, %v213, 0
  %v253 = vsel %vm245, %v214, 0
  %v256 = vsel %vm245, %v215, 0
  %v259 = vsel %vm245, %v216, 0
  %v262 = vsel %vm245, %v217, 0
  %v265 = vsel %vm245, %v218, 0
  %v268 = vsel %vm245, %v219, 0
  %v271 = vsel %vm245, %v220, 0
  %v274 = vsel %vm245, %v221, 0
  %v277 = vsel %vm245, %v222, 0
  %v280 = vsel %vm245, %v223, 0
  %v283 = vsel %vm245, %v224, 0
  %v286 = vsel %vm245, %v225, 0
  %v289 = vsel %vm245, %v226, 0
  %v292 = vsel %vm245, %v227, 0
  %v295 = vsel %vm245, %v228, 0
  %v298 = vsel %vm245, %v229, 0
  %v301 = vsel %vm245, %v230, 0
  %v304 = vsel %vm245, %v231, 0
  %v307 = vsel %vm245, %v232, 0
  %v310 = vsel %vm245, %v233, 0
  %v313 = vsel %vm245, %v234, 0
  %v316 = vsel %vm245, %v235, 0
  %v319 = vsel %vm245, %v236, 0
  %v322 = vsel %vm245, %v237, 0
  %v325 = vsel %vm245, %v238, 0
  %v328 = vsel %vm245, %v239, 0
  %v331 = vsel %vm245, %v240, 0
  %v334 = vsel %vm245, %v241, 0
  %v337 = vsel %vm245, %v242, 0
  %v340 = vsel %vm245, %v243, 0
  %v343 = vsel %vm245, %v244, 0
  %345 = vmatpush.bf16.xpose.msra.mxu0 %v271
  %346 = vmatpush.bf16.xpose.msra.mxu0 %v268
  %347 = vmatpush.bf16.xpose.msra.mxu0 %v265
  %348 = vmatpush.bf16.xpose.msra.mxu0 %v262
  %349 = vmatpush.bf16.xpose.msra.mxu0 %v259
  %350 = vmatpush.bf16.xpose.msra.mxu0 %v256
  %351 = vmatpush.bf16.xpose.msra.mxu0 %v253
  %352 = vmatpush.bf16.xpose.msra.mxu0 %v250
  %353 = vmatmul.bf16.gmra.mxu0 %v247
  %v354 = vpop.f32.mrf.mxu0
  %v355 = vadd.f32 %v83, %v354
  %v356 = vpop.f32.mrf.mxu0
  %357 = vdwg.mxu0
  %358 = vmatpush.bf16.xpose.msra.mxu0 %v295
  %359 = vmatpush.bf16.xpose.msra.mxu0 %v292
  %360 = vmatpush.bf16.xpose.msra.mxu0 %v289
  %361 = vmatpush.bf16.xpose.msra.mxu0 %v286
  %362 = vmatpush.bf16.xpose.msra.mxu0 %v283
  %363 = vmatpush.bf16.xpose.msra.mxu0 %v280
  %364 = vmatpush.bf16.xpose.msra.mxu0 %v277
  %365 = vmatpush.bf16.xpose.msra.mxu0 %v274
  %366 = vmatmul.bf16.gmra.mxu0 %v247
  %v367 = vpop.f32.mrf.mxu0
  %v368 = vadd.f32 %v83, %v367
  %v369 = vpop.f32.mrf.mxu0
  %370 = vdwg.mxu0
  %371 = vmatpush.bf16.xpose.msra.mxu0 %v319
  %372 = vmatpush.bf16.xpose.msra.mxu0 %v316
  %373 = vmatpush.bf16.xpose.msra.mxu0 %v313
  %374 = vmatpush.bf16.xpose.msra.mxu0 %v310
  %375 = vmatpush.bf16.xpose.msra.mxu0 %v307
  %376 = vmatpush.bf16.xpose.msra.mxu0 %v304
  %377 = vmatpush.bf16.xpose.msra.mxu0 %v301
  %378 = vmatpush.bf16.xpose.msra.mxu0 %v298
  %379 = vmatmul.bf16.gmra.mxu0 %v247
  %v380 = vpop.f32.mrf.mxu0
  %v381 = vadd.f32 %v83, %v380
  %v382 = vpop.f32.mrf.mxu0
  %383 = vdwg.mxu0
  %384 = vmatpush.bf16.xpose.msra.mxu0 %v343
  %385 = vmatpush.bf16.xpose.msra.mxu0 %v340
  %386 = vmatpush.bf16.xpose.msra.mxu0 %v337
  %387 = vmatpush.bf16.xpose.msra.mxu0 %v334
  %388 = vmatpush.bf16.xpose.msra.mxu0 %v331
  %389 = vmatpush.bf16.xpose.msra.mxu0 %v328
  %390 = vmatpush.bf16.xpose.msra.mxu0 %v325
  %391 = vmatpush.bf16.xpose.msra.mxu0 %v322
  %392 = vmatmul.bf16.gmra.mxu0 %v247
  %v393 = vpop.f32.mrf.mxu0
  %v394 = vadd.f32 %v83, %v393
  %v395 = vpop.f32.mrf.mxu0
  %396 = vdwg.mxu0
  %v397 = vmax.f32 %v355, 0.0
  %v398 = vmax.f32 %v368, 0.0
  %v399 = vmax.f32 %v381, 0.0
  %v400 = vmax.f32 %v394, 0.0
  %401 = vst [vmem:[%s3] sm:$0xff] %v397
  %402 = vst [vmem:[%s3 + $0x8] sm:$0xff] %v398
  %403 = vst [vmem:[%s3 + $0x10] sm:$0xff] %v399
  %404 = vst [vmem:[%s3 + $0x18] sm:$0xff] %v400
  // Predicated region
  $region14: #{_lambda_.15} parent=0 // pred_check
    _
  $region15: #{_lambda_.15} parent=0 // pred_check_branch
    %406 = sbr.rel (0) target = $region17
  $region16: #{_lambda_.15} parent=0 // pred_region
    _
  $region17: #{_lambda_.15} parent=0 // pred_fallthru
    _
  // Predicated region
  $region18: #{_lambda_.15} parent=0 // pred_check
    _
  $region19: #{_lambda_.15} parent=0 // pred_check_branch
    %408 = sbr.rel (0) target = $region21
  $region20: #{_lambda_.15} parent=0 // pred_region
    _
  $region21: #{_lambda_.15} parent=0 // pred_fallthru
    _

// kernel: _lambda_.16
$region0: #{_lambda_.16}
  #allocation0 [shape = 'u32[]', space=smem, size = 0x4, offset = 0x4, fixed_abs, tag = 'smem constant byte address 0x4 - core index']
  #allocation1 [shape = 'u32[72,128]{1,0:T(1,128)}', space=vmem, size = 0x9000, scoped, tag = 'internal scratch']
  %s0 = inlined_call_operand.vmem [shape: bf16[8,72], index: 0, kind: input, shape index: {}]
  %s1 = inlined_call_operand.vmem [shape: bf16[2048,72], index: 1, kind: input, shape index: {}]
  %s2 = inlined_call_operand.vmem [shape: f32[8,1], index: 2, kind: input, shape index: {}]
  %s3 = inlined_call_operand.vmem [shape: f32[8,2048], index: 3, kind: output, shape index: {}]
  %s4 = sld [smem:[#allocation0]]
  $region45: #{_lambda_.16} parent=0
    _
  %s6 = ssub.s32 1, %s4
  %s7 = scalar_select 0, %s6, %s4
  loop: start=0, step=1, limit=6
  $region2: #{_lambda_.16} parent=0 // loop_pre_header
    _
  $region3: #{_lambda_.16} parent=0 // loop_header
    %s9 = sphi 0, %s13
    %p10 = scmp.ge.s32.totalorder %s9, 6
    %s17 = sphi 0, %s17
    %s19 = sphi 0, %s17
    %s20 = sphi 0, %s19
    %s34 = sphi 0, %s20
    %s40 = sphi 0, %s42
    %s43 = sphi 0, %s40
    %s44 = sphi 0, %s43
    %s60 = sphi 0, %s44
    %s64 = sphi 0, %s64
    %s66 = sphi 0, %s64
    %s67 = sphi 0, %s66
    %s81 = sphi 0, %s67
    %s87 = sphi 0, %s89
    %s90 = sphi 0, %s87
    %s91 = sphi 0, %s90
    %s107 = sphi 0, %s91
  $region4: #{_lambda_.16} parent=0 // loop_header_branch
    %12 = sbr.rel (%p10) target = $region8
  $region5: #{_lambda_.16} parent=0 // loop_body
    %s14 = ssub.s32 %s9, 1
    %s15 = ssub.s32 %s9, 2
    %s16 = sadd.s32 %s9, 1
    %s18 = sadd.s32 %s17, 1
    %p21 = scmp.eq.s32.totalorder %s9, 3
    %p22 = scmp.ne.s32.totalorder %s17, %s19
    %p23 = scmp.eq.s32.totalorder %s9, 0
    %p24 = por %p22, %p23
    %p25 = scmp.ne.s32.totalorder %s17, %s19
    %p26 = scmp.eq.s32.totalorder %s14, 3
    %p27 = por %p25, %p26
    %p28 = scmp.ne.s32.totalorder %s19, %s20
    %p29 = scmp.eq.s32.totalorder %s14, 0
    %p30 = por %p28, %p29
    %p31 = scmp.ne.s32.totalorder %s19, %s20
    %p32 = scmp.eq.s32.totalorder %s15, 3
    %p33 = por %p31, %p32
    %p35 = scmp.ne.s32.totalorder %s20, %s34
    %p36 = scmp.eq.s32.totalorder %s15, 0
    %p37 = por %p35, %p36
    %s38 = ssub.s32 %s9, %s16
    %p39 = scmp.eq.s32.totalorder %s38, 0
    %s41 = sadd.s32 %s40, 1
    %s42 = scalar_select %p39, %s40, %s41
    %p45 = pneg %p39
    %p46 = scmp.eq.s32.totalorder %s9, 3
    %p47 = por %p45, %p46
    %p48 = scmp.ne.s32.totalorder %s40, %s43
    %p49 = scmp.eq.s32.totalorder %s9, 0
    %p50 = por %p48, %p49
    %p51 = scmp.ne.s32.totalorder %s40, %s43
    %p52 = scmp.eq.s32.totalorder %s14, 3
    %p53 = por %p51, %p52
    %p54 = scmp.ne.s32.totalorder %s43, %s44
    %p55 = scmp.eq.s32.totalorder %s14, 0
    %p56 = por %p54, %p55
    %p57 = scmp.ne.s32.totalorder %s43, %s44
    %p58 = scmp.eq.s32.totalorder %s15, 3
    %p59 = por %p57, %p58
    %p61 = scmp.ne.s32.totalorder %s44, %s60
    %p62 = scmp.eq.s32.totalorder %s15, 0
    %p63 = por %p61, %p62
    %s65 = sadd.s32 %s64, 1
    %p68 = scmp.eq.s32.totalorder %s9, 3
    %p69 = scmp.ne.s32.totalorder %s64, %s66
    %p70 = scmp.eq.s32.totalorder %s9, 0
    %p71 = por %p69, %p70
    %p72 = scmp.ne.s32.totalorder %s64, %s66
    %p73 = scmp.eq.s32.totalorder %s14, 3
    %p74 = por %p72, %p73
    %p75 = scmp.ne.s32.totalorder %s66, %s67
    %p76 = scmp.eq.s32.totalorder %s14, 0
    %p77 = por %p75, %p76
    %p78 = scmp.ne.s32.totalorder %s66, %s67
    %p79 = scmp.eq.s32.totalorder %s15, 3
    %p80 = por %p78, %p79
    %p82 = scmp.ne.s32.totalorder %s67, %s81
    %p83 = scmp.eq.s32.totalorder %s15, 0
    %p84 = por %p82, %p83
    %s85 = ssub.s32 %s9, %s16
    %p86 = scmp.eq.s32.totalorder %s85, 0
    %s88 = sadd.s32 %s87, 1
    %s89 = scalar_select %p86, %s87, %s88
    %p92 = pneg %p86
    %p93 = scmp.eq.s32.totalorder %s9, 3
    %p94 = por %p92, %p93
    %p95 = scmp.ne.s32.totalorder %s87, %s90
    %p96 = scmp.eq.s32.totalorder %s9, 0
    %p97 = por %p95, %p96
    %p98 = scmp.ne.s32.totalorder %s87, %s90
    %p99 = scmp.eq.s32.totalorder %s14, 3
    %p100 = por %p98, %p99
    %p101 = scmp.ne.s32.totalorder %s90, %s91
    %p102 = scmp.eq.s32.totalorder %s14, 0
    %p103 = por %p101, %p102
    %p104 = scmp.ne.s32.totalorder %s90, %s91
    %p105 = scmp.eq.s32.totalorder %s15, 3
    %p106 = por %p104, %p105
    %p108 = scmp.ne.s32.totalorder %s91, %s107
    %p109 = scmp.eq.s32.totalorder %s15, 0
    %p110 = por %p108, %p109
    %p111 = scmp.le.s32.totalorder 1, %s9
    %p112 = scmp.lt.s32.totalorder %s9, 5
    %p113 = pnand %p111, %p112
    %p114 = pneg %p113
    // Predicated region
    $region9: #{_lambda_.16} parent=5 // pred_check
      _
    $region10: #{_lambda_.16} parent=5 // pred_check_branch
      %116 = sbr.rel (%p113) target = $region12
    $region11: #{_lambda_.16} parent=5 // pred_region
      %s117 = ssub.s32 %s9, 1
      // Predicated region
      $region13: #{_lambda_.16} parent=11 // pred_check
        %p118 = pneg %p30
      $region14: #{_lambda_.16} parent=11 // pred_check_branch
        %120 = sbr.rel (%p118) target = $region16
      $region15: #{_lambda_.16} parent=11 // pred_region
        _
      $region16: #{_lambda_.16} parent=11 // pred_fallthru
        _
      // Predicated region
      $region17: #{_lambda_.16} parent=11 // pred_check
        %p121 = pneg %p77
      $region18: #{_lambda_.16} parent=11 // pred_check_branch
        %123 = sbr.rel (%p121) target = $region20
      $region19: #{_lambda_.16} parent=11 // pred_region
        _
      $region20: #{_lambda_.16} parent=11 // pred_fallthru
        _
    $region12: #{_lambda_.16} parent=5 // pred_fallthru
      _
    %p124 = scmp.lt.s32.totalorder %s9, 4
    // Predicated region
    $region21: #{_lambda_.16} parent=5 // pred_check
      %p125 = pneg %p124
    $region22: #{_lambda_.16} parent=5 // pred_check_branch
      %127 = sbr.rel (%p125) target = $region24
    $region23: #{_lambda_.16} parent=5 // pred_region
      // Predicated region
      $region25: #{_lambda_.16} parent=23 // pred_check
        %p128 = pneg %p50
      $region26: #{_lambda_.16} parent=23 // pred_check_branch
        %130 = sbr.rel (%p128) target = $region28
      $region27: #{_lambda_.16} parent=23 // pred_region
        %s131 = smul.u32 64, %s9
        %p132 = scmp.lt.s32.totalorder %s131, 255
        %s133 = scalar_select %p132, %s131, 255
        %s134 = smul.addr %s133, 4
        %s135 = scalar_lea.vmem %s1, %s134
        %s136 = smul.u32 64, %s9
      $region28: #{_lambda_.16} parent=23 // pred_fallthru
        _
    $region24: #{_lambda_.16} parent=5 // pred_fallthru
      _
    %p137 = scmp.le.s32.totalorder 1, %s9
    %p138 = scmp.lt.s32.totalorder %s9, 5
    %p139 = pnand %p137, %p138
    %p140 = pneg %p139
    // Predicated region
    $region29: #{_lambda_.16} parent=5 // pred_check
      _
    $region30: #{_lambda_.16} parent=5 // pred_check_branch
      %142 = sbr.rel (%p139) target = $region32
    $region31: #{_lambda_.16} parent=5 // pred_region
      %s143 = ssub.s32 %s9, 1
      %p144 = pneg %p30
      %p145 = pneg %p27
      %s146 = smul.u32 64, %s14
      %p147 = scmp.lt.s32.totalorder %s146, 255
      %s148 = scalar_select %p147, %s146, 255
      %s149 = smul.addr %s148, 4
      %s150 = scalar_lea.vmem %s1, %s149
      %p151 = pneg %p56
      %p152 = pneg %p53
      %p153 = pneg %p77
      %p154 = pneg %p74
      %p155 = pneg %p103
      %p156 = pneg %p100
      %s157 = smul.u32 4, %s14
      %p158 = scmp.lt.s32.totalorder %s157, 15
      %s159 = scalar_select %p158, %s157, 15
      %s160 = smul.addr %s159, 8
      %s161 = scalar_lea.vmem %s3, %s160
      %s162 = smul.u32 64, %s14
      %p163 = scmp.lt.s32.totalorder %s162, 255
      %s164 = scalar_select %p163, %s162, 255
      %s165 = smul.addr %s164, 4
      %s166 = scalar_lea.vmem %s1, %s165
      %s167 = smul.u32 64, %s14
      %s168 = smul.u32 4, %s14
      %p169 = scmp.lt.s32.totalorder %s168, 15
      %s170 = scalar_select %p169, %s168, 15
      %s171 = smul.addr %s170, 8
      %s172 = scalar_lea.vmem %s3, %s171
      %s173 = smul.u32 4, %s14
      %v174 = vld [vmem:[%s0] sm:$0xf]
      %v175 = vld [vmem:[%s166] sm:$0xf]
      %v176 = vld [vmem:[%s166 + $0x4] sm:$0xf]
      %v177 = vld [vmem:[%s166 + $0x8] sm:$0xf]
      %v178 = vld [vmem:[%s166 + $0xc] sm:$0xf]
      %v179 = vld [vmem:[%s166 + $0x10] sm:$0xf]
      %v180 = vld [vmem:[%s166 + $0x14] sm:$0xf]
      %v181 = vld [vmem:[%s166 + $0x18] sm:$0xf]
      %v182 = vld [vmem:[%s166 + $0x1c] sm:$0xf]
      %v183 = vld [vmem:[%s166 + $0x20] sm:$0xf]
      %v184 = vld [vmem:[%s166 + $0x24] sm:$0xf]
      %v185 = vld [vmem:[%s166 + $0x28] sm:$0xf]
      %v186 = vld [vmem:[%s166 + $0x2c] sm:$0xf]
      %v187 = vld [vmem:[%s166 + $0x30] sm:$0xf]
      %v188 = vld [vmem:[%s166 + $0x34] sm:$0xf]
      %v189 = vld [vmem:[%s166 + $0x38] sm:$0xf]
      %v190 = vld [vmem:[%s166 + $0x3c] sm:$0xf]
      %v191 = vld [vmem:[%s166 + $0x40] sm:$0xf]
      %v192 = vld [vmem:[%s166 + $0x44] sm:$0xf]
      %v193 = vld [vmem:[%s166 + $0x48] sm:$0xf]
      %v194 = vld [vmem:[%s166 + $0x4c] sm:$0xf]
      %v195 = vld [vmem:[%s166 + $0x50] sm:$0xf]
      %v196 = vld [vmem:[%s166 + $0x54] sm:$0xf]
      %v197 = vld [vmem:[%s166 + $0x58] sm:$0xf]
      %v198 = vld [vmem:[%s166 + $0x5c] sm:$0xf]
      %v199 = vld [vmem:[%s166 + $0x60] sm:$0xf]
      %v200 = vld [vmem:[%s166 + $0x64] sm:$0xf]
      %v201 = vld [vmem:[%s166 + $0x68] sm:$0xf]
      %v202 = vld [vmem:[%s166 + $0x6c] sm:$0xf]
      %v203 = vld [vmem:[%s166 + $0x70] sm:$0xf]
      %v204 = vld [vmem:[%s166 + $0x74] sm:$0xf]
      %v205 = vld [vmem:[%s166 + $0x78] sm:$0xf]
      %v206 = vld [vmem:[%s166 + $0x7c] sm:$0xf]
      %v207 = vld [vmem:[%s166 + $0x80] sm:$0xf]
      %v208 = vld [vmem:[%s166 + $0x84] sm:$0xf]
      %v209 = vld [vmem:[%s166 + $0x88] sm:$0xf]
      %v210 = vld [vmem:[%s166 + $0x8c] sm:$0xf]
      %v211 = vld [vmem:[%s166 + $0x90] sm:$0xf]
      %v212 = vld [vmem:[%s166 + $0x94] sm:$0xf]
      %v213 = vld [vmem:[%s166 + $0x98] sm:$0xf]
      %v214 = vld [vmem:[%s166 + $0x9c] sm:$0xf]
      %v215 = vld [vmem:[%s166 + $0xa0] sm:$0xf]
      %v216 = vld [vmem:[%s166 + $0xa4] sm:$0xf]
      %v217 = vld [vmem:[%s166 + $0xa8] sm:$0xf]
      %v218 = vld [vmem:[%s166 + $0xac] sm:$0xf]
      %v219 = vld [vmem:[%s166 + $0xb0] sm:$0xf]
      %v220 = vld [vmem:[%s166 + $0xb4] sm:$0xf]
      %v221 = vld [vmem:[%s166 + $0xb8] sm:$0xf]
      %v222 = vld [vmem:[%s166 + $0xbc] sm:$0xf]
      %v223 = vld [vmem:[%s166 + $0xc0] sm:$0xf]
      %v224 = vld [vmem:[%s166 + $0xc4] sm:$0xf]
      %v225 = vld [vmem:[%s166 + $0xc8] sm:$0xf]
      %v226 = vld [vmem:[%s166 + $0xcc] sm:$0xf]
      %v227 = vld [vmem:[%s166 + $0xd0] sm:$0xf]
      %v228 = vld [vmem:[%s166 + $0xd4] sm:$0xf]
      %v229 = vld [vmem:[%s166 + $0xd8] sm:$0xf]
      %v230 = vld [vmem:[%s166 + $0xdc] sm:$0xf]
      %v231 = vld [vmem:[%s166 + $0xe0] sm:$0xf]
      %v232 = vld [vmem:[%s166 + $0xe4] sm:$0xf]
      %v233 = vld [vmem:[%s166 + $0xe8] sm:$0xf]
      %v234 = vld [vmem:[%s166 + $0xec] sm:$0xf]
      %v235 = vld [vmem:[%s166 + $0xf0] sm:$0xf]
      %v236 = vld [vmem:[%s166 + $0xf4] sm:$0xf]
      %v237 = vld [vmem:[%s166 + $0xf8] sm:$0xf]
      %v238 = vld [vmem:[%s166 + $0xfc] sm:$0xf]
      %v239 = vld [vmem:[%s2] sm:$0xff]
      %241 = vset.pattern.permute.xlu0 0
      %242 = vperm.xlu0 %241, %v239
      %v243 = vpop.permute.xlu0 %242
      %v309 = vunpack.c.l.b16 %v175
      %v310 = vunpack.c.l.b16 %v176
      %v311 = vunpack.c.l.b16 %v177
      %v312 = vunpack.c.l.b16 %v178
      %v313 = vunpack.c.l.b16 %v179
      %v314 = vunpack.c.l.b16 %v180
      %v315 = vunpack.c.l.b16 %v181
      %v316 = vunpack.c.l.b16 %v182
      %v317 = vunpack.c.l.b16 %v183
      %v318 = vunpack.c.l.b16 %v184
      %v319 = vunpack.c.l.b16 %v185
      %v320 = vunpack.c.l.b16 %v186
      %v321 = vunpack.c.l.b16 %v187
      %v322 = vunpack.c.l.b16 %v188
      %v323 = vunpack.c.l.b16 %v189
      %v324 = vunpack.c.l.b16 %v190
      %v325 = vunpack.c.l.b16 %v191
      %v326 = vunpack.c.l.b16 %v192
      %v327 = vunpack.c.l.b16 %v193
      %v328 = vunpack.c.l.b16 %v194
      %v329 = vunpack.c.l.b16 %v195
      %v330 = vunpack.c.l.b16 %v196
      %v331 = vunpack.c.l.b16 %v197
      %v332 = vunpack.c.l.b16 %v198
      %v333 = vunpack.c.l.b16 %v199
      %v334 = vunpack.c.l.b16 %v200
      %v335 = vunpack.c.l.b16 %v201
      %v336 = vunpack.c.l.b16 %v202
      %v337 = vunpack.c.l.b16 %v203
      %v338 = vunpack.c.l.b16 %v204
      %v339 = vunpack.c.l.b16 %v205
      %v340 = vunpack.c.l.b16 %v206
      %v341 = vunpack.c.l.b16 %v207
      %v342 = vunpack.c.l.b16 %v208
      %v343 = vunpack.c.l.b16 %v209
      %v344 = vunpack.c.l.b16 %v210
      %v345 = vunpack.c.l.b16 %v211
      %v346 = vunpack.c.l.b16 %v212
      %v347 = vunpack.c.l.b16 %v213
      %v348 = vunpack.c.l.b16 %v214
      %v349 = vunpack.c.l.b16 %v215
      %v350 = vunpack.c.l.b16 %v216
      %v351 = vunpack.c.l.b16 %v217
      %v352 = vunpack.c.l.b16 %v218
      %v353 = vunpack.c.l.b16 %v219
      %v354 = vunpack.c.l.b16 %v220
      %v355 = vunpack.c.l.b16 %v221
      %v356 = vunpack.c.l.b16 %v222
      %v357 = vunpack.c.l.b16 %v223
      %v358 = vunpack.c.l.b16 %v224
      %v359 = vunpack.c.l.b16 %v225
      %v360 = vunpack.c.l.b16 %v226
      %v361 = vunpack.c.l.b16 %v227
      %v362 = vunpack.c.l.b16 %v228
      %v363 = vunpack.c.l.b16 %v229
      %v364 = vunpack.c.l.b16 %v230
      %v365 = vunpack.c.l.b16 %v231
      %v366 = vunpack.c.l.b16 %v232
      %v367 = vunpack.c.l.b16 %v233
      %v368 = vunpack.c.l.b16 %v234
      %v369 = vunpack.c.l.b16 %v235
      %v370 = vunpack.c.l.b16 %v236
      %v371 = vunpack.c.l.b16 %v237
      %v372 = vunpack.c.l.b16 %v238
      %v373 = vpack.c.b16 %v310, %v309
      %v374 = vpack.c.b16 %v312, %v311
      %v375 = vpack.c.b16 %v314, %v313
      %v376 = vpack.c.b16 %v316, %v315
      %v377 = vpack.c.b16 %v318, %v317
      %v378 = vpack.c.b16 %v320, %v319
      %v379 = vpack.c.b16 %v322, %v321
      %v380 = vpack.c.b16 %v324, %v323
      %v381 = vpack.c.b16 %v326, %v325
      %v382 = vpack.c.b16 %v328, %v327
      %v383 = vpack.c.b16 %v330, %v329
      %v384 = vpack.c.b16 %v332, %v331
      %v385 = vpack.c.b16 %v334, %v333
      %v386 = vpack.c.b16 %v336, %v335
      %v387 = vpack.c.b16 %v338, %v337
      %v388 = vpack.c.b16 %v340, %v339
      %v389 = vpack.c.b16 %v342, %v341
      %v390 = vpack.c.b16 %v344, %v343
      %v391 = vpack.c.b16 %v346, %v345
      %v392 = vpack.c.b16 %v348, %v347
      %v393 = vpack.c.b16 %v350, %v349
      %v394 = vpack.c.b16 %v352, %v351
      %v395 = vpack.c.b16 %v354, %v353
      %v396 = vpack.c.b16 %v356, %v355
      %v397 = vpack.c.b16 %v358, %v357
      %v398 = vpack.c.b16 %v360, %v359
      %v399 = vpack.c.b16 %v362, %v361
      %v400 = vpack.c.b16 %v364, %v363
      %v401 = vpack.c.b16 %v366, %v365
      %v402 = vpack.c.b16 %v368, %v367
      %v403 = vpack.c.b16 %v370, %v369
      %v404 = vpack.c.b16 %v372, %v371
      %vm405 = vcmask 588800
      %v407 = vsel %vm405, %v174, 0
      %v410 = vsel %vm405, %v373, 0
      %v413 = vsel %vm405, %v374, 0
      %v416 = vsel %vm405, %v375, 0
      %v419 = vsel %vm405, %v376, 0
      %v422 = vsel %vm405, %v377, 0
      %v425 = vsel %vm405, %v378, 0
      %v428 = vsel %vm405, %v379, 0
      %v431 = vsel %vm405, %v380, 0
      %v434 = vsel %vm405, %v381, 0
      %v437 = vsel %vm405, %v382, 0
      %v440 = vsel %vm405, %v383, 0
      %v443 = vsel %vm405, %v384, 0
      %v446 = vsel %vm405, %v385, 0
      %v449 = vsel %vm405, %v386, 0
      %v452 = vsel %vm405, %v387, 0
      %v455 = vsel %vm405, %v388, 0
      %v458 = vsel %vm405, %v389, 0
      %v461 = vsel %vm405, %v390, 0
      %v464 = vsel %vm405, %v391, 0
      %v467 = vsel %vm405, %v392, 0
      %v470 = vsel %vm405, %v393, 0
      %v473 = vsel %vm405, %v394, 0
      %v476 = vsel %vm405, %v395, 0
      %v479 = vsel %vm405, %v396, 0
      %v482 = vsel %vm405, %v397, 0
      %v485 = vsel %vm405, %v398, 0
      %v488 = vsel %vm405, %v399, 0
      %v491 = vsel %vm405, %v400, 0
      %v494 = vsel %vm405, %v401, 0
      %v497 = vsel %vm405, %v402, 0
      %v500 = vsel %vm405, %v403, 0
      %v503 = vsel %vm405, %v404, 0
      %505 = vmatpush.bf16.xpose.msra.mxu0 %v431
      %506 = vmatpush.bf16.xpose.msra.mxu0 %v428
      %507 = vmatpush.bf16.xpose.msra.mxu0 %v425
      %508 = vmatpush.bf16.xpose.msra.mxu0 %v422
      %509 = vmatpush.bf16.xpose.msra.mxu0 %v419
      %510 = vmatpush.bf16.xpose.msra.mxu0 %v416
      %511 = vmatpush.bf16.xpose.msra.mxu0 %v413
      %512 = vmatpush.bf16.xpose.msra.mxu0 %v410
      %513 = vmatmul.bf16.gmra.mxu0 %v407
      %v514 = vpop.f32.mrf.mxu0
      %v515 = vadd.f32 %v243, %v514
      %v516 = vpop.f32.mrf.mxu0
      %517 = vdwg.mxu0
      %518 = vmatpush.bf16.xpose.msra.mxu0 %v455
      %519 = vmatpush.bf16.xpose.msra.mxu0 %v452
      %520 = vmatpush.bf16.xpose.msra.mxu0 %v449
      %521 = vmatpush.bf16.xpose.msra.mxu0 %v446
      %522 = vmatpush.bf16.xpose.msra.mxu0 %v443
      %523 = vmatpush.bf16.xpose.msra.mxu0 %v440
      %524 = vmatpush.bf16.xpose.msra.mxu0 %v437
      %525 = vmatpush.bf16.xpose.msra.mxu0 %v434
      %526 = vmatmul.bf16.gmra.mxu0 %v407
      %v527 = vpop.f32.mrf.mxu0
      %v528 = vadd.f32 %v243, %v527
      %v529 = vpop.f32.mrf.mxu0
      %530 = vdwg.mxu0
      %531 = vmatpush.bf16.xpose.msra.mxu0 %v479
      %532 = vmatpush.bf16.xpose.msra.mxu0 %v476
      %533 = vmatpush.bf16.xpose.msra.mxu0 %v473
      %534 = vmatpush.bf16.xpose.msra.mxu0 %v470
      %535 = vmatpush.bf16.xpose.msra.mxu0 %v467
      %536 = vmatpush.bf16.xpose.msra.mxu0 %v464
      %537 = vmatpush.bf16.xpose.msra.mxu0 %v461
      %538 = vmatpush.bf16.xpose.msra.mxu0 %v458
      %539 = vmatmul.bf16.gmra.mxu0 %v407
      %v540 = vpop.f32.mrf.mxu0
      %v541 = vadd.f32 %v243, %v540
      %v542 = vpop.f32.mrf.mxu0
      %543 = vdwg.mxu0
      %544 = vmatpush.bf16.xpose.msra.mxu0 %v503
      %545 = vmatpush.bf16.xpose.msra.mxu0 %v500
      %546 = vmatpush.bf16.xpose.msra.mxu0 %v497
      %547 = vmatpush.bf16.xpose.msra.mxu0 %v494
      %548 = vmatpush.bf16.xpose.msra.mxu0 %v491
      %549 = vmatpush.bf16.xpose.msra.mxu0 %v488
      %550 = vmatpush.bf16.xpose.msra.mxu0 %v485
      %551 = vmatpush.bf16.xpose.msra.mxu0 %v482
      %552 = vmatmul.bf16.gmra.mxu0 %v407
      %v553 = vpop.f32.mrf.mxu0
      %v554 = vadd.f32 %v243, %v553
      %v555 = vpop.f32.mrf.mxu0
      %556 = vdwg.mxu0
      %v557 = vmax.f32 %v515, 0.0
      %v558 = vmax.f32 %v528, 0.0
      %v559 = vmax.f32 %v541, 0.0
      %v560 = vmax.f32 %v554, 0.0
      %561 = vst [vmem:[%s172] sm:$0xff] %v557
      %562 = vst [vmem:[%s172 + $0x8] sm:$0xff] %v558
      %563 = vst [vmem:[%s172 + $0x10] sm:$0xff] %v559
      %564 = vst [vmem:[%s172 + $0x18] sm:$0xff] %v560
      %s565 = smul.u32 4, %s14
      %p566 = scmp.lt.s32.totalorder %s565, 15
      %s567 = scalar_select %p566, %s565, 15
      %s568 = smul.addr %s567, 8
      %s569 = scalar_lea.vmem %s3, %s568
      // Predicated region
      $region33: #{_lambda_.16} parent=31 // pred_check
        %p570 = pneg %p100
      $region34: #{_lambda_.16} parent=31 // pred_check_branch
        %572 = sbr.rel (%p570) target = $region36
      $region35: #{_lambda_.16} parent=31 // pred_region
        %s573 = smul.u32 4, %s14
      $region36: #{_lambda_.16} parent=31 // pred_fallthru
        _
    $region32: #{_lambda_.16} parent=5 // pred_fallthru
      _
    %p574 = scmp.le.s32.totalorder 2, %s9
    // Predicated region
    $region37: #{_lambda_.16} parent=5 // pred_check
      %p575 = pneg %p574
    $region38: #{_lambda_.16} parent=5 // pred_check_branch
      %577 = sbr.rel (%p575) target = $region40
    $region39: #{_lambda_.16} parent=5 // pred_region
      %s578 = ssub.s32 %s9, 2
      // Predicated region
      $region41: #{_lambda_.16} parent=39 // pred_check
        %p579 = pneg %p106
      $region42: #{_lambda_.16} parent=39 // pred_check_branch
        %581 = sbr.rel (%p579) target = $region44
      $region43: #{_lambda_.16} parent=39 // pred_region
        %s582 = smul.u32 4, %s15
        %p583 = scmp.lt.s32.totalorder %s582, 15
        %s584 = scalar_select %p583, %s582, 15
        %s585 = smul.addr %s584, 8
        %s586 = scalar_lea.vmem %s3, %s585
      $region44: #{_lambda_.16} parent=39 // pred_fallthru
        _
    $region40: #{_lambda_.16} parent=5 // pred_fallthru
      _
  $region6: #{_lambda_.16} parent=0 // loop_footer
    %s13 = sadd.s32 1, %s9
  $region7: #{_lambda_.16} parent=0 // loop_footer_branch
    %8 = sbr.rel target = $region3
  $region8: #{_lambda_.16} parent=0 // loop_exit
    _

// kernel: _lambda_.17
$region0: #{_lambda_.17}
  #allocation0 [shape = 'u32[]', space=smem, size = 0x4, offset = 0x4, fixed_abs, tag = 'smem constant byte address 0x4 - core index']
  #allocation1 [shape = 'u32[72,128]{1,0:T(1,128)}', space=vmem, size = 0x9000, scoped, tag = 'internal scratch']
  #allocation2 [shape = 'f32[1,1]{1,0:T(1,128)S(1)}', space=vmem, size = 0x200, scoped, tag = 'scoped memory for _lambda_.17']
  %s0 = inlined_call_operand.vmem [shape: bf16[1,72], index: 0, kind: input, shape index: {}]
  %s1 = inlined_call_operand.vmem [shape: bf16[2048,72], index: 1, kind: input, shape index: {}]
  %s2 = inlined_call_operand.<no memory space> [shape: f32[1,1], index: 2, kind: input, shape index: {}]
  %s3 = inlined_call_operand.vmem [shape: f32[1,2048], index: 3, kind: output, shape index: {}]
  %s4 = sld [smem:[#allocation0]]
  $region45: #{_lambda_.17} parent=0
    _
  %s6 = ssub.s32 1, %s4
  %s7 = scalar_select 0, %s6, %s4
  %v8 = vstv %s2
  %9 = vst [vmem:[#allocation2] sm:$0x1] %v8
  loop: start=0, step=1, limit=6
  $region2: #{_lambda_.17} parent=0 // loop_pre_header
    _
  $region3: #{_lambda_.17} parent=0 // loop_header
    %s11 = sphi 0, %s15
    %p12 = scmp.ge.s32.totalorder %s11, 6
    %s19 = sphi 0, %s19
    %s21 = sphi 0, %s19
    %s22 = sphi 0, %s21
    %s36 = sphi 0, %s22
    %s42 = sphi 0, %s44
    %s45 = sphi 0, %s42
    %s46 = sphi 0, %s45
    %s62 = sphi 0, %s46
    %s66 = sphi 0, %s66
    %s68 = sphi 0, %s66
    %s69 = sphi 0, %s68
    %s83 = sphi 0, %s69
    %s89 = sphi 0, %s91
    %s92 = sphi 0, %s89
    %s93 = sphi 0, %s92
    %s109 = sphi 0, %s93
  $region4: #{_lambda_.17} parent=0 // loop_header_branch
    %14 = sbr.rel (%p12) target = $region8
  $region5: #{_lambda_.17} parent=0 // loop_body
    %s16 = ssub.s32 %s11, 1
    %s17 = ssub.s32 %s11, 2
    %s18 = sadd.s32 %s11, 1
    %s20 = sadd.s32 %s19, 1
    %p23 = scmp.eq.s32.totalorder %s11, 3
    %p24 = scmp.ne.s32.totalorder %s19, %s21
    %p25 = scmp.eq.s32.totalorder %s11, 0
    %p26 = por %p24, %p25
    %p27 = scmp.ne.s32.totalorder %s19, %s21
    %p28 = scmp.eq.s32.totalorder %s16, 3
    %p29 = por %p27, %p28
    %p30 = scmp.ne.s32.totalorder %s21, %s22
    %p31 = scmp.eq.s32.totalorder %s16, 0
    %p32 = por %p30, %p31
    %p33 = scmp.ne.s32.totalorder %s21, %s22
    %p34 = scmp.eq.s32.totalorder %s17, 3
    %p35 = por %p33, %p34
    %p37 = scmp.ne.s32.totalorder %s22, %s36
    %p38 = scmp.eq.s32.totalorder %s17, 0
    %p39 = por %p37, %p38
    %s40 = ssub.s32 %s11, %s18
    %p41 = scmp.eq.s32.totalorder %s40, 0
    %s43 = sadd.s32 %s42, 1
    %s44 = scalar_select %p41, %s42, %s43
    %p47 = pneg %p41
    %p48 = scmp.eq.s32.totalorder %s11, 3
    %p49 = por %p47, %p48
    %p50 = scmp.ne.s32.totalorder %s42, %s45
    %p51 = scmp.eq.s32.totalorder %s11, 0
    %p52 = por %p50, %p51
    %p53 = scmp.ne.s32.totalorder %s42, %s45
    %p54 = scmp.eq.s32.totalorder %s16, 3
    %p55 = por %p53, %p54
    %p56 = scmp.ne.s32.totalorder %s45, %s46
    %p57 = scmp.eq.s32.totalorder %s16, 0
    %p58 = por %p56, %p57
    %p59 = scmp.ne.s32.totalorder %s45, %s46
    %p60 = scmp.eq.s32.totalorder %s17, 3
    %p61 = por %p59, %p60
    %p63 = scmp.ne.s32.totalorder %s46, %s62
    %p64 = scmp.eq.s32.totalorder %s17, 0
    %p65 = por %p63, %p64
    %s67 = sadd.s32 %s66, 1
    %p70 = scmp.eq.s32.totalorder %s11, 3
    %p71 = scmp.ne.s32.totalorder %s66, %s68
    %p72 = scmp.eq.s32.totalorder %s11, 0
    %p73 = por %p71, %p72
    %p74 = scmp.ne.s32.totalorder %s66, %s68
    %p75 = scmp.eq.s32.totalorder %s16, 3
    %p76 = por %p74, %p75
    %p77 = scmp.ne.s32.totalorder %s68, %s69
    %p78 = scmp.eq.s32.totalorder %s16, 0
    %p79 = por %p77, %p78
    %p80 = scmp.ne.s32.totalorder %s68, %s69
    %p81 = scmp.eq.s32.totalorder %s17, 3
    %p82 = por %p80, %p81
    %p84 = scmp.ne.s32.totalorder %s69, %s83
    %p85 = scmp.eq.s32.totalorder %s17, 0
    %p86 = por %p84, %p85
    %s87 = ssub.s32 %s11, %s18
    %p88 = scmp.eq.s32.totalorder %s87, 0
    %s90 = sadd.s32 %s89, 1
    %s91 = scalar_select %p88, %s89, %s90
    %p94 = pneg %p88
    %p95 = scmp.eq.s32.totalorder %s11, 3
    %p96 = por %p94, %p95
    %p97 = scmp.ne.s32.totalorder %s89, %s92
    %p98 = scmp.eq.s32.totalorder %s11, 0
    %p99 = por %p97, %p98
    %p100 = scmp.ne.s32.totalorder %s89, %s92
    %p101 = scmp.eq.s32.totalorder %s16, 3
    %p102 = por %p100, %p101
    %p103 = scmp.ne.s32.totalorder %s92, %s93
    %p104 = scmp.eq.s32.totalorder %s16, 0
    %p105 = por %p103, %p104
    %p106 = scmp.ne.s32.totalorder %s92, %s93
    %p107 = scmp.eq.s32.totalorder %s17, 3
    %p108 = por %p106, %p107
    %p110 = scmp.ne.s32.totalorder %s93, %s109
    %p111 = scmp.eq.s32.totalorder %s17, 0
    %p112 = por %p110, %p111
    %p113 = scmp.le.s32.totalorder 1, %s11
    %p114 = scmp.lt.s32.totalorder %s11, 5
    %p115 = pnand %p113, %p114
    %p116 = pneg %p115
    // Predicated region
    $region9: #{_lambda_.17} parent=5 // pred_check
      _
    $region10: #{_lambda_.17} parent=5 // pred_check_branch
      %118 = sbr.rel (%p115) target = $region12
    $region11: #{_lambda_.17} parent=5 // pred_region
      %s119 = ssub.s32 %s11, 1
      // Predicated region
      $region13: #{_lambda_.17} parent=11 // pred_check
        %p120 = pneg %p32
      $region14: #{_lambda_.17} parent=11 // pred_check_branch
        %122 = sbr.rel (%p120) target = $region16
      $region15: #{_lambda_.17} parent=11 // pred_region
        _
      $region16: #{_lambda_.17} parent=11 // pred_fallthru
        _
      // Predicated region
      $region17: #{_lambda_.17} parent=11 // pred_check
        %p123 = pneg %p79
      $region18: #{_lambda_.17} parent=11 // pred_check_branch
        %125 = sbr.rel (%p123) target = $region20
      $region19: #{_lambda_.17} parent=11 // pred_region
        _
      $region20: #{_lambda_.17} parent=11 // pred_fallthru
        _
    $region12: #{_lambda_.17} parent=5 // pred_fallthru
      _
    %p126 = scmp.lt.s32.totalorder %s11, 4
    // Predicated region
    $region21: #{_lambda_.17} parent=5 // pred_check
      %p127 = pneg %p126
    $region22: #{_lambda_.17} parent=5 // pred_check_branch
      %129 = sbr.rel (%p127) target = $region24
    $region23: #{_lambda_.17} parent=5 // pred_region
      // Predicated region
      $region25: #{_lambda_.17} parent=23 // pred_check
        %p130 = pneg %p52
      $region26: #{_lambda_.17} parent=23 // pred_check_branch
        %132 = sbr.rel (%p130) target = $region28
      $region27: #{_lambda_.17} parent=23 // pred_region
        %s133 = smul.u32 64, %s11
        %p134 = scmp.lt.s32.totalorder %s133, 255
        %s135 = scalar_select %p134, %s133, 255
        %s136 = smul.addr %s135, 4
        %s137 = scalar_lea.vmem %s1, %s136
        %s138 = smul.u32 64, %s11
      $region28: #{_lambda_.17} parent=23 // pred_fallthru
        _
    $region24: #{_lambda_.17} parent=5 // pred_fallthru
      _
    %p139 = scmp.le.s32.totalorder 1, %s11
    %p140 = scmp.lt.s32.totalorder %s11, 5
    %p141 = pnand %p139, %p140
    %p142 = pneg %p141
    // Predicated region
    $region29: #{_lambda_.17} parent=5 // pred_check
      _
    $region30: #{_lambda_.17} parent=5 // pred_check_branch
      %144 = sbr.rel (%p141) target = $region32
    $region31: #{_lambda_.17} parent=5 // pred_region
      %s145 = ssub.s32 %s11, 1
      %p146 = pneg %p32
      %p147 = pneg %p29
      %s148 = smul.u32 64, %s16
      %p149 = scmp.lt.s32.totalorder %s148, 255
      %s150 = scalar_select %p149, %s148, 255
      %s151 = smul.addr %s150, 4
      %s152 = scalar_lea.vmem %s1, %s151
      %p153 = pneg %p58
      %p154 = pneg %p55
      %p155 = pneg %p79
      %p156 = pneg %p76
      %p157 = pneg %p105
      %p158 = pneg %p102
      %s159 = smul.u32 4, %s16
      %p160 = scmp.lt.s32.totalorder %s159, 15
      %s161 = scalar_select %p160, %s159, 15
      %s162 = scalar_lea.vmem %s3, %s161
      %s163 = smul.u32 64, %s16
      %p164 = scmp.lt.s32.totalorder %s163, 255
      %s165 = scalar_select %p164, %s163, 255
      %s166 = smul.addr %s165, 4
      %s167 = scalar_lea.vmem %s1, %s166
      %s168 = smul.u32 64, %s16
      %s169 = smul.u32 4, %s16
      %p170 = scmp.lt.s32.totalorder %s169, 15
      %s171 = scalar_select %p170, %s169, 15
      %s172 = scalar_lea.vmem %s3, %s171
      %s173 = smul.u32 4, %s16
      %v174 = vld [vmem:[%s0] sm:$0x1]
      %v175 = vld [vmem:[%s167] sm:$0xf]
      %v176 = vld [vmem:[%s167 + $0x4] sm:$0xf]
      %v177 = vld [vmem:[%s167 + $0x8] sm:$0xf]
      %v178 = vld [vmem:[%s167 + $0xc] sm:$0xf]
      %v179 = vld [vmem:[%s167 + $0x10] sm:$0xf]
      %v180 = vld [vmem:[%s167 + $0x14] sm:$0xf]
      %v181 = vld [vmem:[%s167 + $0x18] sm:$0xf]
      %v182 = vld [vmem:[%s167 + $0x1c] sm:$0xf]
      %v183 = vld [vmem:[%s167 + $0x20] sm:$0xf]
      %v184 = vld [vmem:[%s167 + $0x24] sm:$0xf]
      %v185 = vld [vmem:[%s167 + $0x28] sm:$0xf]
      %v186 = vld [vmem:[%s167 + $0x2c] sm:$0xf]
      %v187 = vld [vmem:[%s167 + $0x30] sm:$0xf]
      %v188 = vld [vmem:[%s167 + $0x34] sm:$0xf]
      %v189 = vld [vmem:[%s167 + $0x38] sm:$0xf]
      %v190 = vld [vmem:[%s167 + $0x3c] sm:$0xf]
      %v191 = vld [vmem:[%s167 + $0x40] sm:$0xf]
      %v192 = vld [vmem:[%s167 + $0x44] sm:$0xf]
      %v193 = vld [vmem:[%s167 + $0x48] sm:$0xf]
      %v194 = vld [vmem:[%s167 + $0x4c] sm:$0xf]
      %v195 = vld [vmem:[%s167 + $0x50] sm:$0xf]
      %v196 = vld [vmem:[%s167 + $0x54] sm:$0xf]
      %v197 = vld [vmem:[%s167 + $0x58] sm:$0xf]
      %v198 = vld [vmem:[%s167 + $0x5c] sm:$0xf]
      %v199 = vld [vmem:[%s167 + $0x60] sm:$0xf]
      %v200 = vld [vmem:[%s167 + $0x64] sm:$0xf]
      %v201 = vld [vmem:[%s167 + $0x68] sm:$0xf]
      %v202 = vld [vmem:[%s167 + $0x6c] sm:$0xf]
      %v203 = vld [vmem:[%s167 + $0x70] sm:$0xf]
      %v204 = vld [vmem:[%s167 + $0x74] sm:$0xf]
      %v205 = vld [vmem:[%s167 + $0x78] sm:$0xf]
      %v206 = vld [vmem:[%s167 + $0x7c] sm:$0xf]
      %v207 = vld [vmem:[%s167 + $0x80] sm:$0xf]
      %v208 = vld [vmem:[%s167 + $0x84] sm:$0xf]
      %v209 = vld [vmem:[%s167 + $0x88] sm:$0xf]
      %v210 = vld [vmem:[%s167 + $0x8c] sm:$0xf]
      %v211 = vld [vmem:[%s167 + $0x90] sm:$0xf]
      %v212 = vld [vmem:[%s167 + $0x94] sm:$0xf]
      %v213 = vld [vmem:[%s167 + $0x98] sm:$0xf]
      %v214 = vld [vmem:[%s167 + $0x9c] sm:$0xf]
      %v215 = vld [vmem:[%s167 + $0xa0] sm:$0xf]
      %v216 = vld [vmem:[%s167 + $0xa4] sm:$0xf]
      %v217 = vld [vmem:[%s167 + $0xa8] sm:$0xf]
      %v218 = vld [vmem:[%s167 + $0xac] sm:$0xf]
      %v219 = vld [vmem:[%s167 + $0xb0] sm:$0xf]
      %v220 = vld [vmem:[%s167 + $0xb4] sm:$0xf]
      %v221 = vld [vmem:[%s167 + $0xb8] sm:$0xf]
      %v222 = vld [vmem:[%s167 + $0xbc] sm:$0xf]
      %v223 = vld [vmem:[%s167 + $0xc0] sm:$0xf]
      %v224 = vld [vmem:[%s167 + $0xc4] sm:$0xf]
      %v225 = vld [vmem:[%s167 + $0xc8] sm:$0xf]
      %v226 = vld [vmem:[%s167 + $0xcc] sm:$0xf]
      %v227 = vld [vmem:[%s167 + $0xd0] sm:$0xf]
      %v228 = vld [vmem:[%s167 + $0xd4] sm:$0xf]
      %v229 = vld [vmem:[%s167 + $0xd8] sm:$0xf]
      %v230 = vld [vmem:[%s167 + $0xdc] sm:$0xf]
      %v231 = vld [vmem:[%s167 + $0xe0] sm:$0xf]
      %v232 = vld [vmem:[%s167 + $0xe4] sm:$0xf]
      %v233 = vld [vmem:[%s167 + $0xe8] sm:$0xf]
      %v234 = vld [vmem:[%s167 + $0xec] sm:$0xf]
      %v235 = vld [vmem:[%s167 + $0xf0] sm:$0xf]
      %v236 = vld [vmem:[%s167 + $0xf4] sm:$0xf]
      %v237 = vld [vmem:[%s167 + $0xf8] sm:$0xf]
      %v238 = vld [vmem:[%s167 + $0xfc] sm:$0xf]
      %v239 = vld [vmem:[#allocation2] sm:$0x1]
      %241 = vset.pattern.permute.xlu0 0
      %242 = vperm.xlu0 %241, %v239
      %v243 = vpop.permute.xlu0 %242
      %v245 = vperm.slane %v243, 0
      %v310 = vunpack.c.l.b16 %v175
      %v311 = vunpack.c.l.b16 %v176
      %v312 = vunpack.c.l.b16 %v177
      %v313 = vunpack.c.l.b16 %v178
      %v314 = vunpack.c.l.b16 %v179
      %v315 = vunpack.c.l.b16 %v180
      %v316 = vunpack.c.l.b16 %v181
      %v317 = vunpack.c.l.b16 %v182
      %v318 = vunpack.c.l.b16 %v183
      %v319 = vunpack.c.l.b16 %v184
      %v320 = vunpack.c.l.b16 %v185
      %v321 = vunpack.c.l.b16 %v186
      %v322 = vunpack.c.l.b16 %v187
      %v323 = vunpack.c.l.b16 %v188
      %v324 = vunpack.c.l.b16 %v189
      %v325 = vunpack.c.l.b16 %v190
      %v326 = vunpack.c.l.b16 %v191
      %v327 = vunpack.c.l.b16 %v192
      %v328 = vunpack.c.l.b16 %v193
      %v329 = vunpack.c.l.b16 %v194
      %v330 = vunpack.c.l.b16 %v195
      %v331 = vunpack.c.l.b16 %v196
      %v332 = vunpack.c.l.b16 %v197
      %v333 = vunpack.c.l.b16 %v198
      %v334 = vunpack.c.l.b16 %v199
      %v335 = vunpack.c.l.b16 %v200
      %v336 = vunpack.c.l.b16 %v201
      %v337 = vunpack.c.l.b16 %v202
      %v338 = vunpack.c.l.b16 %v203
      %v339 = vunpack.c.l.b16 %v204
      %v340 = vunpack.c.l.b16 %v205
      %v341 = vunpack.c.l.b16 %v206
      %v342 = vunpack.c.l.b16 %v207
      %v343 = vunpack.c.l.b16 %v208
      %v344 = vunpack.c.l.b16 %v209
      %v345 = vunpack.c.l.b16 %v210
      %v346 = vunpack.c.l.b16 %v211
      %v347 = vunpack.c.l.b16 %v212
      %v348 = vunpack.c.l.b16 %v213
      %v349 = vunpack.c.l.b16 %v214
      %v350 = vunpack.c.l.b16 %v215
      %v351 = vunpack.c.l.b16 %v216
      %v352 = vunpack.c.l.b16 %v217
      %v353 = vunpack.c.l.b16 %v218
      %v354 = vunpack.c.l.b16 %v219
      %v355 = vunpack.c.l.b16 %v220
      %v356 = vunpack.c.l.b16 %v221
      %v357 = vunpack.c.l.b16 %v222
      %v358 = vunpack.c.l.b16 %v223
      %v359 = vunpack.c.l.b16 %v224
      %v360 = vunpack.c.l.b16 %v225
      %v361 = vunpack.c.l.b16 %v226
      %v362 = vunpack.c.l.b16 %v227
      %v363 = vunpack.c.l.b16 %v228
      %v364 = vunpack.c.l.b16 %v229
      %v365 = vunpack.c.l.b16 %v230
      %v366 = vunpack.c.l.b16 %v231
      %v367 = vunpack.c.l.b16 %v232
      %v368 = vunpack.c.l.b16 %v233
      %v369 = vunpack.c.l.b16 %v234
      %v370 = vunpack.c.l.b16 %v235
      %v371 = vunpack.c.l.b16 %v236
      %v372 = vunpack.c.l.b16 %v237
      %v373 = vunpack.c.l.b16 %v238
      %v374 = vpack.c.b16 %v311, %v310
      %v375 = vpack.c.b16 %v313, %v312
      %v376 = vpack.c.b16 %v315, %v314
      %v377 = vpack.c.b16 %v317, %v316
      %v378 = vpack.c.b16 %v319, %v318
      %v379 = vpack.c.b16 %v321, %v320
      %v380 = vpack.c.b16 %v323, %v322
      %v381 = vpack.c.b16 %v325, %v324
      %v382 = vpack.c.b16 %v327, %v326
      %v383 = vpack.c.b16 %v329, %v328
      %v384 = vpack.c.b16 %v331, %v330
      %v385 = vpack.c.b16 %v333, %v332
      %v386 = vpack.c.b16 %v335, %v334
      %v387 = vpack.c.b16 %v337, %v336
      %v388 = vpack.c.b16 %v339, %v338
      %v389 = vpack.c.b16 %v341, %v340
      %v390 = vpack.c.b16 %v343, %v342
      %v391 = vpack.c.b16 %v345, %v344
      %v392 = vpack.c.b16 %v347, %v346
      %v393 = vpack.c.b16 %v349, %v348
      %v394 = vpack.c.b16 %v351, %v350
      %v395 = vpack.c.b16 %v353, %v352
      %v396 = vpack.c.b16 %v355, %v354
      %v397 = vpack.c.b16 %v357, %v356
      %v398 = vpack.c.b16 %v359, %v358
      %v399 = vpack.c.b16 %v361, %v360
      %v400 = vpack.c.b16 %v363, %v362
      %v401 = vpack.c.b16 %v365, %v364
      %v402 = vpack.c.b16 %v367, %v366
      %v403 = vpack.c.b16 %v369, %v368
      %v404 = vpack.c.b16 %v371, %v370
      %v405 = vpack.c.b16 %v373, %v372
      %vm406 = vcmask 588800
      %v408 = vsel %vm406, %v174, 0
      %v411 = vsel %vm406, %v374, 0
      %v414 = vsel %vm406, %v375, 0
      %v417 = vsel %vm406, %v376, 0
      %v420 = vsel %vm406, %v377, 0
      %v423 = vsel %vm406, %v378, 0
      %v426 = vsel %vm406, %v379, 0
      %v429 = vsel %vm406, %v380, 0
      %v432 = vsel %vm406, %v381, 0
      %v435 = vsel %vm406, %v382, 0
      %v438 = vsel %vm406, %v383, 0
      %v441 = vsel %vm406, %v384, 0
      %v444 = vsel %vm406, %v385, 0
      %v447 = vsel %vm406, %v386, 0
      %v450 = vsel %vm406, %v387, 0
      %v453 = vsel %vm406, %v388, 0
      %v456 = vsel %vm406, %v389, 0
      %v459 = vsel %vm406, %v390, 0
      %v462 = vsel %vm406, %v391, 0
      %v465 = vsel %vm406, %v392, 0
      %v468 = vsel %vm406, %v393, 0
      %v471 = vsel %vm406, %v394, 0
      %v474 = vsel %vm406, %v395, 0
      %v477 = vsel %vm406, %v396, 0
      %v480 = vsel %vm406, %v397, 0
      %v483 = vsel %vm406, %v398, 0
      %v486 = vsel %vm406, %v399, 0
      %v489 = vsel %vm406, %v400, 0
      %v492 = vsel %vm406, %v401, 0
      %v495 = vsel %vm406, %v402, 0
      %v498 = vsel %vm406, %v403, 0
      %v501 = vsel %vm406, %v404, 0
      %v504 = vsel %vm406, %v405, 0
      %506 = vmatpush.bf16.xpose.msra.mxu0 %v432
      %507 = vmatpush.bf16.xpose.msra.mxu0 %v429
      %508 = vmatpush.bf16.xpose.msra.mxu0 %v426
      %509 = vmatpush.bf16.xpose.msra.mxu0 %v423
      %510 = vmatpush.bf16.xpose.msra.mxu0 %v420
      %511 = vmatpush.bf16.xpose.msra.mxu0 %v417
      %512 = vmatpush.bf16.xpose.msra.mxu0 %v414
      %513 = vmatpush.bf16.xpose.msra.mxu0 %v411
      %514 = vmatmul.bf16.gmra.mxu0 %v408
      %v515 = vpop.f32.mrf.mxu0
      %v516 = vadd.f32 %v245, %v515
      %v517 = vpop.f32.mrf.mxu0
      %518 = vdwg.mxu0
      %519 = vmatpush.bf16.xpose.msra.mxu0 %v456
      %520 = vmatpush.bf16.xpose.msra.mxu0 %v453
      %521 = vmatpush.bf16.xpose.msra.mxu0 %v450
      %522 = vmatpush.bf16.xpose.msra.mxu0 %v447
      %523 = vmatpush.bf16.xpose.msra.mxu0 %v444
      %524 = vmatpush.bf16.xpose.msra.mxu0 %v441
      %525 = vmatpush.bf16.xpose.msra.mxu0 %v438
      %526 = vmatpush.bf16.xpose.msra.mxu0 %v435
      %527 = vmatmul.bf16.gmra.mxu0 %v408
      %v528 = vpop.f32.mrf.mxu0
      %v529 = vadd.f32 %v245, %v528
      %v530 = vpop.f32.mrf.mxu0
      %531 = vdwg.mxu0
      %532 = vmatpush.bf16.xpose.msra.mxu0 %v480
      %533 = vmatpush.bf16.xpose.msra.mxu0 %v477
      %534 = vmatpush.bf16.xpose.msra.mxu0 %v474
      %535 = vmatpush.bf16.xpose.msra.mxu0 %v471
      %536 = vmatpush.bf16.xpose.msra.mxu0 %v468
      %537 = vmatpush.bf16.xpose.msra.mxu0 %v465
      %538 = vmatpush.bf16.xpose.msra.mxu0 %v462
      %539 = vmatpush.bf16.xpose.msra.mxu0 %v459
      %540 = vmatmul.bf16.gmra.mxu0 %v408
      %v541 = vpop.f32.mrf.mxu0
      %v542 = vadd.f32 %v245, %v541
      %v543 = vpop.f32.mrf.mxu0
      %544 = vdwg.mxu0
      %545 = vmatpush.bf16.xpose.msra.mxu0 %v504
      %546 = vmatpush.bf16.xpose.msra.mxu0 %v501
      %547 = vmatpush.bf16.xpose.msra.mxu0 %v498
      %548 = vmatpush.bf16.xpose.msra.mxu0 %v495
      %549 = vmatpush.bf16.xpose.msra.mxu0 %v492
      %550 = vmatpush.bf16.xpose.msra.mxu0 %v489
      %551 = vmatpush.bf16.xpose.msra.mxu0 %v486
      %552 = vmatpush.bf16.xpose.msra.mxu0 %v483
      %553 = vmatmul.bf16.gmra.mxu0 %v408
      %v554 = vpop.f32.mrf.mxu0
      %v555 = vadd.f32 %v245, %v554
      %v556 = vpop.f32.mrf.mxu0
      %557 = vdwg.mxu0
      %v562 = vrot.slane %v529, 7
      %v563 = vrot.slane %v542, 6
      %v564 = vrot.slane %v555, 5
      %vm565 = vcmask 1040384
      %v566 = vsel %vm565, %v516, %v562
      %vm567 = vcmask 1042434
      %v568 = vsel %vm567, %v563, %v564
      %vm569 = vcmask 1041408
      %v570 = vsel %vm569, %v566, %v568
      %v572 = vlaneseq
      %vm573 = vcmp.ge.s32.totalorder %v572, 0
      %vm574 = vcmp.lt.s32.totalorder %v572, 512
      %vm575 = vmand %vm573, %vm574
      %576 = vst.msk [vmem:[%s172] sm:$0xf] %vm575, %v570
      %s577 = smul.u32 4, %s16
      %p578 = scmp.lt.s32.totalorder %s577, 15
      %s579 = scalar_select %p578, %s577, 15
      %s580 = scalar_lea.vmem %s3, %s579
      // Predicated region
      $region33: #{_lambda_.17} parent=31 // pred_check
        %p581 = pneg %p102
      $region34: #{_lambda_.17} parent=31 // pred_check_branch
        %583 = sbr.rel (%p581) target = $region36
      $region35: #{_lambda_.17} parent=31 // pred_region
        %s584 = smul.u32 4, %s16
      $region36: #{_lambda_.17} parent=31 // pred_fallthru
        _
    $region32: #{_lambda_.17} parent=5 // pred_fallthru
      _
    %p585 = scmp.le.s32.totalorder 2, %s11
    // Predicated region
    $region37: #{_lambda_.17} parent=5 // pred_check
      %p586 = pneg %p585
    $region38: #{_lambda_.17} parent=5 // pred_check_branch
      %588 = sbr.rel (%p586) target = $region40
    $region39: #{_lambda_.17} parent=5 // pred_region
      %s589 = ssub.s32 %s11, 2
      // Predicated region
      $region41: #{_lambda_.17} parent=39 // pred_check
        %p590 = pneg %p108
      $region42: #{_lambda_.17} parent=39 // pred_check_branch
        %592 = sbr.rel (%p590) target = $region44
      $region43: #{_lambda_.17} parent=39 // pred_region
        %s593 = smul.u32 4, %s17
        %p594 = scmp.lt.s32.totalorder %s593, 15
        %s595 = scalar_select %p594, %s593, 15
        %s596 = scalar_lea.vmem %s3, %s595
      $region44: #{_lambda_.17} parent=39 // pred_fallthru
        _
    $region40: #{_lambda_.17} parent=5 // pred_fallthru
      _
  $region6: #{_lambda_.17} parent=0 // loop_footer
    %s15 = sadd.s32 1, %s11
  $region7: #{_lambda_.17} parent=0 // loop_footer_branch
    %10 = sbr.rel target = $region3
  $region8: #{_lambda_.17} parent=0 // loop_exit
    _

// kernel: _lambda_.18
$region0: #{_lambda_.18}
  #allocation0 [shape = 'u32[]', space=smem, size = 0x4, offset = 0x4, fixed_abs, tag = 'smem constant byte address 0x4 - core index']
  #allocation1 [shape = 'u32[72,128]{1,0:T(1,128)}', space=vmem, size = 0x9000, scoped, tag = 'internal scratch']
  #allocation2 [shape = 'f32[8,8]{1,0:T(8,128)}', space=vmem, size = 0x1000, scoped, tag = 'scratch operand']
  #allocation3 [shape = 'f32[8,1]{1,0:T(8,128)}', space=vmem, size = 0x1000, scoped, tag = 'scratch operand']
  %s0 = inlined_call_operand.vmem [shape: bf16[8,256], index: 0, kind: input, shape index: {}]
  %s1 = inlined_call_operand.vmem [shape: bf16[8,256], index: 1, kind: input, shape index: {}]
  %s2 = inlined_call_operand.vmem [shape: f32[8,8], index: 2, kind: output, shape index: {}]
  %s3 = sld [smem:[#allocation0]]
  $region26: #{_lambda_.18} parent=0
    _
  %s5 = ssub.s32 1, %s3
  %s6 = scalar_select 0, %s5, %s3
  // Predicated region
  $region2: #{_lambda_.18} parent=0 // pred_check
    _
  $region3: #{_lambda_.18} parent=0 // pred_check_branch
    %8 = sbr.rel (0) target = $region5
  $region4: #{_lambda_.18} parent=0 // pred_region
    _
  $region5: #{_lambda_.18} parent=0 // pred_fallthru
    _
  // Predicated region
  $region6: #{_lambda_.18} parent=0 // pred_check
    _
  $region7: #{_lambda_.18} parent=0 // pred_check_branch
    %10 = sbr.rel (0) target = $region9
  $region8: #{_lambda_.18} parent=0 // pred_region
    _
  $region9: #{_lambda_.18} parent=0 // pred_fallthru
    _
  %p12 = scmp.eq.s32.totalorder 0, 0
  // Predicated region
  $region10: #{_lambda_.18} parent=0 // pred_check
    %p13 = pneg %p12
  $region11: #{_lambda_.18} parent=0 // pred_check_branch
    %15 = sbr.rel (%p13) target = $region13
  $region12: #{_lambda_.18} parent=0 // pred_region
    %vm16 = vcmask 64512
    %17 = vst.msk [vmem:[#allocation2] sm:$0xff] %vm16, 0.0
    %vm18 = vcmask 7168
    %19 = vst.msk [vmem:[#allocation3] sm:$0xff] %vm18, 0.0
  $region13: #{_lambda_.18} parent=0 // pred_fallthru
    _
  %v20 = vld [vmem:[%s1] sm:$0xff]
  %v21 = vld [vmem:[%s0] sm:$0xff]
  %v22 = vld [vmem:[#allocation2] sm:$0xff]
  %v24 = vunpack.c.l.b16 %v20
  %v25 = vunpack.c.h.b16 %v20
  %v26 = vpack.c.b16 %v24, %v24
  %v27 = vpack.c.b16 %v25, %v25
  %v31 = vunpack.c.l.b16 %v21
  %v32 = vunpack.c.h.b16 %v21
  %v33 = vpack.c.b16 %v31, %v31
  %v34 = vpack.c.b16 %v32, %v32
  %37 = vmatpush.bf16.xpose.msra.mxu0 0
  %38 = vmatpush.bf16.xpose.msra.mxu0 0
  %39 = vmatpush.bf16.xpose.msra.mxu0 0
  %40 = vmatpush.bf16.xpose.msra.mxu0 0
  %41 = vmatpush.bf16.xpose.msra.mxu0 0
  %42 = vmatpush.bf16.xpose.msra.mxu0 0
  %43 = vmatpush.bf16.xpose.msra.mxu0 0
  %44 = vmatpush.bf16.xpose.msra.mxu0 %v33
  %45 = vmatmul.bf16.gmra.mxu0 %v26
  %v46 = vpop.f32.mrf.mxu0
  %v47 = vadd.f32 0.0, %v46
  %v48 = vpop.f32.mrf.mxu0
  %49 = vdwg.mxu0
  %50 = vmatpush.bf16.xpose.msra.mxu0 0
  %51 = vmatpush.bf16.xpose.msra.mxu0 0
  %52 = vmatpush.bf16.xpose.msra.mxu0 0
  %53 = vmatpush.bf16.xpose.msra.mxu0 0
  %54 = vmatpush.bf16.xpose.msra.mxu0 0
  %55 = vmatpush.bf16.xpose.msra.mxu0 0
  %56 = vmatpush.bf16.xpose.msra.mxu0 0
  %57 = vmatpush.bf16.xpose.msra.mxu0 %v34
  %58 = vmatmul.bf16.gmra.mxu0 %v27
  %v59 = vpop.f32.mrf.mxu0
  %v60 = vadd.f32 %v47, %v59
  %v61 = vpop.f32.mrf.mxu0
  %62 = vdwg.mxu0
  %v63 = vadd.f32 %v22, %v60
  %vm64 = vcmask 64512
  %65 = vst.msk [vmem:[#allocation2] sm:$0xff] %vm64, %v63
  %v66 = vld [vmem:[#allocation3] sm:$0xff]
  %v67 = vunpack.c.l.bf16 %v20
  %v68 = vunpack.c.h.bf16 %v20
  %v69 = vmax.f32 %v67, 0.0
  %v70 = vmax.f32 %v68, 0.0
  %v71 = vand.u32 2147483647, %v67
  %v72 = vand.u32 2147483647, %v68
  %v73 = vsub.f32 0.0, %v71
  %v74 = vsub.f32 0.0, %v72
  %v75 = vmul.f32 %v73, 1.442695
  %v76 = vpow.pop %v75
  %v77 = vmul.f32 %v74, 1.442695
  %v78 = vpow.pop %v77
  %v79 = vadd.f32 %v76, 1.0
  %v80 = vlog2.pop %v79
  %v81 = vmul.f32 %v80, 0.6931472
  %v82 = vmul.f32 -0.5, %v76
  %v83 = vadd.f32 %v82, 1.0
  %v84 = vmul.f32 %v83, %v76
  %v85 = vand.u32 2147483647, %v76
  %vm86 = vcmp.lt.f32.partialorder %v85, 0.0004427343
  %v87 = vsel %vm86, %v84, %v81
  %v88 = vadd.f32 %v78, 1.0
  %v89 = vlog2.pop %v88
  %v90 = vmul.f32 %v89, 0.6931472
  %v91 = vmul.f32 -0.5, %v78
  %v92 = vadd.f32 %v91, 1.0
  %v93 = vmul.f32 %v92, %v78
  %v94 = vand.u32 2147483647, %v78
  %vm95 = vcmp.lt.f32.partialorder %v94, 0.0004427343
  %v96 = vsel %vm95, %v93, %v90
  %v97 = vadd.f32 %v69, %v87
  %v98 = vadd.f32 %v70, %v96
  %v99 = vadd.f32 %v97, %v98
  %100 = vadd.xlane.f32.xlu0 %v99
  %v101 = vpop.xlane.xlu0 %100
  %v102 = vadd.f32 %v66, %v101
  %vm103 = vcmask 7168
  %104 = vst.msk [vmem:[#allocation3] sm:$0xff] %vm103, %v102
  // Predicated region
  $region14: #{_lambda_.18} parent=0 // pred_check
    %p105 = pneg %p12
  $region15: #{_lambda_.18} parent=0 // pred_check_branch
    %107 = sbr.rel (%p105) target = $region17
  $region16: #{_lambda_.18} parent=0 // pred_region
    %v108 = vld [vmem:[#allocation3] sm:$0xff]
    %v109 = vld [vmem:[#allocation2] sm:$0xff]
    %111 = vset.pattern.permute.xlu0 0
    %112 = vperm.xlu0 %111, %v108
    %v113 = vpop.permute.xlu0 %112
    %v115 = vsub.f32 %v113, %v109
    %116 = vst.msk [vmem:[%s2] sm:$0xff] %vm64, %v115
  $region17: #{_lambda_.18} parent=0 // pred_fallthru
    _
  // Predicated region
  $region18: #{_lambda_.18} parent=0 // pred_check
    _
  $region19: #{_lambda_.18} parent=0 // pred_check_branch
    %118 = sbr.rel (0) target = $region21
  $region20: #{_lambda_.18} parent=0 // pred_region
    _
  $region21: #{_lambda_.18} parent=0 // pred_fallthru
    _
  // Predicated region
  $region22: #{_lambda_.18} parent=0 // pred_check
    _
  $region23: #{_lambda_.18} parent=0 // pred_check_branch
    %120 = sbr.rel (0) target = $region25
  $region24: #{_lambda_.18} parent=0 // pred_region
    _
  $region25: #{_lambda_.18} parent=0 // pred_fallthru
    _

// kernel: _lambda_.19
$region0: #{_lambda_.19}
  #allocation0 [shape = 'u32[]', space=smem, size = 0x4, offset = 0x4, fixed_abs, tag = 'smem constant byte address 0x4 - core index']
  #allocation1 [shape = 'u32[72,128]{1,0:T(1,128)}', space=vmem, size = 0x9000, scoped, tag = 'internal scratch']
  %s0 = inlined_call_operand.vmem [shape: f32[2,8], index: 0, kind: input, shape index: {}]
  %s1 = inlined_call_operand.vmem [shape: f32[2,8], index: 1, kind: output, shape index: {}]
  %s2 = sld [smem:[#allocation0]]
  $region21: #{_lambda_.19} parent=0
    _
  %s4 = ssub.s32 1, %s2
  %s5 = scalar_select 0, %s4, %s2
  // Predicated region
  $region2: #{_lambda_.19} parent=0 // pred_check
    _
  $region3: #{_lambda_.19} parent=0 // pred_check_branch
    %7 = sbr.rel (0) target = $region5
  $region4: #{_lambda_.19} parent=0 // pred_region
    _
  $region5: #{_lambda_.19} parent=0 // pred_fallthru
    _
  %v8 = vld [vmem:[%s0] sm:$0x3]
  loop: start=0, step=1, limit=50
  $region6: #{_lambda_.19} parent=0 // loop_pre_header
    _
  $region7: #{_lambda_.19} parent=0 // loop_header
    %s10 = sphi 0, %s14
    %p11 = scmp.ge.s32.totalorder %s10, 50
    %v15 = vphi 0.0, %v53
    %v16 = vphi 0.0, %v39
  $region8: #{_lambda_.19} parent=0 // loop_header_branch
    %13 = sbr.rel (%p11) target = $region12
  $region9: #{_lambda_.19} parent=0 // loop_body
    %v17 = vsub.f32 %v15, %v8
    %vm18 = vcmask 58368
    %v19 = vsel %vm18, %v17, -inf
    %v20 = vrot.slane %v19, 4
    %v21 = vmax.f32 %v19, %v20
    %v22 = vrot.slane %v21, 2
    %v23 = vmax.f32 %v21, %v22
    %v24 = vrot.slane %v23, 1
    %v25 = vmax.f32 %v23, %v24
    %v26 = vsub.f32 %v17, %v25
    %v27 = vmul.f32 %v26, 1.442695
    %v28 = vpow.pop %v27
    %v29 = vsel %vm18, %v28, 0.0
    %v30 = vrot.slane %v29, 4
    %v31 = vadd.f32 %v29, %v30
    %v32 = vrot.slane %v31, 2
    %v33 = vadd.f32 %v31, %v32
    %v34 = vrot.slane %v33, 1
    %v35 = vadd.f32 %v33, %v34
    %v36 = vlog2.pop %v35
    %v37 = vmul.f32 %v36, 0.6931472
    %v38 = vadd.f32 %v25, %v37
    %v39 = vsub.f32 -2.0794415, %v38
    %v40 = vsub.f32 %v39, %v8
    %v41 = vsel %vm18, %v40, -inf
    %42 = vmax.xlane.f32.xlu0 %v41
    %v43 = vpop.xlane.xlu0 %42
    %v44 = vsub.f32 %v40, %v43
    %v45 = vmul.f32 %v44, 1.442695
    %v46 = vpow.pop %v45
    %v47 = vsel %vm18, %v46, 0.0
    %48 = vadd.xlane.f32.xlu0 %v47
    %v49 = vpop.xlane.xlu0 %48
    %v50 = vlog2.pop %v49
    %v51 = vmul.f32 %v50, 0.6931472
    %v52 = vadd.f32 %v43, %v51
    %v53 = vsub.f32 -0.6931472, %v52
  $region10: #{_lambda_.19} parent=0 // loop_footer
    %s14 = sadd.s32 1, %s10
  $region11: #{_lambda_.19} parent=0 // loop_footer_branch
    %9 = sbr.rel target = $region7
  $region12: #{_lambda_.19} parent=0 // loop_exit
    _
  %v54 = vadd.f32 %v15, %v16
  %v55 = vsub.f32 %v54, %v8
  %v56 = vmul.f32 %v55, 1.442695
  %v57 = vpow.pop %v56
  %vm58 = vcmask 58368
  %59 = vst.msk [vmem:[%s1] sm:$0x3] %vm58, %v57
  // Predicated region
  $region13: #{_lambda_.19} parent=0 // pred_check
    _
  $region14: #{_lambda_.19} parent=0 // pred_check_branch
    %61 = sbr.rel (0) target = $region16
  $region15: #{_lambda_.19} parent=0 // pred_region
    _
  $region16: #{_lambda_.19} parent=0 // pred_fallthru
    _
  // Predicated region
  $region17: #{_lambda_.19} parent=0 // pred_check
    _
  $region18: #{_lambda_.19} parent=0 // pred_check_branch
    %63 = sbr.rel (0) target = $region20
  $region19: #{_lambda_.19} parent=0 // pred_region
    _
  $region20: #{_lambda_.19} parent=0 // pred_fallthru
    _

// kernel: _lambda_.20
$region0: #{_lambda_.20}
  #allocation0 [shape = 'u32[]', space=smem, size = 0x4, offset = 0x4, fixed_abs, tag = 'smem constant byte address 0x4 - core index']
  #allocation1 [shape = 'u32[72,128]{1,0:T(1,128)}', space=vmem, size = 0x9000, scoped, tag = 'internal scratch']
  %s0 = inlined_call_operand.vmem [shape: bf16[64,32], index: 0, kind: input, shape index: {}]
  %s1 = inlined_call_operand.vmem [shape: bf16[2,32], index: 1, kind: input, shape index: {}]
  %s2 = inlined_call_operand.vmem [shape: f32[64,1], index: 2, kind: input, shape index: {}]
  %s3 = inlined_call_operand.vmem [shape: f32[64,2], index: 3, kind: output, shape index: {}]
  %s4 = sld [smem:[#allocation0]]
  $region22: #{_lambda_.20} parent=0
    _
  %s6 = ssub.s32 1, %s4
  %s7 = scalar_select 0, %s6, %s4
  // Predicated region
  $region2: #{_lambda_.20} parent=0 // pred_check
    _
  $region3: #{_lambda_.20} parent=0 // pred_check_branch
    %9 = sbr.rel (0) target = $region5
  $region4: #{_lambda_.20} parent=0 // pred_region
    _
  $region5: #{_lambda_.20} parent=0 // pred_fallthru
    _
  // Predicated region
  $region6: #{_lambda_.20} parent=0 // pred_check
    _
  $region7: #{_lambda_.20} parent=0 // pred_check_branch
    %11 = sbr.rel (0) target = $region9
  $region8: #{_lambda_.20} parent=0 // pred_region
    _
  $region9: #{_lambda_.20} parent=0 // pred_fallthru
    _
  // Predicated region
  $region10: #{_lambda_.20} parent=0 // pred_check
    _
  $region11: #{_lambda_.20} parent=0 // pred_check_branch
    %13 = sbr.rel (0) target = $region13
  $region12: #{_lambda_.20} parent=0 // pred_region
    _
  $region13: #{_lambda_.20} parent=0 // pred_fallthru
    _
  %v15 = vld [vmem:[%s0] sm:$0xf]
  %v16 = vld [vmem:[%s0 + $0x4] sm:$0xf]
  %v17 = vld [vmem:[%s0 + $0x8] sm:$0xf]
  %v18 = vld [vmem:[%s0 + $0xc] sm:$0xf]
  %v19 = vld [vmem:[%s0 + $0x10] sm:$0xf]
  %v20 = vld [vmem:[%s0 + $0x14] sm:$0xf]
  %v21 = vld [vmem:[%s0 + $0x18] sm:$0xf]
  %v22 = vld [vmem:[%s0 + $0x1c] sm:$0xf]
  %v23 = vld [vmem:[%s1] sm:$0x1]
  %v24 = vld [vmem:[%s2] sm:$0xff]
  %v25 = vld [vmem:[%s2 + $0x8] sm:$0xff]
  %v26 = vld [vmem:[%s2 + $0x10] sm:$0xff]
  %v27 = vld [vmem:[%s2 + $0x18] sm:$0xff]
  %v28 = vld [vmem:[%s2 + $0x20] sm:$0xff]
  %v29 = vld [vmem:[%s2 + $0x28] sm:$0xff]
  %v30 = vld [vmem:[%s2 + $0x30] sm:$0xff]
  %v31 = vld [vmem:[%s2 + $0x38] sm:$0xff]
  %33 = vset.pattern.permute.xlu0 0
  %34 = vperm.xlu0 %33, %v24
  %v35 = vpop.permute.xlu0 %34
  %38 = vset.pattern.permute.xlu0 0
  %39 = vperm.xlu0 %38, %v25
  %v40 = vpop.permute.xlu0 %39
  %43 = vset.pattern.permute.xlu0 0
  %44 = vperm.xlu0 %43, %v26
  %v45 = vpop.permute.xlu0 %44
  %48 = vset.pattern.permute.xlu0 0
  %49 = vperm.xlu0 %48, %v27
  %v50 = vpop.permute.xlu0 %49
  %53 = vset.pattern.permute.xlu0 0
  %54 = vperm.xlu0 %53, %v28
  %v55 = vpop.permute.xlu0 %54
  %58 = vset.pattern.permute.xlu0 0
  %59 = vperm.xlu0 %58, %v29
  %v60 = vpop.permute.xlu0 %59
  %63 = vset.pattern.permute.xlu0 0
  %64 = vperm.xlu0 %63, %v30
  %v65 = vpop.permute.xlu0 %64
  %68 = vset.pattern.permute.xlu0 0
  %69 = vperm.xlu0 %68, %v31
  %v70 = vpop.permute.xlu0 %69
  %v80 = vunpack.c.l.b16 %v15
  %v81 = vunpack.c.l.b16 %v16
  %v82 = vunpack.c.l.b16 %v17
  %v83 = vunpack.c.l.b16 %v18
  %v84 = vunpack.c.l.b16 %v19
  %v85 = vunpack.c.l.b16 %v20
  %v86 = vunpack.c.l.b16 %v21
  %v87 = vunpack.c.l.b16 %v22
  %v88 = vpack.c.b16 %v81, %v80
  %v89 = vpack.c.b16 %v83, %v82
  %v90 = vpack.c.b16 %v85, %v84
  %v91 = vpack.c.b16 %v87, %v86
  %vm92 = vcmask 261120
  %v94 = vsel %vm92, %v88, 0
  %v97 = vsel %vm92, %v89, 0
  %v100 = vsel %vm92, %v90, 0
  %v103 = vsel %vm92, %v91, 0
  %v106 = vsel %vm92, %v23, 0
  %108 = vmatpush.bf16.xpose.msra.mxu0 0
  %109 = vmatpush.bf16.xpose.msra.mxu0 0
  %110 = vmatpush.bf16.xpose.msra.mxu0 0
  %111 = vmatpush.bf16.xpose.msra.mxu0 0
  %112 = vmatpush.bf16.xpose.msra.mxu0 0
  %113 = vmatpush.bf16.xpose.msra.mxu0 0
  %114 = vmatpush.bf16.xpose.msra.mxu0 0
  %115 = vmatpush.bf16.xpose.msra.mxu0 %v106
  %116 = vmatmul.bf16.gmra.mxu0 %v94
  %v117 = vpop.f32.mrf.mxu0
  %v118 = vadd.f32 %v35, %v117
  %v119 = vpop.f32.mrf.mxu0
  %v120 = vadd.f32 %v40, %v119
  %121 = vmatmul.bf16.gmra.mxu0 %v97
  %v122 = vpop.f32.mrf.mxu0
  %v123 = vadd.f32 %v45, %v122
  %v124 = vpop.f32.mrf.mxu0
  %v125 = vadd.f32 %v50, %v124
  %126 = vmatmul.bf16.gmra.mxu0 %v100
  %v127 = vpop.f32.mrf.mxu0
  %v128 = vadd.f32 %v55, %v127
  %v129 = vpop.f32.mrf.mxu0
  %v130 = vadd.f32 %v60, %v129
  %131 = vmatmul.bf16.gmra.mxu0 %v103
  %v132 = vpop.f32.mrf.mxu0
  %v133 = vadd.f32 %v65, %v132
  %v134 = vpop.f32.mrf.mxu0
  %v135 = vadd.f32 %v70, %v134
  %136 = vdwg.mxu0
  %v137 = vmax.f32 %v118, 0.0
  %v138 = vmax.f32 %v120, 0.0
  %v139 = vmax.f32 %v123, 0.0
  %v140 = vmax.f32 %v125, 0.0
  %v141 = vmax.f32 %v128, 0.0
  %v142 = vmax.f32 %v130, 0.0
  %v143 = vmax.f32 %v133, 0.0
  %v144 = vmax.f32 %v135, 0.0
  %vm145 = vcmask 15360
  %146 = vst.msk [vmem:[%s3] sm:$0xff] %vm145, %v137
  %147 = vst.msk [vmem:[%s3 + $0x8] sm:$0xff] %vm145, %v138
  %148 = vst.msk [vmem:[%s3 + $0x10] sm:$0xff] %vm145, %v139
  %149 = vst.msk [vmem:[%s3 + $0x18] sm:$0xff] %vm145, %v140
  %150 = vst.msk [vmem:[%s3 + $0x20] sm:$0xff] %vm145, %v141
  %151 = vst.msk [vmem:[%s3 + $0x28] sm:$0xff] %vm145, %v142
  %152 = vst.msk [vmem:[%s3 + $0x30] sm:$0xff] %vm145, %v143
  %153 = vst.msk [vmem:[%s3 + $0x38] sm:$0xff] %vm145, %v144
  // Predicated region
  $region14: #{_lambda_.20} parent=0 // pred_check
    _
  $region15: #{_lambda_.20} parent=0 // pred_check_branch
    %155 = sbr.rel (0) target = $region17
  $region16: #{_lambda_.20} parent=0 // pred_region
    _
  $region17: #{_lambda_.20} parent=0 // pred_fallthru
    _
  // Predicated region
  $region18: #{_lambda_.20} parent=0 // pred_check
    _
  $region19: #{_lambda_.20} parent=0 // pred_check_branch
    %157 = sbr.rel (0) target = $region21
  $region20: #{_lambda_.20} parent=0 // pred_region
    _
  $region21: #{_lambda_.20} parent=0 // pred_fallthru
    _

// kernel: _lambda_.21
$region0: #{_lambda_.21}
  #allocation0 [shape = 'u32[]', space=smem, size = 0x4, offset = 0x4, fixed_abs, tag = 'smem constant byte address 0x4 - core index']
  #allocation1 [shape = 'u32[72,128]{1,0:T(1,128)}', space=vmem, size = 0x9000, scoped, tag = 'internal scratch']
  %s0 = inlined_call_operand.vmem [shape: bf16[8,144], index: 0, kind: input, shape index: {}]
  %s1 = inlined_call_operand.vmem [shape: bf16[32,144], index: 1, kind: input, shape index: {}]
  %s2 = inlined_call_operand.vmem [shape: f32[8,1], index: 2, kind: input, shape index: {}]
  %s3 = inlined_call_operand.vmem [shape: f32[8,32], index: 3, kind: output, shape index: {}]
  %s4 = sld [smem:[#allocation0]]
  $region22: #{_lambda_.21} parent=0
    _
  %s6 = ssub.s32 1, %s4
  %s7 = scalar_select 0, %s6, %s4
  // Predicated region
  $region2: #{_lambda_.21} parent=0 // pred_check
    _
  $region3: #{_lambda_.21} parent=0 // pred_check_branch
    %9 = sbr.rel (0) target = $region5
  $region4: #{_lambda_.21} parent=0 // pred_region
    _
  $region5: #{_lambda_.21} parent=0 // pred_fallthru
    _
  // Predicated region
  $region6: #{_lambda_.21} parent=0 // pred_check
    _
  $region7: #{_lambda_.21} parent=0 // pred_check_branch
    %11 = sbr.rel (0) target = $region9
  $region8: #{_lambda_.21} parent=0 // pred_region
    _
  $region9: #{_lambda_.21} parent=0 // pred_fallthru
    _
  // Predicated region
  $region10: #{_lambda_.21} parent=0 // pred_check
    _
  $region11: #{_lambda_.21} parent=0 // pred_check_branch
    %13 = sbr.rel (0) target = $region13
  $region12: #{_lambda_.21} parent=0 // pred_region
    _
  $region13: #{_lambda_.21} parent=0 // pred_fallthru
    _
  %v15 = vld [vmem:[%s0] sm:$0xff]
  %v16 = vld [vmem:[%s1] sm:$0xff]
  %v17 = vld [vmem:[%s1 + $0x8] sm:$0xff]
  %v18 = vld [vmem:[%s1 + $0x10] sm:$0xff]
  %v19 = vld [vmem:[%s1 + $0x18] sm:$0xff]
  %v20 = vld [vmem:[%s2] sm:$0xff]
  %22 = vset.pattern.permute.xlu0 0
  %23 = vperm.xlu0 %22, %v20
  %v24 = vpop.permute.xlu0 %23
  %v27 = vunpack.c.l.b16 %v15
  %v28 = vunpack.c.h.b16 %v15
  %v29 = vpack.c.b16 %v27, %v27
  %v30 = vpack.c.b16 %v28, %v28
  %v36 = vunpack.c.l.b16 %v16
  %v37 = vunpack.c.h.b16 %v16
  %v38 = vunpack.c.l.b16 %v17
  %v39 = vunpack.c.h.b16 %v17
  %v40 = vunpack.c.l.b16 %v18
  %v41 = vunpack.c.h.b16 %v18
  %v42 = vunpack.c.l.b16 %v19
  %v43 = vunpack.c.h.b16 %v19
  %v44 = vpack.c.b16 %v38, %v36
  %v45 = vpack.c.b16 %v39, %v37
  %v46 = vpack.c.b16 %v42, %v40
  %v47 = vpack.c.b16 %v43, %v41
  %vm50 = vcmask 130048
  %v52 = vsel %vm50, %v30, 0
  %v55 = vsel %vm50, %v45, 0
  %v58 = vsel %vm50, %v47, 0
  %60 = vmatpush.bf16.xpose.msra.mxu0 0
  %61 = vmatpush.bf16.xpose.msra.mxu0 0
  %62 = vmatpush.bf16.xpose.msra.mxu0 0
  %63 = vmatpush.bf16.xpose.msra.mxu0 0
  %64 = vmatpush.bf16.xpose.msra.mxu0 0
  %65 = vmatpush.bf16.xpose.msra.mxu0 0
  %66 = vmatpush.bf16.xpose.msra.mxu0 %v46
  %67 = vmatpush.bf16.xpose.msra.mxu0 %v44
  %68 = vmatmul.bf16.gmra.mxu0 %v29
  %v69 = vpop.f32.mrf.mxu0
  %v70 = vadd.f32 %v24, %v69
  %v71 = vpop.f32.mrf.mxu0
  %72 = vdwg.mxu0
  %73 = vmatpush.bf16.xpose.msra.mxu0 0
  %74 = vmatpush.bf16.xpose.msra.mxu0 0
  %75 = vmatpush.bf16.xpose.msra.mxu0 0
  %76 = vmatpush.bf16.xpose.msra.mxu0 0
  %77 = vmatpush.bf16.xpose.msra.mxu0 0
  %78 = vmatpush.bf16.xpose.msra.mxu0 0
  %79 = vmatpush.bf16.xpose.msra.mxu0 %v58
  %80 = vmatpush.bf16.xpose.msra.mxu0 %v55
  %81 = vmatmul.bf16.gmra.mxu0 %v52
  %v82 = vpop.f32.mrf.mxu0
  %v83 = vadd.f32 %v70, %v82
  %v84 = vpop.f32.mrf.mxu0
  %85 = vdwg.mxu0
  %v86 = vmax.f32 %v83, 0.0
  %vm87 = vcmask 261120
  %88 = vst.msk [vmem:[%s3] sm:$0xff] %vm87, %v86
  // Predicated region
  $region14: #{_lambda_.21} parent=0 // pred_check
    _
  $region15: #{_lambda_.21} parent=0 // pred_check_branch
    %90 = sbr.rel (0) target = $region17
  $region16: #{_lambda_.21} parent=0 // pred_region
    _
  $region17: #{_lambda_.21} parent=0 // pred_fallthru
    _
  // Predicated region
  $region18: #{_lambda_.21} parent=0 // pred_check
    _
  $region19: #{_lambda_.21} parent=0 // pred_check_branch
    %92 = sbr.rel (0) target = $region21
  $region20: #{_lambda_.21} parent=0 // pred_region
    _
  $region21: #{_lambda_.21} parent=0 // pred_fallthru
    _

// kernel: _lambda_.22
$region0: #{_lambda_.22}
  #allocation0 [shape = 'u32[]', space=smem, size = 0x4, offset = 0x4, fixed_abs, tag = 'smem constant byte address 0x4 - core index']
  #allocation1 [shape = 'u32[72,128]{1,0:T(1,128)}', space=vmem, size = 0x9000, scoped, tag = 'internal scratch']
  %s0 = inlined_call_operand.vmem [shape: bf16[8,72], index: 0, kind: input, shape index: {}]
  %s1 = inlined_call_operand.vmem [shape: bf16[128,72], index: 1, kind: input, shape index: {}]
  %s2 = inlined_call_operand.vmem [shape: f32[8,1], index: 2, kind: input, shape index: {}]
  %s3 = inlined_call_operand.vmem [shape: f32[8,128], index: 3, kind: output, shape index: {}]
  %s4 = sld [smem:[#allocation0]]
  $region22: #{_lambda_.22} parent=0
    _
  %s6 = ssub.s32 1, %s4
  %s7 = scalar_select 0, %s6, %s4
  // Predicated region
  $region2: #{_lambda_.22} parent=0 // pred_check
    _
  $region3: #{_lambda_.22} parent=0 // pred_check_branch
    %9 = sbr.rel (0) target = $region5
  $region4: #{_lambda_.22} parent=0 // pred_region
    _
  $region5: #{_lambda_.22} parent=0 // pred_fallthru
    _
  // Predicated region
  $region6: #{_lambda_.22} parent=0 // pred_check
    _
  $region7: #{_lambda_.22} parent=0 // pred_check_branch
    %11 = sbr.rel (0) target = $region9
  $region8: #{_lambda_.22} parent=0 // pred_region
    _
  $region9: #{_lambda_.22} parent=0 // pred_fallthru
    _
  // Predicated region
  $region10: #{_lambda_.22} parent=0 // pred_check
    _
  $region11: #{_lambda_.22} parent=0 // pred_check_branch
    %13 = sbr.rel (0) target = $region13
  $region12: #{_lambda_.22} parent=0 // pred_region
    _
  $region13: #{_lambda_.22} parent=0 // pred_fallthru
    _
  %v14 = vld [vmem:[%s0] sm:$0xf]
  %v15 = vld [vmem:[%s1] sm:$0xf]
  %v16 = vld [vmem:[%s1 + $0x4] sm:$0xf]
  %v17 = vld [vmem:[%s1 + $0x8] sm:$0xf]
  %v18 = vld [vmem:[%s1 + $0xc] sm:$0xf]
  %v19 = vld [vmem:[%s1 + $0x10] sm:$0xf]
  %v20 = vld [vmem:[%s1 + $0x14] sm:$0xf]
  %v21 = vld [vmem:[%s1 + $0x18] sm:$0xf]
  %v22 = vld [vmem:[%s1 + $0x1c] sm:$0xf]
  %v23 = vld [vmem:[%s1 + $0x20] sm:$0xf]
  %v24 = vld [vmem:[%s1 + $0x24] sm:$0xf]
  %v25 = vld [vmem:[%s1 + $0x28] sm:$0xf]
  %v26 = vld [vmem:[%s1 + $0x2c] sm:$0xf]
  %v27 = vld [vmem:[%s1 + $0x30] sm:$0xf]
  %v28 = vld [vmem:[%s1 + $0x34] sm:$0xf]
  %v29 = vld [vmem:[%s1 + $0x38] sm:$0xf]
  %v30 = vld [vmem:[%s1 + $0x3c] sm:$0xf]
  %v31 = vld [vmem:[%s2] sm:$0xff]
  %33 = vset.pattern.permute.xlu0 0
  %34 = vperm.xlu0 %33, %v31
  %v35 = vpop.permute.xlu0 %34
  %v53 = vunpack.c.l.b16 %v15
  %v54 = vunpack.c.l.b16 %v16
  %v55 = vunpack.c.l.b16 %v17
  %v56 = vunpack.c.l.b16 %v18
  %v57 = vunpack.c.l.b16 %v19
  %v58 = vunpack.c.l.b16 %v20
  %v59 = vunpack.c.l.b16 %v21
  %v60 = vunpack.c.l.b16 %v22
  %v61 = vunpack.c.l.b16 %v23
  %v62 = vunpack.c.l.b16 %v24
  %v63 = vunpack.c.l.b16 %v25
  %v64 = vunpack.c.l.b16 %v26
  %v65 = vunpack.c.l.b16 %v27
  %v66 = vunpack.c.l.b16 %v28
  %v67 = vunpack.c.l.b16 %v29
  %v68 = vunpack.c.l.b16 %v30
  %v69 = vpack.c.b16 %v54, %v53
  %v70 = vpack.c.b16 %v56, %v55
  %v71 = vpack.c.b16 %v58, %v57
  %v72 = vpack.c.b16 %v60, %v59
  %v73 = vpack.c.b16 %v62, %v61
  %v74 = vpack.c.b16 %v64, %v63
  %v75 = vpack.c.b16 %v66, %v65
  %v76 = vpack.c.b16 %v68, %v67
  %vm77 = vcmask 588800
  %v79 = vsel %vm77, %v14, 0
  %v82 = vsel %vm77, %v69, 0
  %v85 = vsel %vm77, %v70, 0
  %v88 = vsel %vm77, %v71, 0
  %v91 = vsel %vm77, %v72, 0
  %v94 = vsel %vm77, %v73, 0
  %v97 = vsel %vm77, %v74, 0
  %v100 = vsel %vm77, %v75, 0
  %v103 = vsel %vm77, %v76, 0
  %105 = vmatpush.bf16.xpose.msra.mxu0 %v103
  %106 = vmatpush.bf16.xpose.msra.mxu0 %v100
  %107 = vmatpush.bf16.xpose.msra.mxu0 %v97
  %108 = vmatpush.bf16.xpose.msra.mxu0 %v94
  %109 = vmatpush.bf16.xpose.msra.mxu0 %v91
  %110 = vmatpush.bf16.xpose.msra.mxu0 %v88
  %111 = vmatpush.bf16.xpose.msra.mxu0 %v85
  %112 = vmatpush.bf16.xpose.msra.mxu0 %v82
  %113 = vmatmul.bf16.gmra.mxu0 %v79
  %v114 = vpop.f32.mrf.mxu0
  %v115 = vadd.f32 %v35, %v114
  %v116 = vpop.f32.mrf.mxu0
  %117 = vdwg.mxu0
  %v118 = vmax.f32 %v115, 0.0
  %119 = vst [vmem:[%s3] sm:$0xff] %v118
  // Predicated region
  $region14: #{_lambda_.22} parent=0 // pred_check
    _
  $region15: #{_lambda_.22} parent=0 // pred_check_branch
    %121 = sbr.rel (0) target = $region17
  $region16: #{_lambda_.22} parent=0 // pred_region
    _
  $region17: #{_lambda_.22} parent=0 // pred_fallthru
    _
  // Predicated region
  $region18: #{_lambda_.22} parent=0 // pred_check
    _
  $region19: #{_lambda_.22} parent=0 // pred_check_branch
    %123 = sbr.rel (0) target = $region21
  $region20: #{_lambda_.22} parent=0 // pred_region
    _
  $region21: #{_lambda_.22} parent=0 // pred_fallthru
    _

// kernel: _lambda_.24
$region0: #{_lambda_.24}
  #allocation0 [shape = 'u32[]', space=smem, size = 0x4, offset = 0x4, fixed_abs, tag = 'smem constant byte address 0x4 - core index']
  #allocation1 [shape = 'u32[72,128]{1,0:T(1,128)}', space=vmem, size = 0x9000, scoped, tag = 'internal scratch']
  #allocation2 [shape = 'f32[1,1]{1,0:T(1,128)S(1)}', space=vmem, size = 0x200, scoped, tag = 'scoped memory for _lambda_.24']
  %s0 = inlined_call_operand.vmem [shape: bf16[1,72], index: 0, kind: input, shape index: {}]
  %s1 = inlined_call_operand.vmem [shape: bf16[512,72], index: 1, kind: input, shape index: {}]
  %s2 = inlined_call_operand.<no memory space> [shape: f32[1,1], index: 2, kind: input, shape index: {}]
  %s3 = inlined_call_operand.vmem [shape: f32[1,512], index: 3, kind: output, shape index: {}]
  %s4 = sld [smem:[#allocation0]]
  $region22: #{_lambda_.24} parent=0
    _
  %s6 = ssub.s32 1, %s4
  %s7 = scalar_select 0, %s6, %s4
  %v8 = vstv %s2
  %9 = vst [vmem:[#allocation2] sm:$0x1] %v8
  // Predicated region
  $region2: #{_lambda_.24} parent=0 // pred_check
    _
  $region3: #{_lambda_.24} parent=0 // pred_check_branch
    %11 = sbr.rel (0) target = $region5
  $region4: #{_lambda_.24} parent=0 // pred_region
    _
  $region5: #{_lambda_.24} parent=0 // pred_fallthru
    _
  // Predicated region
  $region6: #{_lambda_.24} parent=0 // pred_check
    _
  $region7: #{_lambda_.24} parent=0 // pred_check_branch
    %13 = sbr.rel (0) target = $region9
  $region8: #{_lambda_.24} parent=0 // pred_region
    _
  $region9: #{_lambda_.24} parent=0 // pred_fallthru
    _
  // Predicated region
  $region10: #{_lambda_.24} parent=0 // pred_check
    _
  $region11: #{_lambda_.24} parent=0 // pred_check_branch
    %15 = sbr.rel (0) target = $region13
  $region12: #{_lambda_.24} parent=0 // pred_region
    _
  $region13: #{_lambda_.24} parent=0 // pred_fallthru
    _
  %v16 = vld [vmem:[%s0] sm:$0x1]
  %v17 = vld [vmem:[%s1] sm:$0xf]
  %v18 = vld [vmem:[%s1 + $0x4] sm:$0xf]
  %v19 = vld [vmem:[%s1 + $0x8] sm:$0xf]
  %v20 = vld [vmem:[%s1 + $0xc] sm:$0xf]
  %v21 = vld [vmem:[%s1 + $0x10] sm:$0xf]
  %v22 = vld [vmem:[%s1 + $0x14] sm:$0xf]
  %v23 = vld [vmem:[%s1 + $0x18] sm:$0xf]
  %v24 = vld [vmem:[%s1 + $0x1c] sm:$0xf]
  %v25 = vld [vmem:[%s1 + $0x20] sm:$0xf]
  %v26 = vld [vmem:[%s1 + $0x24] sm:$0xf]
  %v27 = vld [vmem:[%s1 + $0x28] sm:$0xf]
  %v28 = vld [vmem:[%s1 + $0x2c] sm:$0xf]
  %v29 = vld [vmem:[%s1 + $0x30] sm:$0xf]
  %v30 = vld [vmem:[%s1 + $0x34] sm:$0xf]
  %v31 = vld [vmem:[%s1 + $0x38] sm:$0xf]
  %v32 = vld [vmem:[%s1 + $0x3c] sm:$0xf]
  %v33 = vld [vmem:[%s1 + $0x40] sm:$0xf]
  %v34 = vld [vmem:[%s1 + $0x44] sm:$0xf]
  %v35 = vld [vmem:[%s1 + $0x48] sm:$0xf]
  %v36 = vld [vmem:[%s1 + $0x4c] sm:$0xf]
  %v37 = vld [vmem:[%s1 + $0x50] sm:$0xf]
  %v38 = vld [vmem:[%s1 + $0x54] sm:$0xf]
  %v39 = vld [vmem:[%s1 + $0x58] sm:$0xf]
  %v40 = vld [vmem:[%s1 + $0x5c] sm:$0xf]
  %v41 = vld [vmem:[%s1 + $0x60] sm:$0xf]
  %v42 = vld [vmem:[%s1 + $0x64] sm:$0xf]
  %v43 = vld [vmem:[%s1 + $0x68] sm:$0xf]
  %v44 = vld [vmem:[%s1 + $0x6c] sm:$0xf]
  %v45 = vld [vmem:[%s1 + $0x70] sm:$0xf]
  %v46 = vld [vmem:[%s1 + $0x74] sm:$0xf]
  %v47 = vld [vmem:[%s1 + $0x78] sm:$0xf]
  %v48 = vld [vmem:[%s1 + $0x7c] sm:$0xf]
  %v49 = vld [vmem:[%s1 + $0x80] sm:$0xf]
  %v50 = vld [vmem:[%s1 + $0x84] sm:$0xf]
  %v51 = vld [vmem:[%s1 + $0x88] sm:$0xf]
  %v52 = vld [vmem:[%s1 + $0x8c] sm:$0xf]
  %v53 = vld [vmem:[%s1 + $0x90] sm:$0xf]
  %v54 = vld [vmem:[%s1 + $0x94] sm:$0xf]
  %v55 = vld [vmem:[%s1 + $0x98] sm:$0xf]
  %v56 = vld [vmem:[%s1 + $0x9c] sm:$0xf]
  %v57 = vld [vmem:[%s1 + $0xa0] sm:$0xf]
  %v58 = vld [vmem:[%s1 + $0xa4] sm:$0xf]
  %v59 = vld [vmem:[%s1 + $0xa8] sm:$0xf]
  %v60 = vld [vmem:[%s1 + $0xac] sm:$0xf]
  %v61 = vld [vmem:[%s1 + $0xb0] sm:$0xf]
  %v62 = vld [vmem:[%s1 + $0xb4] sm:$0xf]
  %v63 = vld [vmem:[%s1 + $0xb8] sm:$0xf]
  %v64 = vld [vmem:[%s1 + $0xbc] sm:$0xf]
  %v65 = vld [vmem:[%s1 + $0xc0] sm:$0xf]
  %v66 = vld [vmem:[%s1 + $0xc4] sm:$0xf]
  %v67 = vld [vmem:[%s1 + $0xc8] sm:$0xf]
  %v68 = vld [vmem:[%s1 + $0xcc] sm:$0xf]
  %v69 = vld [vmem:[%s1 + $0xd0] sm:$0xf]
  %v70 = vld [vmem:[%s1 + $0xd4] sm:$0xf]
  %v71 = vld [vmem:[%s1 + $0xd8] sm:$0xf]
  %v72 = vld [vmem:[%s1 + $0xdc] sm:$0xf]
  %v73 = vld [vmem:[%s1 + $0xe0] sm:$0xf]
  %v74 = vld [vmem:[%s1 + $0xe4] sm:$0xf]
  %v75 = vld [vmem:[%s1 + $0xe8] sm:$0xf]
  %v76 = vld [vmem:[%s1 + $0xec] sm:$0xf]
  %v77 = vld [vmem:[%s1 + $0xf0] sm:$0xf]
  %v78 = vld [vmem:[%s1 + $0xf4] sm:$0xf]
  %v79 = vld [vmem:[%s1 + $0xf8] sm:$0xf]
  %v80 = vld [vmem:[%s1 + $0xfc] sm:$0xf]
  %v81 = vld [vmem:[#allocation2] sm:$0x1]
  %83 = vset.pattern.permute.xlu0 0
  %84 = vperm.xlu0 %83, %v81
  %v85 = vpop.permute.xlu0 %84
  %v87 = vperm.slane %v85, 0
  %v152 = vunpack.c.l.b16 %v17
  %v153 = vunpack.c.l.b16 %v18
  %v154 = vunpack.c.l.b16 %v19
  %v155 = vunpack.c.l.b16 %v20
  %v156 = vunpack.c.l.b16 %v21
  %v157 = vunpack.c.l.b16 %v22
  %v158 = vunpack.c.l.b16 %v23
  %v159 = vunpack.c.l.b16 %v24
  %v160 = vunpack.c.l.b16 %v25
  %v161 = vunpack.c.l.b16 %v26
  %v162 = vunpack.c.l.b16 %v27
  %v163 = vunpack.c.l.b16 %v28
  %v164 = vunpack.c.l.b16 %v29
  %v165 = vunpack.c.l.b16 %v30
  %v166 = vunpack.c.l.b16 %v31
  %v167 = vunpack.c.l.b16 %v32
  %v168 = vunpack.c.l.b16 %v33
  %v169 = vunpack.c.l.b16 %v34
  %v170 = vunpack.c.l.b16 %v35
  %v171 = vunpack.c.l.b16 %v36
  %v172 = vunpack.c.l.b16 %v37
  %v173 = vunpack.c.l.b16 %v38
  %v174 = vunpack.c.l.b16 %v39
  %v175 = vunpack.c.l.b16 %v40
  %v176 = vunpack.c.l.b16 %v41
  %v177 = vunpack.c.l.b16 %v42
  %v178 = vunpack.c.l.b16 %v43
  %v179 = vunpack.c.l.b16 %v44
  %v180 = vunpack.c.l.b16 %v45
  %v181 = vunpack.c.l.b16 %v46
  %v182 = vunpack.c.l.b16 %v47
  %v183 = vunpack.c.l.b16 %v48
  %v184 = vunpack.c.l.b16 %v49
  %v185 = vunpack.c.l.b16 %v50
  %v186 = vunpack.c.l.b16 %v51
  %v187 = vunpack.c.l.b16 %v52
  %v188 = vunpack.c.l.b16 %v53
  %v189 = vunpack.c.l.b16 %v54
  %v190 = vunpack.c.l.b16 %v55
  %v191 = vunpack.c.l.b16 %v56
  %v192 = vunpack.c.l.b16 %v57
  %v193 = vunpack.c.l.b16 %v58
  %v194 = vunpack.c.l.b16 %v59
  %v195 = vunpack.c.l.b16 %v60
  %v196 = vunpack.c.l.b16 %v61
  %v197 = vunpack.c.l.b16 %v62
  %v198 = vunpack.c.l.b16 %v63
  %v199 = vunpack.c.l.b16 %v64
  %v200 = vunpack.c.l.b16 %v65
  %v201 = vunpack.c.l.b16 %v66
  %v202 = vunpack.c.l.b16 %v67
  %v203 = vunpack.c.l.b16 %v68
  %v204 = vunpack.c.l.b16 %v69
  %v205 = vunpack.c.l.b16 %v70
  %v206 = vunpack.c.l.b16 %v71
  %v207 = vunpack.c.l.b16 %v72
  %v208 = vunpack.c.l.b16 %v73
  %v209 = vunpack.c.l.b16 %v74
  %v210 = vunpack.c.l.b16 %v75
  %v211 = vunpack.c.l.b16 %v76
  %v212 = vunpack.c.l.b16 %v77
  %v213 = vunpack.c.l.b16 %v78
  %v214 = vunpack.c.l.b16 %v79
  %v215 = vunpack.c.l.b16 %v80
  %v216 = vpack.c.b16 %v153, %v152
  %v217 = vpack.c.b16 %v155, %v154
  %v218 = vpack.c.b16 %v157, %v156
  %v219 = vpack.c.b16 %v159, %v158
  %v220 = vpack.c.b16 %v161, %v160
  %v221 = vpack.c.b16 %v163, %v162
  %v222 = vpack.c.b16 %v165, %v164
  %v223 = vpack.c.b16 %v167, %v166
  %v224 = vpack.c.b16 %v169, %v168
  %v225 = vpack.c.b16 %v171, %v170
  %v226 = vpack.c.b16 %v173, %v172
  %v227 = vpack.c.b16 %v175, %v174
  %v228 = vpack.c.b16 %v177, %v176
  %v229 = vpack.c.b16 %v179, %v178
  %v230 = vpack.c.b16 %v181, %v180
  %v231 = vpack.c.b16 %v183, %v182
  %v232 = vpack.c.b16 %v185, %v184
  %v233 = vpack.c.b16 %v187, %v186
  %v234 = vpack.c.b16 %v189, %v188
  %v235 = vpack.c.b16 %v191, %v190
  %v236 = vpack.c.b16 %v193, %v192
  %v237 = vpack.c.b16 %v195, %v194
  %v238 = vpack.c.b16 %v197, %v196
  %v239 = vpack.c.b16 %v199, %v198
  %v240 = vpack.c.b16 %v201, %v200
  %v241 = vpack.c.b16 %v203, %v202
  %v242 = vpack.c.b16 %v205, %v204
  %v243 = vpack.c.b16 %v207, %v206
  %v244 = vpack.c.b16 %v209, %v208
  %v245 = vpack.c.b16 %v211, %v210
  %v246 = vpack.c.b16 %v213, %v212
  %v247 = vpack.c.b16 %v215, %v214
  %vm248 = vcmask 588800
  %v250 = vsel %vm248, %v16, 0
  %v253 = vsel %vm248, %v216, 0
  %v256 = vsel %vm248, %v217, 0
  %v259 = vsel %vm248, %v218, 0
  %v262 = vsel %vm248, %v219, 0
  %v265 = vsel %vm248, %v220, 0
  %v268 = vsel %vm248, %v221, 0
  %v271 = vsel %vm248, %v222, 0
  %v274 = vsel %vm248, %v223, 0
  %v277 = vsel %vm248, %v224, 0
  %v280 = vsel %vm248, %v225, 0
  %v283 = vsel %vm248, %v226, 0
  %v286 = vsel %vm248, %v227, 0
  %v289 = vsel %vm248, %v228, 0
  %v292 = vsel %vm248, %v229, 0
  %v295 = vsel %vm248, %v230, 0
  %v298 = vsel %vm248, %v231, 0
  %v301 = vsel %vm248, %v232, 0
  %v304 = vsel %vm248, %v233, 0
  %v307 = vsel %vm248, %v234, 0
  %v310 = vsel %vm248, %v235, 0
  %v313 = vsel %vm248, %v236, 0
  %v316 = vsel %vm248, %v237, 0
  %v319 = vsel %vm248, %v238, 0
  %v322 = vsel %vm248, %v239, 0
  %v325 = vsel %vm248, %v240, 0
  %v328 = vsel %vm248, %v241, 0
  %v331 = vsel %vm248, %v242, 0
  %v334 = vsel %vm248, %v243, 0
  %v337 = vsel %vm248, %v244, 0
  %v340 = vsel %vm248, %v245, 0
  %v343 = vsel %vm248, %v246, 0
  %v346 = vsel %vm248, %v247, 0
  %348 = vmatpush.bf16.xpose.msra.mxu0 %v274
  %349 = vmatpush.bf16.xpose.msra.mxu0 %v271
  %350 = vmatpush.bf16.xpose.msra.mxu0 %v268
  %351 = vmatpush.bf16.xpose.msra.mxu0 %v265
  %352 = vmatpush.bf16.xpose.msra.mxu0 %v262
  %353 = vmatpush.bf16.xpose.msra.mxu0 %v259
  %354 = vmatpush.bf16.xpose.msra.mxu0 %v256
  %355 = vmatpush.bf16.xpose.msra.mxu0 %v253
  %356 = vmatmul.bf16.gmra.mxu0 %v250
  %v357 = vpop.f32.mrf.mxu0
  %v358 = vadd.f32 %v87, %v357
  %v359 = vpop.f32.mrf.mxu0
  %360 = vdwg.mxu0
  %361 = vmatpush.bf16.xpose.msra.mxu0 %v298
  %362 = vmatpush.bf16.xpose.msra.mxu0 %v295
  %363 = vmatpush.bf16.xpose.msra.mxu0 %v292
  %364 = vmatpush.bf16.xpose.msra.mxu0 %v289
  %365 = vmatpush.bf16.xpose.msra.mxu0 %v286
  %366 = vmatpush.bf16.xpose.msra.mxu0 %v283
  %367 = vmatpush.bf16.xpose.msra.mxu0 %v280
  %368 = vmatpush.bf16.xpose.msra.mxu0 %v277
  %369 = vmatmul.bf16.gmra.mxu0 %v250
  %v370 = vpop.f32.mrf.mxu0
  %v371 = vadd.f32 %v87, %v370
  %v372 = vpop.f32.mrf.mxu0
  %373 = vdwg.mxu0
  %374 = vmatpush.bf16.xpose.msra.mxu0 %v322
  %375 = vmatpush.bf16.xpose.msra.mxu0 %v319
  %376 = vmatpush.bf16.xpose.msra.mxu0 %v316
  %377 = vmatpush.bf16.xpose.msra.mxu0 %v313
  %378 = vmatpush.bf16.xpose.msra.mxu0 %v310
  %379 = vmatpush.bf16.xpose.msra.mxu0 %v307
  %380 = vmatpush.bf16.xpose.msra.mxu0 %v304
  %381 = vmatpush.bf16.xpose.msra.mxu0 %v301
  %382 = vmatmul.bf16.gmra.mxu0 %v250
  %v383 = vpop.f32.mrf.mxu0
  %v384 = vadd.f32 %v87, %v383
  %v385 = vpop.f32.mrf.mxu0
  %386 = vdwg.mxu0
  %387 = vmatpush.bf16.xpose.msra.mxu0 %v346
  %388 = vmatpush.bf16.xpose.msra.mxu0 %v343
  %389 = vmatpush.bf16.xpose.msra.mxu0 %v340
  %390 = vmatpush.bf16.xpose.msra.mxu0 %v337
  %391 = vmatpush.bf16.xpose.msra.mxu0 %v334
  %392 = vmatpush.bf16.xpose.msra.mxu0 %v331
  %393 = vmatpush.bf16.xpose.msra.mxu0 %v328
  %394 = vmatpush.bf16.xpose.msra.mxu0 %v325
  %395 = vmatmul.bf16.gmra.mxu0 %v250
  %v396 = vpop.f32.mrf.mxu0
  %v397 = vadd.f32 %v87, %v396
  %v398 = vpop.f32.mrf.mxu0
  %399 = vdwg.mxu0
  %v404 = vrot.slane %v371, 7
  %v405 = vrot.slane %v384, 6
  %v406 = vrot.slane %v397, 5
  %vm407 = vcmask 1040384
  %v408 = vsel %vm407, %v358, %v404
  %vm409 = vcmask 1042434
  %v410 = vsel %vm409, %v405, %v406
  %vm411 = vcmask 1041408
  %v412 = vsel %vm411, %v408, %v410
  %v414 = vlaneseq
  %vm415 = vcmp.ge.s32.totalorder %v414, 0
  %vm416 = vcmp.lt.s32.totalorder %v414, 512
  %vm417 = vmand %vm415, %vm416
  %418 = vst.msk [vmem:[%s3] sm:$0xf] %vm417, %v412
  // Predicated region
  $region14: #{_lambda_.24} parent=0 // pred_check
    _
  $region15: #{_lambda_.24} parent=0 // pred_check_branch
    %420 = sbr.rel (0) target = $region17
  $region16: #{_lambda_.24} parent=0 // pred_region
    _
  $region17: #{_lambda_.24} parent=0 // pred_fallthru
    _
  // Predicated region
  $region18: #{_lambda_.24} parent=0 // pred_check
    _
  $region19: #{_lambda_.24} parent=0 // pred_check_branch
    %422 = sbr.rel (0) target = $region21
  $region20: #{_lambda_.24} parent=0 // pred_region
    _
  $region21: #{_lambda_.24} parent=0 // pred_fallthru
    _

// kernel: _lambda_.25
$region0: #{_lambda_.25}
  #allocation0 [shape = 'u32[]', space=smem, size = 0x4, offset = 0x4, fixed_abs, tag = 'smem constant byte address 0x4 - core index']
  #allocation1 [shape = 'u32[72,128]{1,0:T(1,128)}', space=vmem, size = 0x9000, scoped, tag = 'internal scratch']
  %s0 = inlined_call_operand.vmem [shape: f32[8,256], index: 0, kind: input, shape index: {}]
  %s1 = inlined_call_operand.vmem [shape: f32[8,256], index: 1, kind: input, shape index: {}]
  %s2 = inlined_call_operand.vmem [shape: f32[8,1], index: 2, kind: output, shape index: {}]
  %s3 = sld [smem:[#allocation0]]
  $region18: #{_lambda_.25} parent=0
    _
  %s5 = ssub.s32 1, %s3
  %s6 = scalar_select 0, %s5, %s3
  // Predicated region
  $region2: #{_lambda_.25} parent=0 // pred_check
    _
  $region3: #{_lambda_.25} parent=0 // pred_check_branch
    %8 = sbr.rel (0) target = $region5
  $region4: #{_lambda_.25} parent=0 // pred_region
    _
  $region5: #{_lambda_.25} parent=0 // pred_fallthru
    _
  // Predicated region
  $region6: #{_lambda_.25} parent=0 // pred_check
    _
  $region7: #{_lambda_.25} parent=0 // pred_check_branch
    %10 = sbr.rel (0) target = $region9
  $region8: #{_lambda_.25} parent=0 // pred_region
    _
  $region9: #{_lambda_.25} parent=0 // pred_fallthru
    _
  %v11 = vld [vmem:[%s1] sm:$0xff]
  %v12 = vld [vmem:[%s1 + $0x8] sm:$0xff]
  %v13 = vmax.f32 %v11, 0.0
  %v14 = vmax.f32 %v12, 0.0
  %v15 = vand.u32 2147483647, %v11
  %v16 = vand.u32 2147483647, %v12
  %v17 = vsub.f32 0.0, %v15
  %v18 = vsub.f32 0.0, %v16
  %v19 = vmul.f32 %v17, 1.442695
  %v20 = vpow.pop %v19
  %v21 = vmul.f32 %v18, 1.442695
  %v22 = vpow.pop %v21
  %v23 = vadd.f32 %v20, 1.0
  %v24 = vlog2.pop %v23
  %v25 = vmul.f32 %v24, 0.6931472
  %v26 = vmul.f32 -0.5, %v20
  %v27 = vadd.f32 %v26, 1.0
  %v28 = vmul.f32 %v27, %v20
  %v29 = vand.u32 2147483647, %v20
  %vm30 = vcmp.lt.f32.partialorder %v29, 0.0004427343
  %v31 = vsel %vm30, %v28, %v25
  %v32 = vadd.f32 %v22, 1.0
  %v33 = vlog2.pop %v32
  %v34 = vmul.f32 %v33, 0.6931472
  %v35 = vmul.f32 -0.5, %v22
  %v36 = vadd.f32 %v35, 1.0
  %v37 = vmul.f32 %v36, %v22
  %v38 = vand.u32 2147483647, %v22
  %vm39 = vcmp.lt.f32.partialorder %v38, 0.0004427343
  %v40 = vsel %vm39, %v37, %v34
  %v41 = vadd.f32 %v13, %v31
  %v42 = vadd.f32 %v14, %v40
  %v43 = vld [vmem:[%s0] sm:$0xff]
  %v44 = vld [vmem:[%s0 + $0x8] sm:$0xff]
  %v45 = vmul.f32 %v43, %v11
  %v46 = vmul.f32 %v44, %v12
  %v47 = vsub.f32 %v41, %v45
  %v48 = vsub.f32 %v42, %v46
  %v49 = vadd.f32 %v47, %v48
  %50 = vadd.xlane.f32.xlu0 %v49
  %v51 = vpop.xlane.xlu0 %50
  %vm52 = vcmask 7168
  %53 = vst.msk [vmem:[%s2] sm:$0xff] %vm52, %v51
  // Predicated region
  $region10: #{_lambda_.25} parent=0 // pred_check
    _
  $region11: #{_lambda_.25} parent=0 // pred_check_branch
    %55 = sbr.rel (0) target = $region13
  $region12: #{_lambda_.25} parent=0 // pred_region
    _
  $region13: #{_lambda_.25} parent=0 // pred_fallthru
    _
  // Predicated region
  $region14: #{_lambda_.25} parent=0 // pred_check
    _
  $region15: #{_lambda_.25} parent=0 // pred_check_branch
    %57 = sbr.rel (0) target = $region17
  $region16: #{_lambda_.25} parent=0 // pred_region
    _
  $region17: #{_lambda_.25} parent=0 // pred_fallthru
    _

</llo_original>
